<compile_context>
chip_gen: v7x
topology: tpu7x:2x2x1
jax: 0.10.0
libtpu: 0.0.40
codegen_flags: <defaults>
</compile_context>

<pallas_src>
import jax
import jax.numpy as jnp
import numpy as np
from jax import lax
from jax.experimental import pallas as pl
from jax.experimental.pallas import tpu as pltpu

MARGIN = 1.0
C = 1.0
EPS_ORTH = 1e-3     # eps in _loss
EPS_PDIST = 1e-6    # torch.nn.PairwiseDistance default eps (added to the diff)
EPS_NORM = 1e-12    # torch.nn.functional.normalize default eps
NUM_CORES = 2       # leading "parallel" grid axis (v7x megacore); fine on 1-TC chips


def _round_up(x, m):
    return (x + m - 1) // m * m


def _cdiv(a, b):
    return (a + b - 1) // b


def _pad_rows(x, rows):
    pad = rows - x.shape[0]
    if pad == 0:
        return x
    return jnp.concatenate([x, jnp.zeros((pad,) + x.shape[1:], x.dtype)], axis=0)


def _tile_bytes(rows, cols, itemsize):
    # VMEM bytes of one buffer of a (rows, cols) block after sublane/lane padding.
    return _round_up(max(rows, 1), 8) * _round_up(max(cols, 1), 128) * itemsize


def _make_kernel(batch, n_entities, n_rel, n_rel_pad, dim, tile_b,
                 nb_tiles, ne_tiles, nb_per_core, ne_per_core, steps):
    inv_b = 1.0 / batch
    inv_e = 1.0 / n_entities

    def kernel(pack_ref, ids_ref, ent_ref, rel_ref, nvec_ref,
               out_ref, wn_ref, m_acc, s_acc):
        c = pl.program_id(0)   # core (parallel) axis
        i = pl.program_id(1)   # streaming (arbitrary) axis

        @pl.when(i == 0)
        def _init():
            m_acc[...] = jnp.zeros_like(m_acc)
            s_acc[...] = jnp.zeros_like(s_acc)
            # F.normalize of the tiny resident norm-vector table, done once:
            # w / max(||w||, eps) == w * rsqrt(max(||w||^2, eps^2)).
            w = nvec_ref[...].astype(jnp.float32)
            wn_ref[...] = w * lax.rsqrt(
                jnp.maximum(jnp.sum(w * w, axis=-1, keepdims=True),
                            EPS_NORM * EPS_NORM))

        # ------------- margin loss: this core's batch tile -------------
        bt = c * nb_per_core + i          # global batch-tile index

        @pl.when(jnp.logical_and(i < nb_per_core, bt < nb_tiles))
        def _margin():
            x = pack_ref[...].astype(jnp.float32)        # (tb, 4*dim), one DMA
            ph = x[:, 0 * dim:1 * dim]
            pt = x[:, 1 * dim:2 * dim]
            nh = x[:, 2 * dim:3 * dim]
            nt = x[:, 3 * dim:4 * dim]

            ids = ids_ref[...]                           # (tb, 2) int32
            rel_tab = rel_ref[...].astype(jnp.float32)   # (n_rel_pad, dim)
            wn_tab = wn_ref[...]                         # (n_rel_pad, dim)

            rel_iota = lax.broadcasted_iota(jnp.int32, (tile_b, n_rel_pad), 1)

            def gather_rel(col):
                # one-hot @ resident table gather on the otherwise-idle MXU
                onehot = (rel_iota == ids[:, col:col + 1]).astype(jnp.float32)
                r = jnp.dot(onehot, rel_tab, preferred_element_type=jnp.float32)
                wn = jnp.dot(onehot, wn_tab, preferred_element_type=jnp.float32)
                return r, wn

            pr, pw = gather_rel(0)
            nr, nw = gather_rel(1)

            def score(h, r, t, wn):
                h_p = h - jnp.sum(h * wn, axis=-1, keepdims=True) * wn
                t_p = t - jnp.sum(t * wn, axis=-1, keepdims=True) * wn
                diff = (h_p + r) - t_p + EPS_PDIST
                # pdist(.)**2 == sum(diff^2): no sqrt/square round trip.
                return jnp.sum(diff * diff, axis=-1, keepdims=True)    # (tb, 1)

            pos_s = score(ph, pr, pt, pw)
            neg_s = score(nh, nr, nt, nw)
            hinge = jnp.maximum(pos_s + MARGIN - neg_s, 0.0)
            # mask out padded batch rows, accumulate per-row (plain VALU add)
            row = lax.broadcasted_iota(jnp.int32, hinge.shape, 0) + bt * tile_b
            m_acc[...] += jnp.where(row < batch, hinge, 0.0)

        # ------------- entity scale loss: this core's entity tile -------------
        et = c * ne_per_core + i

        @pl.when(jnp.logical_and(i < ne_per_core, et < ne_tiles))
        def _scale():
            e = ent_ref[...].astype(jnp.float32)
            ent_norm = jnp.sqrt(jnp.sum(e * e, axis=-1, keepdims=True))
            # zero-padded entity rows contribute relu(0 - 1) = 0
            s_acc[...] += jnp.maximum(ent_norm - 1.0, 0.0)

        # ------------- finalize: single reduce (+ orthogonality once) -------------
        @pl.when(i == steps - 1)
        def _finalize():
            m_total = jnp.sum(m_acc[...], keepdims=True)      # (1, 1)
            s_total = jnp.sum(s_acc[...], keepdims=True)      # (1, 1)
            part = m_total * inv_b + C * (s_total * inv_e)

            # Orthogonality term over the resident relation tables.
            # (w.d / ||d||)^2 == (w.d)^2 / ||d||^2 : no sqrt, one exact reciprocal.
            # dr_sq clamped to 1e-30 (reference would give NaN for an all-zero
            # relation row); zero-padded rows have wr_dr == 0 -> contribute 0,
            # so the -eps^2 correction uses the real relation count n_rel.
            wr = nvec_ref[...].astype(jnp.float32)
            dr = rel_ref[...].astype(jnp.float32)
            wr_dr = jnp.sum(wr * dr, axis=-1, keepdims=True)
            dr_sq = jnp.maximum(jnp.sum(dr * dr, axis=-1, keepdims=True), 1e-30)
            quot = jnp.sum(wr_dr * wr_dr * pl.reciprocal(dr_sq, approx=False),
                           keepdims=True)
            orth = jnp.maximum(quot - n_rel * EPS_ORTH * EPS_ORTH, 0.0)

            # orth is added by core 0 only; per-core partials are summed outside.
            out_ref[...] = part + jnp.where(c == 0, C * orth, 0.0)

    return kernel


def transh_loss(entities, relations, norm_vectors,
                positive_triples, negative_triples,
                *, batch_tile=512, entity_tile=8192, num_cores=NUM_CORES):
    """TransH.forward: returns the scalar loss = margin + C*(scale + orth)."""
    n_ent, dim = entities.shape
    n_rel = relations.shape[0]
    batch = positive_triples.shape[0]
    isz = jnp.dtype(entities.dtype).itemsize   # stream in native dtype (bf16 ok)

    # Entity rows gathered by XLA (native dtype, no f32 upcast) and packed into
    # ONE lane-dense (b_pad, 4*dim) stream.  Relation rows are gathered inside
    # the kernel from the resident tables; only their int32 indices are streamed.
    # TODO(synk): fuse the entity-row gathers into the kernel (scalar-prefetched
    # index columns + per-row DMA from the HBM entity table).
    ph = jnp.take(entities, positive_triples[:, 0], axis=0)
    pt = jnp.take(entities, positive_triples[:, 2], axis=0)
    nh = jnp.take(entities, negative_triples[:, 0], axis=0)
    nt = jnp.take(entities, negative_triples[:, 2], axis=0)
    packed = jnp.concatenate([ph, pt, nh, nt], axis=1)          # (batch, 4*dim)
    rel_ids = jnp.stack([positive_triples[:, 1],
                         negative_triples[:, 1]], axis=1).astype(jnp.int32)

    # Tile sizing (sublane dims must be multiples of 8).
    tb = min(_round_up(batch_tile, 8), _round_up(batch, 8))
    b_pad = _round_up(batch, tb)
    te = min(_round_up(entity_tile, 8), _round_up(n_ent, 8))
    e_pad = _round_up(n_ent, te)
    nb_tiles = b_pad // tb
    ne_tiles = e_pad // te
    nb_pc = _cdiv(nb_tiles, num_cores)    # batch tiles per core
    ne_pc = _cdiv(ne_tiles, num_cores)    # entity tiles per core
    steps = max(nb_pc, ne_pc)
    n_rel_pad = _round_up(n_rel, 8)       # aligned contraction dim for MXU gather

    packed = _pad_rows(packed, b_pad)
    rel_ids = _pad_rows(rel_ids, b_pad)                 # pad id 0; rows masked
    ent_padded = _pad_rows(entities, e_pad)
    rel_padded = _pad_rows(relations, n_rel_pad)
    nvec_padded = _pad_rows(norm_vectors, n_rel_pad)

    # Clamped index maps: once a core runs out of real tiles it keeps pointing
    # at its last block (no re-DMA; the compute is gated by pl.when).
    batch_spec = pl.BlockSpec(
        (tb, 4 * dim), lambda c, i: (jnp.minimum(c * nb_pc + i, nb_tiles - 1), 0))
    ids_spec = pl.BlockSpec(
        (tb, 2), lambda c, i: (jnp.minimum(c * nb_pc + i, nb_tiles - 1), 0))
    ent_spec = pl.BlockSpec(
        (te, dim), lambda c, i: (jnp.minimum(c * ne_pc + i, ne_tiles - 1), 0))
    rel_spec = pl.BlockSpec((n_rel_pad, dim), lambda c, i: (0, 0))   # resident

    # Derived VMEM budget: double buffers + resident tables + scratch, with
    # ~25% + 2 MiB headroom (~27 MiB at default tiles -> fits v7x's 64 MiB).
    footprint = (2 * _tile_bytes(tb, 4 * dim, isz)            # packed batch stream
                 + 2 * _tile_bytes(tb, 2, 4)                  # relation-id stream
                 + 2 * _tile_bytes(te, dim, isz)              # entity stream
                 + 2 * 2 * _tile_bytes(n_rel_pad, dim, isz)   # rel + nvec resident
                 + _tile_bytes(n_rel_pad, dim, 4)             # normalized-w scratch
                 + _tile_bytes(tb, 1, 4) + _tile_bytes(te, 1, 4)   # accumulators
                 + 2 * num_cores * _tile_bytes(1, 1, 4))      # output
    vmem_limit = max(int(footprint * 1.25) + (2 << 20), 8 << 20)

    kernel = _make_kernel(batch, n_ent, n_rel, n_rel_pad, dim, tb,
                          nb_tiles, ne_tiles, nb_pc, ne_pc, steps)

    out = pl.pallas_call(
        kernel,
        out_shape=jax.ShapeDtypeStruct((num_cores, 1, 1), jnp.float32),
        grid_spec=pltpu.PrefetchScalarGridSpec(
            num_scalar_prefetch=0,
            grid=(num_cores, steps),
            in_specs=[batch_spec, ids_spec, ent_spec, rel_spec, rel_spec],
            out_specs=pl.BlockSpec((None, 1, 1), lambda c, i: (c, 0, 0)),
            scratch_shapes=[pltpu.VMEM((n_rel_pad, dim), jnp.float32),  # normalized w_r
                            pltpu.VMEM((tb, 1), jnp.float32),           # per-row margin acc
                            pltpu.VMEM((te, 1), jnp.float32)],          # per-row scale acc
        ),
        compiler_params=pltpu.CompilerParams(
            # core axis shards across v7x's 2 TensorCores; streaming axis carries
            # the accumulators so it must stay "arbitrary".
            dimension_semantics=("parallel", "arbitrary"),
            vmem_limit_bytes=vmem_limit,
        ),
    )(packed, rel_ids, ent_padded, rel_padded, nvec_padded)
    return jnp.sum(out)   # combine per-core partial losses


def transh_loss_ref(entities, relations, norm_vectors, pos_tr, neg_tr):
    """Pure-JAX reference mirroring the PyTorch semantics."""
    def score(triples):
        h = entities[triples[:, 0]]
        r = relations[triples[:, 1]]
        t = entities[triples[:, 2]]
        w = norm_vectors[triples[:, 1]]
        wn = w / jnp.maximum(jnp.linalg.norm(w, axis=-1, keepdims=True), EPS_NORM)
        h = h - jnp.sum(h * wn, -1, keepdims=True) * wn
        t = t - jnp.sum(t * wn, -1, keepdims=True) * wn
        d = jnp.linalg.norm((h + r) - t + EPS_PDIST, axis=-1)
        return d ** 2

    pos_s, neg_s = score(pos_tr), score(neg_tr)
    margin_loss = jnp.mean(jnp.maximum(pos_s + MARGIN - neg_s, 0.0))
    scale_loss = jnp.mean(jnp.maximum(jnp.linalg.norm(entities, axis=1) - 1.0, 0.0))
    wr_dr = jnp.sum(norm_vectors * relations, axis=1)
    dr2 = jnp.linalg.norm(relations, axis=1)
    orth_loss = jnp.maximum(jnp.sum((wr_dr / dr2) ** 2 - EPS_ORTH ** 2), 0.0)
    return margin_loss + C * (scale_loss + orth_loss)


def xavier_normal(key, shape):
    fan_out, fan_in = shape
    std = (2.0 / (fan_in + fan_out)) ** 0.5
    return std * jax.random.normal(key, shape, dtype=jnp.float32)


if __name__ == "__main__":
    # Lane-dense dim (=128); small but multi-tile sizes exercising the grid,
    # the padded-row masking (batch=192 vs tile 128) and the padded relation
    # table (20 -> 24 rows).
    entity_size, relation_size, dim, batch = 2048, 20, 128, 192

    key = jax.random.PRNGKey(0)
    k_e, k_r, k_w, k_ph, k_pr, k_pt, k_nh, k_nr, k_nt = jax.random.split(key, 9)

    entities = xavier_normal(k_e, (entity_size, dim))
    relations = xavier_normal(k_r, (relation_size, dim))
    norm_vectors = xavier_normal(k_w, (relation_size, dim))

    def make_triples(kh, kr, kt):
        heads = jax.random.randint(kh, (batch,), 0, entity_size, dtype=jnp.int32)
        rels = jax.random.randint(kr, (batch,), 0, relation_size, dtype=jnp.int32)
        tails = jax.random.randint(kt, (batch,), 0, entity_size, dtype=jnp.int32)
        return jnp.stack([heads, rels, tails], axis=1)

    positive_triples = make_triples(k_ph, k_pr, k_pt)
    negative_triples = make_triples(k_nh, k_nr, k_nt)

    # 2 batch tiles x 4 entity tiles, split across the 2-wide "parallel" core axis.
    loss = transh_loss(entities, relations, norm_vectors,
                       positive_triples, negative_triples,
                       batch_tile=128, entity_tile=512)
    loss = jax.block_until_ready(loss)

    loss_ref = transh_loss_ref(entities, relations, norm_vectors,
                               positive_triples, negative_triples)
    np.testing.assert_allclose(np.asarray(loss), np.asarray(loss_ref),
                               rtol=1e-4, atol=1e-5)

    print("KERNEL_OK")
</pallas_src>

<mosaic_0001>
module attributes {stable_mosaic.version = 11 : i64} {
  func.func @kernel(%arg0: i32, %arg1: i32, %arg2: memref<128x512xf32, #tpu.memory_space<vmem>>, %arg3: memref<128x2xi32, #tpu.memory_space<vmem>>, %arg4: memref<512x128xf32, #tpu.memory_space<vmem>>, %arg5: memref<24x128xf32, #tpu.memory_space<vmem>>, %arg6: memref<24x128xf32, #tpu.memory_space<vmem>>, %arg7: memref<1x1x1xf32, #tpu.memory_space<vmem>>, %arg8: memref<24x128xf32, #tpu.memory_space<vmem>>, %arg9: memref<128x1xf32, #tpu.memory_space<vmem>>, %arg10: memref<512x1xf32, #tpu.memory_space<vmem>>) attributes {dimension_semantics = [#tpu.dimension_semantics<parallel>, #tpu.dimension_semantics<arbitrary>], iteration_bounds = array<i64: 2, 2>, scalar_prefetch = 0 : i64, scratch_operands = 3 : i64, tpu.core_type = #tpu.core_type<tc>, window_params = [{transform_indices = @transform_0, window_bounds = array<i64: 128, 512>}, {transform_indices = @transform_1, window_bounds = array<i64: 128, 2>}, {transform_indices = @transform_2, window_bounds = array<i64: 512, 128>}, {pipeline_mode = #tpu.pipeline_mode<synchronous>, transform_indices = @transform_3, window_bounds = array<i64: 24, 128>}, {pipeline_mode = #tpu.pipeline_mode<synchronous>, transform_indices = @transform_4, window_bounds = array<i64: 24, 128>}, {transform_indices = @transform_5, window_bounds = array<i64: 1, 1, 1>}]} {
    %c0_i32 = arith.constant 0 : i32
    %0 = arith.cmpi eq, %arg1, %c0_i32 : i32
    %1 = arith.extui %0 : i1 to i32
    %c0_i32_0 = arith.constant 0 : i32
    %2 = arith.cmpi ne, %1, %c0_i32_0 : i32
    scf.if %2 {
      %cst = arith.constant 0.000000e+00 : f32
      %20 = vector.broadcast %cst : f32 to vector<128x1xf32>
      %c0 = arith.constant 0 : index
      %c0_8 = arith.constant 0 : index
      %21 = vector.load %arg9[%c0, %c0_8] : memref<128x1xf32, #tpu.memory_space<vmem>>, vector<128x1xf32>
      tpu.vector_store %arg9[%c0, %c0_8], %20 {strides = array<i32>} : memref<128x1xf32, #tpu.memory_space<vmem>>, vector<128x1xf32>,
      %cst_9 = arith.constant 0.000000e+00 : f32
      %22 = vector.broadcast %cst_9 : f32 to vector<512x1xf32>
      %c0_10 = arith.constant 0 : index
      %c0_11 = arith.constant 0 : index
      %23 = vector.load %arg10[%c0_10, %c0_11] : memref<512x1xf32, #tpu.memory_space<vmem>>, vector<512x1xf32>
      tpu.vector_store %arg10[%c0_10, %c0_11], %22 {strides = array<i32>} : memref<512x1xf32, #tpu.memory_space<vmem>>, vector<512x1xf32>,
      %c0_12 = arith.constant 0 : index
      %c0_13 = arith.constant 0 : index
      %24 = vector.load %arg6[%c0_12, %c0_13] : memref<24x128xf32, #tpu.memory_space<vmem>>, vector<24x128xf32>
      %25 = arith.mulf %24, %24 : vector<24x128xf32>
      %cst_14 = arith.constant dense<0.000000e+00> : vector<24xf32>
      %26 = vector.multi_reduction <add>, %25, %cst_14 [1] : vector<24x128xf32> to vector<24xf32>
      %27 = vector.shape_cast %26 : vector<24xf32> to vector<24x1xf32>
      %cst_15 = arith.constant 1.000000e-24 : f32
      %28 = vector.broadcast %cst_15 : f32 to vector<24x1xf32>
      %29 = arith.maximumf %27, %28 : vector<24x1xf32>
      %30 = math.rsqrt %29 : vector<24x1xf32>
      %31 = vector.broadcast %30 : vector<24x1xf32> to vector<24x128xf32>
      %32 = arith.mulf %24, %31 : vector<24x128xf32>
      %c0_16 = arith.constant 0 : index
      %c0_17 = arith.constant 0 : index
      %33 = vector.load %arg8[%c0_16, %c0_17] : memref<24x128xf32, #tpu.memory_space<vmem>>, vector<24x128xf32>
      tpu.vector_store %arg8[%c0_16, %c0_17], %32 {strides = array<i32>} : memref<24x128xf32, #tpu.memory_space<vmem>>, vector<24x128xf32>,
    } else {
    }
    %c1_i32 = arith.constant 1 : i32
    %3 = arith.muli %arg0, %c1_i32 : i32
    %4 = arith.addi %3, %arg1 : i32
    %c1_i32_1 = arith.constant 1 : i32
    %5 = arith.cmpi slt, %arg1, %c1_i32_1 : i32
    %c2_i32 = arith.constant 2 : i32
    %6 = arith.cmpi slt, %4, %c2_i32 : i32
    %7 = arith.andi %5, %6 : i1
    %8 = arith.extui %7 : i1 to i32
    %c0_i32_2 = arith.constant 0 : i32
    %9 = arith.cmpi ne, %8, %c0_i32_2 : i32
    scf.if %9 {
      %c0 = arith.constant 0 : index
      %c0_8 = arith.constant 0 : index
      %20 = vector.load %arg2[%c0, %c0_8] : memref<128x512xf32, #tpu.memory_space<vmem>>, vector<128x512xf32>
      %21 = vector.extract_strided_slice %20 {offsets = [0, 0], sizes = [128, 128], strides = [1, 1]} : vector<128x512xf32> to vector<128x128xf32>
      %22 = vector.extract_strided_slice %20 {offsets = [0, 128], sizes = [128, 128], strides = [1, 1]} : vector<128x512xf32> to vector<128x128xf32>
      %23 = vector.extract_strided_slice %20 {offsets = [0, 256], sizes = [128, 128], strides = [1, 1]} : vector<128x512xf32> to vector<128x128xf32>
      %24 = vector.extract_strided_slice %20 {offsets = [0, 384], sizes = [128, 128], strides = [1, 1]} : vector<128x512xf32> to vector<128x128xf32>
      %c0_9 = arith.constant 0 : index
      %c0_10 = arith.constant 0 : index
      %25 = vector.load %arg3[%c0_9, %c0_10] : memref<128x2xi32, #tpu.memory_space<vmem>>, vector<128x2xi32>
      %c0_11 = arith.constant 0 : index
      %c0_12 = arith.constant 0 : index
      %26 = vector.load %arg5[%c0_11, %c0_12] : memref<24x128xf32, #tpu.memory_space<vmem>>, vector<24x128xf32>
      %c0_13 = arith.constant 0 : index
      %c0_14 = arith.constant 0 : index
      %27 = vector.load %arg8[%c0_13, %c0_14] : memref<24x128xf32, #tpu.memory_space<vmem>>, vector<24x128xf32>
      %28 = tpu.iota {dimensions = array<i32: 1>} : vector<128x24xi32>
      %29 = vector.extract_strided_slice %25 {offsets = [0, 0], sizes = [128, 1], strides = [1, 1]} : vector<128x2xi32> to vector<128x1xi32>
      %30 = vector.broadcast %29 : vector<128x1xi32> to vector<128x24xi32>
      %31 = arith.cmpi eq, %28, %30 : vector<128x24xi32>
      %32 = arith.extui %31 : vector<128x24xi1> to vector<128x24xi32>
      %33 = arith.sitofp %32 : vector<128x24xi32> to vector<128x24xf32>
      %cst = arith.constant dense<0.000000e+00> : vector<128x128xf32>
      %34 = tpu.matmul %33, %26, %cst {dimension_numbers = #tpu.dot_dimension_numbers<[1], [0], [0], [1], [0, 0, 1, 1], [], []>} : vector<128x24xf32>, vector<24x128xf32>, vector<128x128xf32> -> vector<128x128xf32>
      %cst_15 = arith.constant dense<0.000000e+00> : vector<128x128xf32>
      %35 = tpu.matmul %33, %27, %cst_15 {dimension_numbers = #tpu.dot_dimension_numbers<[1], [0], [0], [1], [0, 0, 1, 1], [], []>} : vector<128x24xf32>, vector<24x128xf32>, vector<128x128xf32> -> vector<128x128xf32>
      %36 = vector.extract_strided_slice %25 {offsets = [0, 1], sizes = [128, 1], strides = [1, 1]} : vector<128x2xi32> to vector<128x1xi32>
      %37 = vector.broadcast %36 : vector<128x1xi32> to vector<128x24xi32>
      %38 = arith.cmpi eq, %28, %37 : vector<128x24xi32>
      %39 = arith.extui %38 : vector<128x24xi1> to vector<128x24xi32>
      %40 = arith.sitofp %39 : vector<128x24xi32> to vector<128x24xf32>
      %cst_16 = arith.constant dense<0.000000e+00> : vector<128x128xf32>
      %41 = tpu.matmul %40, %26, %cst_16 {dimension_numbers = #tpu.dot_dimension_numbers<[1], [0], [0], [1], [0, 0, 1, 1], [], []>} : vector<128x24xf32>, vector<24x128xf32>, vector<128x128xf32> -> vector<128x128xf32>
      %cst_17 = arith.constant dense<0.000000e+00> : vector<128x128xf32>
      %42 = tpu.matmul %40, %27, %cst_17 {dimension_numbers = #tpu.dot_dimension_numbers<[1], [0], [0], [1], [0, 0, 1, 1], [], []>} : vector<128x24xf32>, vector<24x128xf32>, vector<128x128xf32> -> vector<128x128xf32>
      %43 = arith.mulf %21, %35 : vector<128x128xf32>
      %cst_18 = arith.constant dense<0.000000e+00> : vector<128xf32>
      %44 = vector.multi_reduction <add>, %43, %cst_18 [1] : vector<128x128xf32> to vector<128xf32>
      %45 = vector.shape_cast %44 : vector<128xf32> to vector<128x1xf32>
      %46 = vector.broadcast %45 : vector<128x1xf32> to vector<128x128xf32>
      %47 = arith.mulf %46, %35 : vector<128x128xf32>
      %48 = arith.subf %21, %47 : vector<128x128xf32>
      %49 = arith.mulf %22, %35 : vector<128x128xf32>
      %cst_19 = arith.constant dense<0.000000e+00> : vector<128xf32>
      %50 = vector.multi_reduction <add>, %49, %cst_19 [1] : vector<128x128xf32> to vector<128xf32>
      %51 = vector.shape_cast %50 : vector<128xf32> to vector<128x1xf32>
      %52 = vector.broadcast %51 : vector<128x1xf32> to vector<128x128xf32>
      %53 = arith.mulf %52, %35 : vector<128x128xf32>
      %54 = arith.subf %22, %53 : vector<128x128xf32>
      %55 = arith.addf %48, %34 : vector<128x128xf32>
      %56 = arith.subf %55, %54 : vector<128x128xf32>
      %cst_20 = arith.constant 9.99999997E-7 : f32
      %57 = vector.broadcast %cst_20 : f32 to vector<128x128xf32>
      %58 = arith.addf %56, %57 : vector<128x128xf32>
      %59 = arith.mulf %58, %58 : vector<128x128xf32>
      %cst_21 = arith.constant dense<0.000000e+00> : vector<128xf32>
      %60 = vector.multi_reduction <add>, %59, %cst_21 [1] : vector<128x128xf32> to vector<128xf32>
      %61 = vector.shape_cast %60 : vector<128xf32> to vector<128x1xf32>
      %62 = arith.mulf %23, %42 : vector<128x128xf32>
      %cst_22 = arith.constant dense<0.000000e+00> : vector<128xf32>
      %63 = vector.multi_reduction <add>, %62, %cst_22 [1] : vector<128x128xf32> to vector<128xf32>
      %64 = vector.shape_cast %63 : vector<128xf32> to vector<128x1xf32>
      %65 = vector.broadcast %64 : vector<128x1xf32> to vector<128x128xf32>
      %66 = arith.mulf %65, %42 : vector<128x128xf32>
      %67 = arith.subf %23, %66 : vector<128x128xf32>
      %68 = arith.mulf %24, %42 : vector<128x128xf32>
      %cst_23 = arith.constant dense<0.000000e+00> : vector<128xf32>
      %69 = vector.multi_reduction <add>, %68, %cst_23 [1] : vector<128x128xf32> to vector<128xf32>
      %70 = vector.shape_cast %69 : vector<128xf32> to vector<128x1xf32>
      %71 = vector.broadcast %70 : vector<128x1xf32> to vector<128x128xf32>
      %72 = arith.mulf %71, %42 : vector<128x128xf32>
      %73 = arith.subf %24, %72 : vector<128x128xf32>
      %74 = arith.addf %67, %41 : vector<128x128xf32>
      %75 = arith.subf %74, %73 : vector<128x128xf32>
      %cst_24 = arith.constant 9.99999997E-7 : f32
      %76 = vector.broadcast %cst_24 : f32 to vector<128x128xf32>
      %77 = arith.addf %75, %76 : vector<128x128xf32>
      %78 = arith.mulf %77, %77 : vector<128x128xf32>
      %cst_25 = arith.constant dense<0.000000e+00> : vector<128xf32>
      %79 = vector.multi_reduction <add>, %78, %cst_25 [1] : vector<128x128xf32> to vector<128xf32>
      %80 = vector.shape_cast %79 : vector<128xf32> to vector<128x1xf32>
      %cst_26 = arith.constant 1.000000e+00 : f32
      %81 = vector.broadcast %cst_26 : f32 to vector<128x1xf32>
      %82 = arith.addf %61, %81 : vector<128x1xf32>
      %83 = arith.subf %82, %80 : vector<128x1xf32>
      %cst_27 = arith.constant 0.000000e+00 : f32
      %84 = vector.broadcast %cst_27 : f32 to vector<128x1xf32>
      %85 = arith.maximumf %83, %84 : vector<128x1xf32>
      %86 = tpu.iota {dimensions = array<i32: 0>} : vector<128x1xi32>
      %c128_i32 = arith.constant 128 : i32
      %87 = arith.muli %4, %c128_i32 : i32
      %88 = vector.broadcast %87 : i32 to vector<128x1xi32>
      %89 = arith.addi %86, %88 : vector<128x1xi32>
      %c0_28 = arith.constant 0 : index
      %c0_29 = arith.constant 0 : index
      %90 = vector.load %arg9[%c0_28, %c0_29] : memref<128x1xf32, #tpu.memory_space<vmem>>, vector<128x1xf32>
      %c192_i32 = arith.constant 192 : i32
      %91 = vector.broadcast %c192_i32 : i32 to vector<128x1xi32>
      %92 = arith.cmpi slt, %89, %91 : vector<128x1xi32>
      %cst_30 = arith.constant 0.000000e+00 : f32
      %93 = vector.broadcast %cst_30 : f32 to vector<128x1xf32>
      %94 = arith.select %92, %85, %93 : vector<128x1xi1>, vector<128x1xf32>
      %95 = arith.addf %90, %94 : vector<128x1xf32>
      %c0_31 = arith.constant 0 : index
      %c0_32 = arith.constant 0 : index
      %96 = vector.load %arg9[%c0_31, %c0_32] : memref<128x1xf32, #tpu.memory_space<vmem>>, vector<128x1xf32>
      tpu.vector_store %arg9[%c0_31, %c0_32], %95 {strides = array<i32>} : memref<128x1xf32, #tpu.memory_space<vmem>>, vector<128x1xf32>,
    } else {
    }
    %c2_i32_3 = arith.constant 2 : i32
    %10 = arith.muli %arg0, %c2_i32_3 : i32
    %11 = arith.addi %10, %arg1 : i32
    %c2_i32_4 = arith.constant 2 : i32
    %12 = arith.cmpi slt, %arg1, %c2_i32_4 : i32
    %c4_i32 = arith.constant 4 : i32
    %13 = arith.cmpi slt, %11, %c4_i32 : i32
    %14 = arith.andi %12, %13 : i1
    %15 = arith.extui %14 : i1 to i32
    %c0_i32_5 = arith.constant 0 : i32
    %16 = arith.cmpi ne, %15, %c0_i32_5 : i32
    scf.if %16 {
      %c0 = arith.constant 0 : index
      %c0_8 = arith.constant 0 : index
      %20 = vector.load %arg4[%c0, %c0_8] : memref<512x128xf32, #tpu.memory_space<vmem>>, vector<512x128xf32>
      %21 = arith.mulf %20, %20 : vector<512x128xf32>
      %cst = arith.constant dense<0.000000e+00> : vector<512xf32>
      %22 = vector.multi_reduction <add>, %21, %cst [1] : vector<512x128xf32> to vector<512xf32>
      %23 = vector.shape_cast %22 : vector<512xf32> to vector<512x1xf32>
      %24 = math.sqrt %23 : vector<512x1xf32>
      %c0_9 = arith.constant 0 : index
      %c0_10 = arith.constant 0 : index
      %25 = vector.load %arg10[%c0_9, %c0_10] : memref<512x1xf32, #tpu.memory_space<vmem>>, vector<512x1xf32>
      %cst_11 = arith.constant 1.000000e+00 : f32
      %26 = vector.broadcast %cst_11 : f32 to vector<512x1xf32>
      %27 = arith.subf %24, %26 : vector<512x1xf32>
      %cst_12 = arith.constant 0.000000e+00 : f32
      %28 = vector.broadcast %cst_12 : f32 to vector<512x1xf32>
      %29 = arith.maximumf %27, %28 : vector<512x1xf32>
      %30 = arith.addf %25, %29 : vector<512x1xf32>
      %c0_13 = arith.constant 0 : index
      %c0_14 = arith.constant 0 : index
      %31 = vector.load %arg10[%c0_13, %c0_14] : memref<512x1xf32, #tpu.memory_space<vmem>>, vector<512x1xf32>
      tpu.vector_store %arg10[%c0_13, %c0_14], %30 {strides = array<i32>} : memref<512x1xf32, #tpu.memory_space<vmem>>, vector<512x1xf32>,
    } else {
    }
    %c1_i32_6 = arith.constant 1 : i32
    %17 = arith.cmpi eq, %arg1, %c1_i32_6 : i32
    %18 = arith.extui %17 : i1 to i32
    %c0_i32_7 = arith.constant 0 : i32
    %19 = arith.cmpi ne, %18, %c0_i32_7 : i32
    scf.if %19 {
      %c0 = arith.constant 0 : index
      %c0_8 = arith.constant 0 : index
      %20 = vector.load %arg9[%c0, %c0_8] : memref<128x1xf32, #tpu.memory_space<vmem>>, vector<128x1xf32>
      %21 = vector.shape_cast %20 : vector<128x1xf32> to vector<1x128x1xf32>
      %cst = arith.constant dense<0.000000e+00> : vector<1xf32>
      %22 = vector.multi_reduction <add>, %21, %cst [1, 2] : vector<1x128x1xf32> to vector<1xf32>
      %23 = vector.shape_cast %22 : vector<1xf32> to vector<1x1x1xf32>
      %24 = vector.extract %23[0, 0, 0] : f32 from vector<1x1x1xf32>
      %25 = vector.broadcast %24 : f32 to vector<1x1xf32>
      %c0_9 = arith.constant 0 : index
      %c0_10 = arith.constant 0 : index
      %26 = vector.load %arg10[%c0_9, %c0_10] : memref<512x1xf32, #tpu.memory_space<vmem>>, vector<512x1xf32>
      %27 = vector.shape_cast %26 : vector<512x1xf32> to vector<1x512x1xf32>
      %cst_11 = arith.constant dense<0.000000e+00> : vector<1xf32>
      %28 = vector.multi_reduction <add>, %27, %cst_11 [1, 2] : vector<1x512x1xf32> to vector<1xf32>
      %29 = vector.shape_cast %28 : vector<1xf32> to vector<1x1x1xf32>
      %30 = vector.extract %29[0, 0, 0] : f32 from vector<1x1x1xf32>
      %31 = vector.broadcast %30 : f32 to vector<1x1xf32>
      %cst_12 = arith.constant 0.00520833349 : f32
      %32 = vector.broadcast %cst_12 : f32 to vector<1x1xf32>
      %33 = arith.mulf %25, %32 : vector<1x1xf32>
      %cst_13 = arith.constant 4.8828125E-4 : f32
      %34 = vector.broadcast %cst_13 : f32 to vector<1x1xf32>
      %35 = arith.mulf %31, %34 : vector<1x1xf32>
      %cst_14 = arith.constant 1.000000e+00 : f32
      %36 = vector.broadcast %cst_14 : f32 to vector<1x1xf32>
      %37 = arith.mulf %36, %35 : vector<1x1xf32>
      %38 = arith.addf %33, %37 : vector<1x1xf32>
      %c0_15 = arith.constant 0 : index
      %c0_16 = arith.constant 0 : index
      %39 = vector.load %arg6[%c0_15, %c0_16] : memref<24x128xf32, #tpu.memory_space<vmem>>, vector<24x128xf32>
      %c0_17 = arith.constant 0 : index
      %c0_18 = arith.constant 0 : index
      %40 = vector.load %arg5[%c0_17, %c0_18] : memref<24x128xf32, #tpu.memory_space<vmem>>, vector<24x128xf32>
      %41 = arith.mulf %39, %40 : vector<24x128xf32>
      %cst_19 = arith.constant dense<0.000000e+00> : vector<24xf32>
      %42 = vector.multi_reduction <add>, %41, %cst_19 [1] : vector<24x128xf32> to vector<24xf32>
      %43 = vector.shape_cast %42 : vector<24xf32> to vector<24x1xf32>
      %44 = arith.mulf %40, %40 : vector<24x128xf32>
      %cst_20 = arith.constant dense<0.000000e+00> : vector<24xf32>
      %45 = vector.multi_reduction <add>, %44, %cst_20 [1] : vector<24x128xf32> to vector<24xf32>
      %46 = vector.shape_cast %45 : vector<24xf32> to vector<24x1xf32>
      %cst_21 = arith.constant 1.000000e-30 : f32
      %47 = vector.broadcast %cst_21 : f32 to vector<24x1xf32>
      %48 = arith.maximumf %46, %47 : vector<24x1xf32>
      %49 = arith.mulf %43, %43 : vector<24x1xf32>
      %50 = tpu.reciprocal %48 : vector<24x1xf32> -> vector<24x1xf32>
      %51 = arith.mulf %49, %50 : vector<24x1xf32>
      %52 = vector.shape_cast %51 : vector<24x1xf32> to vector<1x24x1xf32>
      %cst_22 = arith.constant dense<0.000000e+00> : vector<1xf32>
      %53 = vector.multi_reduction <add>, %52, %cst_22 [1, 2] : vector<1x24x1xf32> to vector<1xf32>
      %54 = vector.shape_cast %53 : vector<1xf32> to vector<1x1x1xf32>
      %55 = vector.extract %54[0, 0, 0] : f32 from vector<1x1x1xf32>
      %56 = vector.broadcast %55 : f32 to vector<1x1xf32>
      %cst_23 = arith.constant 2.000000e-05 : f32
      %57 = vector.broadcast %cst_23 : f32 to vector<1x1xf32>
      %58 = arith.subf %56, %57 : vector<1x1xf32>
      %cst_24 = arith.constant 0.000000e+00 : f32
      %59 = vector.broadcast %cst_24 : f32 to vector<1x1xf32>
      %60 = arith.maximumf %58, %59 : vector<1x1xf32>
      %c0_i32_25 = arith.constant 0 : i32
      %61 = arith.cmpi eq, %arg0, %c0_i32_25 : i32
      %cst_26 = arith.constant 1.000000e+00 : f32
      %62 = vector.broadcast %cst_26 : f32 to vector<1x1xf32>
      %63 = arith.mulf %62, %60 : vector<1x1xf32>
      %cst_27 = arith.constant 0.000000e+00 : f32
      %64 = vector.broadcast %cst_27 : f32 to vector<1x1xf32>
      %65 = arith.select %61, %63, %64 : vector<1x1xf32>
      %66 = arith.addf %38, %65 : vector<1x1xf32>
      %c0_28 = arith.constant 0 : index
      %c0_29 = arith.constant 0 : index
      %c0_30 = arith.constant 0 : index
      %67 = vector.load %arg7[%c0_28, %c0_29, %c0_30] : memref<1x1x1xf32, #tpu.memory_space<vmem>>, vector<1x1x1xf32>
      %68 = vector.shape_cast %67 : vector<1x1x1xf32> to vector<1x1xf32>
      %69 = vector.shape_cast %66 : vector<1x1xf32> to vector<1x1x1xf32>
      tpu.vector_store %arg7[%c0_28, %c0_29, %c0_30], %69 {strides = array<i32>} : memref<1x1x1xf32, #tpu.memory_space<vmem>>, vector<1x1x1xf32>,
    } else {
    }
    return
  }
  func.func @transform_0(%arg0: i32, %arg1: i32) -> (i32, i32) {
    %c1_i32 = arith.constant 1 : i32
    %0 = arith.muli %arg0, %c1_i32 : i32
    %1 = arith.addi %0, %arg1 : i32
    %c1_i32_0 = arith.constant 1 : i32
    %2 = arith.minsi %1, %c1_i32_0 : i32
    %c0_i32 = arith.constant 0 : i32
    %c0_i32_1 = arith.constant 0 : i32
    return %2, %c0_i32 : i32, i32
  }
  func.func @transform_1(%arg0: i32, %arg1: i32) -> (i32, i32) {
    %c1_i32 = arith.constant 1 : i32
    %0 = arith.muli %arg0, %c1_i32 : i32
    %1 = arith.addi %0, %arg1 : i32
    %c1_i32_0 = arith.constant 1 : i32
    %2 = arith.minsi %1, %c1_i32_0 : i32
    %c0_i32 = arith.constant 0 : i32
    %c0_i32_1 = arith.constant 0 : i32
    return %2, %c0_i32 : i32, i32
  }
  func.func @transform_2(%arg0: i32, %arg1: i32) -> (i32, i32) {
    %c2_i32 = arith.constant 2 : i32
    %0 = arith.muli %arg0, %c2_i32 : i32
    %1 = arith.addi %0, %arg1 : i32
    %c3_i32 = arith.constant 3 : i32
    %2 = arith.minsi %1, %c3_i32 : i32
    %c0_i32 = arith.constant 0 : i32
    %c0_i32_0 = arith.constant 0 : i32
    return %2, %c0_i32 : i32, i32
  }
  func.func @transform_3(%arg0: i32, %arg1: i32) -> (i32, i32) {
    %c0_i32 = arith.constant 0 : i32
    %c0_i32_0 = arith.constant 0 : i32
    %c0_i32_1 = arith.constant 0 : i32
    return %c0_i32, %c0_i32_0 : i32, i32
  }
  func.func @transform_4(%arg0: i32, %arg1: i32) -> (i32, i32) {
    %c0_i32 = arith.constant 0 : i32
    %c0_i32_0 = arith.constant 0 : i32
    %c0_i32_1 = arith.constant 0 : i32
    return %c0_i32, %c0_i32_0 : i32, i32
  }
  func.func @transform_5(%arg0: i32, %arg1: i32) -> (i32, i32, i32) {
    %c0_i32 = arith.constant 0 : i32
    %c0_i32_0 = arith.constant 0 : i32
    %c0_i32_1 = arith.constant 0 : i32
    return %arg0, %c0_i32, %c0_i32_0 : i32, i32, i32
  }
}

</mosaic_0001>

<llo_original>
// kernel: tpu_custom_call.1
$region0: #{tpu_custom_call.1}
  #allocation0 [shape = 'u32[]', space=smem, size = 0x4, offset = 0x4, fixed_abs, tag = 'smem constant byte address 0x4 - core index']
  #allocation1 [shape = 'u32[144,128]{1,0:T(1,128)}', space=vmem, size = 0x12000, scoped, tag = 'internal scratch']
  #allocation2 [shape = 'f32[24,128]{1,0:T(8,128)}', space=vmem, size = 0x3000, scoped, tag = 'scratch operand']
  #allocation3 [shape = 'f32[128,1]{1,0:T(8,128)}', space=vmem, size = 0x10000, scoped, tag = 'scratch operand']
  #allocation4 [shape = 'f32[512,1]{1,0:T(8,128)}', space=vmem, size = 0x40000, scoped, tag = 'scratch operand']
  %s0 = inlined_call_operand.hbm [shape: f32[256,512], index: 0, kind: input, shape index: {}]
  %s1 = inlined_call_operand.vmem [shape: s32[256,2], index: 1, kind: input, shape index: {}]
  %s2 = inlined_call_operand.hbm [shape: f32[2048,128], index: 2, kind: input, shape index: {}]
  %s3 = inlined_call_operand.vmem [shape: f32[24,128], index: 3, kind: input, shape index: {}]
  %s4 = inlined_call_operand.vmem [shape: f32[24,128], index: 4, kind: input, shape index: {}]
  %s5 = inlined_call_operand.vmem [shape: f32[2,1,1], index: 5, kind: output, shape index: {}]
  %s6 = sld [smem:[#allocation0]]
  $region77: #{tpu_custom_call.1} parent=0
    _
  %s8 = ssub.s32 1, %s6
  %s9 = scalar_select 0, %s8, %s6
  $region1: #{tpu_custom_call.1} parent=0
    #allocation5 [shape = 'u8[524288]{0}', space=vmem, size = 0x80000, scoped, tag = 'input window, operand 0']
    #allocation6 [shape = 's32[2]{0}', space=sflag, size = 0x8, scoped, tag = 'scoped memory for tpu_custom_call.1']
    #allocation7 [shape = 'u8[524288]{0}', space=vmem, size = 0x80000, scoped, tag = 'input window, operand 2']
    #allocation8 [shape = 's32[2]{0}', space=sflag, size = 0x8, scoped, tag = 'scoped memory for tpu_custom_call.1']
    %10 = vsyncpa [#allocation6], 0
    %s11 = scalar_lea.sflag [#allocation6], 1
    %12 = vsyncpa %s11, 0
    %13 = vsyncpa [#allocation8], 0
    %s14 = scalar_lea.sflag [#allocation8], 1
    %15 = vsyncpa %s14, 0
    loop: start=0, step=1, limit=6
    $region2: #{tpu_custom_call.1} parent=1 // loop_pre_header
      _
    $region3: #{tpu_custom_call.1} parent=1 // loop_header
      %s17 = sphi 0, %s21
      %p18 = scmp.ge.s32.totalorder %s17, 6
      %s24 = sphi 0, %s36
      %s25 = sphi 0, %s32
      %s26 = sphi 0, %s24
      %s27 = sphi 0, %s25
      %s28 = sphi 0, %s26
      %s29 = sphi 0, %s27
      %s45 = sphi 0, %s47
      %s48 = sphi 0, %s45
      %s49 = sphi 0, %s48
      %s65 = sphi 0, %s49
      %s77 = sphi 0, %s79
      %s80 = sphi 0, %s77
      %s81 = sphi 0, %s80
      %s97 = sphi 0, %s81
      %s111 = sphi 0, %s113
      %s114 = sphi 0, %s111
      %s115 = sphi 0, %s114
      %s131 = sphi 0, %s115
      %s135 = sphi 0, %s135
      %s137 = sphi 0, %s135
      %s138 = sphi 0, %s137
      %s152 = sphi 0, %s138
      %s156 = sphi 0, %s156
      %s158 = sphi 0, %s156
      %s159 = sphi 0, %s158
      %s173 = sphi 0, %s159
      %s179 = sphi 0, %s181
      %s182 = sphi 0, %s179
      %s183 = sphi 0, %s182
      %s199 = sphi 0, %s183
    $region4: #{tpu_custom_call.1} parent=1 // loop_header_branch
      %20 = sbr.rel (%p18) target = $region8
    $region5: #{tpu_custom_call.1} parent=1 // loop_body
      %s22 = ssub.s32 %s17, 1
      %s23 = ssub.s32 %s17, 2
      %s30 = sadd.s32 1, %s25
      %p31 = scmp.ge.s32.totalorder %s30, 2
      %s32 = scalar_select %p31, 0, %s30
      %s33 = sadd.s32 1, %s24
      %s34 = scalar_select %p31, %s33, %s24
      %p35 = scmp.ge.s32.totalorder %s34, 2
      %s36 = scalar_select %p35, 0, %s34
      %s37 = sadd.s32 %s24, %s25
      %p38 = scmp.lt.s32.totalorder %s37, 1
      %s39 = scalar_select %p38, %s37, 1
      %s40 = sadd.s32 %s36, %s32
      %p41 = scmp.lt.s32.totalorder %s40, 1
      %s42 = scalar_select %p41, %s40, 1
      %s43 = ssub.s32 %s39, %s42
      %p44 = scmp.eq.s32.totalorder %s43, 0
      %s46 = sadd.s32 %s45, 1
      %s47 = scalar_select %p44, %s45, %s46
      %p50 = pneg %p44
      %p51 = scmp.eq.s32.totalorder %s17, 3
      %p52 = por %p50, %p51
      %p53 = scmp.ne.s32.totalorder %s45, %s48
      %p54 = scmp.eq.s32.totalorder %s17, 0
      %p55 = por %p53, %p54
      %p56 = scmp.ne.s32.totalorder %s45, %s48
      %p57 = scmp.eq.s32.totalorder %s22, 3
      %p58 = por %p56, %p57
      %p59 = scmp.ne.s32.totalorder %s48, %s49
      %p60 = scmp.eq.s32.totalorder %s22, 0
      %p61 = por %p59, %p60
      %p62 = scmp.ne.s32.totalorder %s48, %s49
      %p63 = scmp.eq.s32.totalorder %s23, 3
      %p64 = por %p62, %p63
      %p66 = scmp.ne.s32.totalorder %s49, %s65
      %p67 = scmp.eq.s32.totalorder %s23, 0
      %p68 = por %p66, %p67
      %s69 = sadd.s32 %s24, %s25
      %p70 = scmp.lt.s32.totalorder %s69, 1
      %s71 = scalar_select %p70, %s69, 1
      %s72 = sadd.s32 %s36, %s32
      %p73 = scmp.lt.s32.totalorder %s72, 1
      %s74 = scalar_select %p73, %s72, 1
      %s75 = ssub.s32 %s71, %s74
      %p76 = scmp.eq.s32.totalorder %s75, 0
      %s78 = sadd.s32 %s77, 1
      %s79 = scalar_select %p76, %s77, %s78
      %p82 = pneg %p76
      %p83 = scmp.eq.s32.totalorder %s17, 3
      %p84 = por %p82, %p83
      %p85 = scmp.ne.s32.totalorder %s77, %s80
      %p86 = scmp.eq.s32.totalorder %s17, 0
      %p87 = por %p85, %p86
      %p88 = scmp.ne.s32.totalorder %s77, %s80
      %p89 = scmp.eq.s32.totalorder %s22, 3
      %p90 = por %p88, %p89
      %p91 = scmp.ne.s32.totalorder %s80, %s81
      %p92 = scmp.eq.s32.totalorder %s22, 0
      %p93 = por %p91, %p92
      %p94 = scmp.ne.s32.totalorder %s80, %s81
      %p95 = scmp.eq.s32.totalorder %s23, 3
      %p96 = por %p94, %p95
      %p98 = scmp.ne.s32.totalorder %s81, %s97
      %p99 = scmp.eq.s32.totalorder %s23, 0
      %p100 = por %p98, %p99
      %s101 = smul.u32 %s24, 2
      %s102 = sadd.s32 %s101, %s25
      %p103 = scmp.lt.s32.totalorder %s102, 3
      %s104 = scalar_select %p103, %s102, 3
      %s105 = smul.u32 %s36, 2
      %s106 = sadd.s32 %s105, %s32
      %p107 = scmp.lt.s32.totalorder %s106, 3
      %s108 = scalar_select %p107, %s106, 3
      %s109 = ssub.s32 %s104, %s108
      %p110 = scmp.eq.s32.totalorder %s109, 0
      %s112 = sadd.s32 %s111, 1
      %s113 = scalar_select %p110, %s111, %s112
      %p116 = pneg %p110
      %p117 = scmp.eq.s32.totalorder %s17, 3
      %p118 = por %p116, %p117
      %p119 = scmp.ne.s32.totalorder %s111, %s114
      %p120 = scmp.eq.s32.totalorder %s17, 0
      %p121 = por %p119, %p120
      %p122 = scmp.ne.s32.totalorder %s111, %s114
      %p123 = scmp.eq.s32.totalorder %s22, 3
      %p124 = por %p122, %p123
      %p125 = scmp.ne.s32.totalorder %s114, %s115
      %p126 = scmp.eq.s32.totalorder %s22, 0
      %p127 = por %p125, %p126
      %p128 = scmp.ne.s32.totalorder %s114, %s115
      %p129 = scmp.eq.s32.totalorder %s23, 3
      %p130 = por %p128, %p129
      %p132 = scmp.ne.s32.totalorder %s115, %s131
      %p133 = scmp.eq.s32.totalorder %s23, 0
      %p134 = por %p132, %p133
      %s136 = sadd.s32 %s135, 1
      %p139 = scmp.eq.s32.totalorder %s17, 3
      %p140 = scmp.ne.s32.totalorder %s135, %s137
      %p141 = scmp.eq.s32.totalorder %s17, 0
      %p142 = por %p140, %p141
      %p143 = scmp.ne.s32.totalorder %s135, %s137
      %p144 = scmp.eq.s32.totalorder %s22, 3
      %p145 = por %p143, %p144
      %p146 = scmp.ne.s32.totalorder %s137, %s138
      %p147 = scmp.eq.s32.totalorder %s22, 0
      %p148 = por %p146, %p147
      %p149 = scmp.ne.s32.totalorder %s137, %s138
      %p150 = scmp.eq.s32.totalorder %s23, 3
      %p151 = por %p149, %p150
      %p153 = scmp.ne.s32.totalorder %s138, %s152
      %p154 = scmp.eq.s32.totalorder %s23, 0
      %p155 = por %p153, %p154
      %s157 = sadd.s32 %s156, 1
      %p160 = scmp.eq.s32.totalorder %s17, 3
      %p161 = scmp.ne.s32.totalorder %s156, %s158
      %p162 = scmp.eq.s32.totalorder %s17, 0
      %p163 = por %p161, %p162
      %p164 = scmp.ne.s32.totalorder %s156, %s158
      %p165 = scmp.eq.s32.totalorder %s22, 3
      %p166 = por %p164, %p165
      %p167 = scmp.ne.s32.totalorder %s158, %s159
      %p168 = scmp.eq.s32.totalorder %s22, 0
      %p169 = por %p167, %p168
      %p170 = scmp.ne.s32.totalorder %s158, %s159
      %p171 = scmp.eq.s32.totalorder %s23, 3
      %p172 = por %p170, %p171
      %p174 = scmp.ne.s32.totalorder %s159, %s173
      %p175 = scmp.eq.s32.totalorder %s23, 0
      %p176 = por %p174, %p175
      %s177 = ssub.s32 %s24, %s36
      %p178 = scmp.eq.s32.totalorder %s177, 0
      %s180 = sadd.s32 %s179, 1
      %s181 = scalar_select %p178, %s179, %s180
      %p184 = pneg %p178
      %p185 = scmp.eq.s32.totalorder %s17, 3
      %p186 = por %p184, %p185
      %p187 = scmp.ne.s32.totalorder %s179, %s182
      %p188 = scmp.eq.s32.totalorder %s17, 0
      %p189 = por %p187, %p188
      %p190 = scmp.ne.s32.totalorder %s179, %s182
      %p191 = scmp.eq.s32.totalorder %s22, 3
      %p192 = por %p190, %p191
      %p193 = scmp.ne.s32.totalorder %s182, %s183
      %p194 = scmp.eq.s32.totalorder %s22, 0
      %p195 = por %p193, %p194
      %p196 = scmp.ne.s32.totalorder %s182, %s183
      %p197 = scmp.eq.s32.totalorder %s23, 3
      %p198 = por %p196, %p197
      %p200 = scmp.ne.s32.totalorder %s183, %s199
      %p201 = scmp.eq.s32.totalorder %s23, 0
      %p202 = por %p200, %p201
      %p203 = scmp.le.s32.totalorder 1, %s17
      %p204 = scmp.lt.s32.totalorder %s17, 5
      %p205 = pnand %p203, %p204
      %p206 = pneg %p205
      // Predicated region
      $region9: #{tpu_custom_call.1} parent=5 // pred_check
        _
      $region10: #{tpu_custom_call.1} parent=5 // pred_check_branch
        %208 = sbr.rel (%p205) target = $region12
      $region11: #{tpu_custom_call.1} parent=5 // pred_region
        %s209 = ssub.s32 %s17, 1
        // Predicated region
        $region13: #{tpu_custom_call.1} parent=11 // pred_check
          %p210 = pneg %p148
        $region14: #{tpu_custom_call.1} parent=11 // pred_check_branch
          %212 = sbr.rel (%p210) target = $region16
        $region15: #{tpu_custom_call.1} parent=11 // pred_region
          _
        $region16: #{tpu_custom_call.1} parent=11 // pred_fallthru
          _
        // Predicated region
        $region17: #{tpu_custom_call.1} parent=11 // pred_check
          %p213 = pneg %p169
        $region18: #{tpu_custom_call.1} parent=11 // pred_check_branch
          %215 = sbr.rel (%p213) target = $region20
        $region19: #{tpu_custom_call.1} parent=11 // pred_region
          _
        $region20: #{tpu_custom_call.1} parent=11 // pred_fallthru
          _
      $region12: #{tpu_custom_call.1} parent=5 // pred_fallthru
        _
      %p216 = scmp.lt.s32.totalorder %s17, 4
      // Predicated region
      $region21: #{tpu_custom_call.1} parent=5 // pred_check
        %p217 = pneg %p216
      $region22: #{tpu_custom_call.1} parent=5 // pred_check_branch
        %219 = sbr.rel (%p217) target = $region24
      $region23: #{tpu_custom_call.1} parent=5 // pred_region
        // Predicated region
        $region25: #{tpu_custom_call.1} parent=23 // pred_check
          %p220 = pneg %p55
        $region26: #{tpu_custom_call.1} parent=23 // pred_check_branch
          %222 = sbr.rel (%p220) target = $region28
        $region27: #{tpu_custom_call.1} parent=23 // pred_region
          %s223 = sand.u32 %s45, 1
          %s224 = scalar_lea.sflag [#allocation6], %s223
          %s225 = sand.u32 %s45, 1
          %s226 = smul.addr %s225, 512
          %s227 = scalar_lea.vmem [#allocation5], %s226
          %s228 = sadd.s32 %s24, %s25
          %p229 = scmp.lt.s32.totalorder %s228, 1
          %s230 = scalar_select %p229, %s228, 1
          %s231 = smul.u32 16, %s230
          %s233 = ssub.s32 8192, 8192
          %234 = vsyncadd %s224, %s233
          %s235 = smul.addr %s231, 4
          %s236 = smul.addr %s235, 128
          %s237 = scalar_lea.hbm %s0, %s236
          %s238 = sshll.u32 %s227, 4
          %s239 = int_to_ptr.vmem [resolvable:$true] %s238
          %244 = dma.hbm_to_vmem [thread:$0]  %s237, 8192, %s239, %s224, 512, 512, 32
        $region28: #{tpu_custom_call.1} parent=23 // pred_fallthru
          _
        // Predicated region
        $region29: #{tpu_custom_call.1} parent=23 // pred_check
          %p245 = pneg %p87
        $region30: #{tpu_custom_call.1} parent=23 // pred_check_branch
          %247 = sbr.rel (%p245) target = $region32
        $region31: #{tpu_custom_call.1} parent=23 // pred_region
          %s248 = sadd.s32 %s24, %s25
          %p249 = scmp.lt.s32.totalorder %s248, 1
          %s250 = scalar_select %p249, %s248, 1
          %s251 = smul.u32 16, %s250
          %p252 = scmp.lt.s32.totalorder %s251, 31
          %s253 = scalar_select %p252, %s251, 31
          %s254 = smul.addr %s253, 8
          %s255 = scalar_lea.vmem %s1, %s254
          %s256 = sadd.s32 %s24, %s25
          %p257 = scmp.lt.s32.totalorder %s256, 1
          %s258 = scalar_select %p257, %s256, 1
          %s259 = smul.u32 16, %s258
        $region32: #{tpu_custom_call.1} parent=23 // pred_fallthru
          _
        // Predicated region
        $region33: #{tpu_custom_call.1} parent=23 // pred_check
          %p260 = pneg %p121
        $region34: #{tpu_custom_call.1} parent=23 // pred_check_branch
          %262 = sbr.rel (%p260) target = $region36
        $region35: #{tpu_custom_call.1} parent=23 // pred_region
          %s263 = sand.u32 %s111, 1
          %s264 = scalar_lea.sflag [#allocation8], %s263
          %s265 = sand.u32 %s111, 1
          %s266 = smul.addr %s265, 512
          %s267 = scalar_lea.vmem [#allocation7], %s266
          %s268 = smul.u32 %s24, 2
          %s269 = sadd.s32 %s268, %s25
          %p270 = scmp.lt.s32.totalorder %s269, 3
          %s271 = scalar_select %p270, %s269, 3
          %s272 = smul.u32 64, %s271
          %s274 = ssub.s32 8192, 8192
          %275 = vsyncadd %s264, %s274
          %s276 = smul.addr %s272, 128
          %s277 = scalar_lea.hbm %s2, %s276
          %s278 = sshll.u32 %s267, 4
          %s279 = int_to_ptr.vmem [resolvable:$true] %s278
          %284 = dma.hbm_to_vmem [thread:$0]  %s277, 8192, %s279, %s264, 128, 128, 8
        $region36: #{tpu_custom_call.1} parent=23 // pred_fallthru
          _
      $region24: #{tpu_custom_call.1} parent=5 // pred_fallthru
        _
      %p285 = scmp.le.s32.totalorder 1, %s17
      %p286 = scmp.lt.s32.totalorder %s17, 5
      %p287 = pnand %p285, %p286
      %p288 = pneg %p287
      // Predicated region
      $region37: #{tpu_custom_call.1} parent=5 // pred_check
        _
      $region38: #{tpu_custom_call.1} parent=5 // pred_check_branch
        %290 = sbr.rel (%p287) target = $region40
      $region39: #{tpu_custom_call.1} parent=5 // pred_region
        %s291 = ssub.s32 %s17, 1
        %s292 = sand.u32 %s48, 1
        %s293 = scalar_lea.sflag [#allocation6], %s292
        %s294 = sand.u32 %s48, 1
        %s295 = smul.addr %s294, 512
        %s296 = scalar_lea.vmem [#allocation5], %s295
        // Predicated region
        $region41: #{tpu_custom_call.1} parent=39 // pred_check
          %p297 = pneg %p61
        $region42: #{tpu_custom_call.1} parent=39 // pred_check_branch
          %299 = sbr.rel (%p297) target = $region44
        $region43: #{tpu_custom_call.1} parent=39 // pred_region
          %300 = dma.done %s293, 8192
        $region44: #{tpu_custom_call.1} parent=39 // pred_fallthru
          _
        %s301 = sand.u32 %s114, 1
        %s302 = scalar_lea.sflag [#allocation8], %s301
        %s303 = sand.u32 %s114, 1
        %s304 = smul.addr %s303, 512
        %s305 = scalar_lea.vmem [#allocation7], %s304
        // Predicated region
        $region45: #{tpu_custom_call.1} parent=39 // pred_check
          %p306 = pneg %p127
        $region46: #{tpu_custom_call.1} parent=39 // pred_check_branch
          %308 = sbr.rel (%p306) target = $region48
        $region47: #{tpu_custom_call.1} parent=39 // pred_region
          %309 = dma.done %s302, 8192
        $region48: #{tpu_custom_call.1} parent=39 // pred_fallthru
          _
        %s310 = sand.u32 %s48, 1
        %s311 = scalar_lea.sflag [#allocation6], %s310
        %s312 = sand.u32 %s48, 1
        %s313 = smul.addr %s312, 512
        %s314 = scalar_lea.vmem [#allocation5], %s313
        %p315 = pneg %p61
        %p316 = pneg %p58
        %s317 = sadd.s32 %s26, %s27
        %p318 = scmp.lt.s32.totalorder %s317, 1
        %s319 = scalar_select %p318, %s317, 1
        %s320 = smul.u32 16, %s319
        %p321 = scmp.lt.s32.totalorder %s320, 31
        %s322 = scalar_select %p321, %s320, 31
        %s323 = smul.addr %s322, 8
        %s324 = scalar_lea.vmem %s1, %s323
        %p325 = pneg %p93
        %p326 = pneg %p90
        %s327 = sand.u32 %s114, 1
        %s328 = scalar_lea.sflag [#allocation8], %s327
        %s329 = sand.u32 %s114, 1
        %s330 = smul.addr %s329, 512
        %s331 = scalar_lea.vmem [#allocation7], %s330
        %p332 = pneg %p127
        %p333 = pneg %p124
        %p334 = pneg %p148
        %p335 = pneg %p145
        %p336 = pneg %p169
        %p337 = pneg %p166
        %p338 = pneg %p195
        %p339 = pneg %p192
        %p340 = scmp.lt.s32.totalorder %s26, 1
        %s341 = scalar_select %p340, %s26, 1
        %s342 = scalar_lea.vmem %s5, %s341
        %s343 = sadd.s32 %s26, %s27
        %p344 = scmp.lt.s32.totalorder %s343, 1
        %s345 = scalar_select %p344, %s343, 1
        %s346 = smul.u32 16, %s345
        %s347 = sadd.s32 %s26, %s27
        %p348 = scmp.lt.s32.totalorder %s347, 1
        %s349 = scalar_select %p348, %s347, 1
        %s350 = smul.u32 16, %s349
        %p351 = scmp.lt.s32.totalorder %s350, 31
        %s352 = scalar_select %p351, %s350, 31
        %s353 = smul.addr %s352, 8
        %s354 = scalar_lea.vmem %s1, %s353
        %s355 = sadd.s32 %s26, %s27
        %p356 = scmp.lt.s32.totalorder %s355, 1
        %s357 = scalar_select %p356, %s355, 1
        %s358 = smul.u32 16, %s357
        %s359 = smul.u32 %s26, 2
        %s360 = sadd.s32 %s359, %s27
        %p361 = scmp.lt.s32.totalorder %s360, 3
        %s362 = scalar_select %p361, %s360, 3
        %s363 = smul.u32 64, %s362
        %p364 = scmp.lt.s32.totalorder %s26, 1
        %s365 = scalar_select %p364, %s26, 1
        %s366 = scalar_lea.vmem %s5, %s365
        %p367 = scmp.eq.s32.totalorder %s27, 0
        // Predicated region
        $region49: #{tpu_custom_call.1} parent=39 // pred_check
          %p368 = pneg %p367
        $region50: #{tpu_custom_call.1} parent=39 // pred_check_branch
          %370 = sbr.rel (%p368) target = $region52
        $region51: #{tpu_custom_call.1} parent=39 // pred_region
          %vm371 = vcmask 7168
          %372 = vst.msk [vmem:[#allocation3] sm:$0xff] %vm371, 0.0
          %373 = vst.msk [vmem:[#allocation3 + $0x8] sm:$0xff] %vm371, 0.0
          %374 = vst.msk [vmem:[#allocation3 + $0x10] sm:$0xff] %vm371, 0.0
          %375 = vst.msk [vmem:[#allocation3 + $0x18] sm:$0xff] %vm371, 0.0
          %376 = vst.msk [vmem:[#allocation3 + $0x20] sm:$0xff] %vm371, 0.0
          %377 = vst.msk [vmem:[#allocation3 + $0x28] sm:$0xff] %vm371, 0.0
          %378 = vst.msk [vmem:[#allocation3 + $0x30] sm:$0xff] %vm371, 0.0
          %379 = vst.msk [vmem:[#allocation3 + $0x38] sm:$0xff] %vm371, 0.0
          %380 = vst.msk [vmem:[#allocation3 + $0x40] sm:$0xff] %vm371, 0.0
          %381 = vst.msk [vmem:[#allocation3 + $0x48] sm:$0xff] %vm371, 0.0
          %382 = vst.msk [vmem:[#allocation3 + $0x50] sm:$0xff] %vm371, 0.0
          %383 = vst.msk [vmem:[#allocation3 + $0x58] sm:$0xff] %vm371, 0.0
          %384 = vst.msk [vmem:[#allocation3 + $0x60] sm:$0xff] %vm371, 0.0
          %385 = vst.msk [vmem:[#allocation3 + $0x68] sm:$0xff] %vm371, 0.0
          %386 = vst.msk [vmem:[#allocation3 + $0x70] sm:$0xff] %vm371, 0.0
          %387 = vst.msk [vmem:[#allocation3 + $0x78] sm:$0xff] %vm371, 0.0
          %388 = vst.msk [vmem:[#allocation4] sm:$0xff] %vm371, 0.0
          %389 = vst.msk [vmem:[#allocation4 + $0x8] sm:$0xff] %vm371, 0.0
          %390 = vst.msk [vmem:[#allocation4 + $0x10] sm:$0xff] %vm371, 0.0
          %391 = vst.msk [vmem:[#allocation4 + $0x18] sm:$0xff] %vm371, 0.0
          %392 = vst.msk [vmem:[#allocation4 + $0x20] sm:$0xff] %vm371, 0.0
          %393 = vst.msk [vmem:[#allocation4 + $0x28] sm:$0xff] %vm371, 0.0
          %394 = vst.msk [vmem:[#allocation4 + $0x30] sm:$0xff] %vm371, 0.0
          %395 = vst.msk [vmem:[#allocation4 + $0x38] sm:$0xff] %vm371, 0.0
          %396 = vst.msk [vmem:[#allocation4 + $0x40] sm:$0xff] %vm371, 0.0
          %397 = vst.msk [vmem:[#allocation4 + $0x48] sm:$0xff] %vm371, 0.0
          %398 = vst.msk [vmem:[#allocation4 + $0x50] sm:$0xff] %vm371, 0.0
          %399 = vst.msk [vmem:[#allocation4 + $0x58] sm:$0xff] %vm371, 0.0
          %400 = vst.msk [vmem:[#allocation4 + $0x60] sm:$0xff] %vm371, 0.0
          %401 = vst.msk [vmem:[#allocation4 + $0x68] sm:$0xff] %vm371, 0.0
          %402 = vst.msk [vmem:[#allocation4 + $0x70] sm:$0xff] %vm371, 0.0
          %403 = vst.msk [vmem:[#allocation4 + $0x78] sm:$0xff] %vm371, 0.0
          %404 = vst.msk [vmem:[#allocation4 + $0x80] sm:$0xff] %vm371, 0.0
          %405 = vst.msk [vmem:[#allocation4 + $0x88] sm:$0xff] %vm371, 0.0
          %406 = vst.msk [vmem:[#allocation4 + $0x90] sm:$0xff] %vm371, 0.0
          %407 = vst.msk [vmem:[#allocation4 + $0x98] sm:$0xff] %vm371, 0.0
          %408 = vst.msk [vmem:[#allocation4 + $0xa0] sm:$0xff] %vm371, 0.0
          %409 = vst.msk [vmem:[#allocation4 + $0xa8] sm:$0xff] %vm371, 0.0
          %410 = vst.msk [vmem:[#allocation4 + $0xb0] sm:$0xff] %vm371, 0.0
          %411 = vst.msk [vmem:[#allocation4 + $0xb8] sm:$0xff] %vm371, 0.0
          %412 = vst.msk [vmem:[#allocation4 + $0xc0] sm:$0xff] %vm371, 0.0
          %413 = vst.msk [vmem:[#allocation4 + $0xc8] sm:$0xff] %vm371, 0.0
          %414 = vst.msk [vmem:[#allocation4 + $0xd0] sm:$0xff] %vm371, 0.0
          %415 = vst.msk [vmem:[#allocation4 + $0xd8] sm:$0xff] %vm371, 0.0
          %416 = vst.msk [vmem:[#allocation4 + $0xe0] sm:$0xff] %vm371, 0.0
          %417 = vst.msk [vmem:[#allocation4 + $0xe8] sm:$0xff] %vm371, 0.0
          %418 = vst.msk [vmem:[#allocation4 + $0xf0] sm:$0xff] %vm371, 0.0
          %419 = vst.msk [vmem:[#allocation4 + $0xf8] sm:$0xff] %vm371, 0.0
          %420 = vst.msk [vmem:[#allocation4 + $0x100] sm:$0xff] %vm371, 0.0
          %421 = vst.msk [vmem:[#allocation4 + $0x108] sm:$0xff] %vm371, 0.0
          %422 = vst.msk [vmem:[#allocation4 + $0x110] sm:$0xff] %vm371, 0.0
          %423 = vst.msk [vmem:[#allocation4 + $0x118] sm:$0xff] %vm371, 0.0
          %424 = vst.msk [vmem:[#allocation4 + $0x120] sm:$0xff] %vm371, 0.0
          %425 = vst.msk [vmem:[#allocation4 + $0x128] sm:$0xff] %vm371, 0.0
          %426 = vst.msk [vmem:[#allocation4 + $0x130] sm:$0xff] %vm371, 0.0
          %427 = vst.msk [vmem:[#allocation4 + $0x138] sm:$0xff] %vm371, 0.0
          %428 = vst.msk [vmem:[#allocation4 + $0x140] sm:$0xff] %vm371, 0.0
          %429 = vst.msk [vmem:[#allocation4 + $0x148] sm:$0xff] %vm371, 0.0
          %430 = vst.msk [vmem:[#allocation4 + $0x150] sm:$0xff] %vm371, 0.0
          %431 = vst.msk [vmem:[#allocation4 + $0x158] sm:$0xff] %vm371, 0.0
          %432 = vst.msk [vmem:[#allocation4 + $0x160] sm:$0xff] %vm371, 0.0
          %433 = vst.msk [vmem:[#allocation4 + $0x168] sm:$0xff] %vm371, 0.0
          %434 = vst.msk [vmem:[#allocation4 + $0x170] sm:$0xff] %vm371, 0.0
          %435 = vst.msk [vmem:[#allocation4 + $0x178] sm:$0xff] %vm371, 0.0
          %436 = vst.msk [vmem:[#allocation4 + $0x180] sm:$0xff] %vm371, 0.0
          %437 = vst.msk [vmem:[#allocation4 + $0x188] sm:$0xff] %vm371, 0.0
          %438 = vst.msk [vmem:[#allocation4 + $0x190] sm:$0xff] %vm371, 0.0
          %439 = vst.msk [vmem:[#allocation4 + $0x198] sm:$0xff] %vm371, 0.0
          %440 = vst.msk [vmem:[#allocation4 + $0x1a0] sm:$0xff] %vm371, 0.0
          %441 = vst.msk [vmem:[#allocation4 + $0x1a8] sm:$0xff] %vm371, 0.0
          %442 = vst.msk [vmem:[#allocation4 + $0x1b0] sm:$0xff] %vm371, 0.0
          %443 = vst.msk [vmem:[#allocation4 + $0x1b8] sm:$0xff] %vm371, 0.0
          %444 = vst.msk [vmem:[#allocation4 + $0x1c0] sm:$0xff] %vm371, 0.0
          %445 = vst.msk [vmem:[#allocation4 + $0x1c8] sm:$0xff] %vm371, 0.0
          %446 = vst.msk [vmem:[#allocation4 + $0x1d0] sm:$0xff] %vm371, 0.0
          %447 = vst.msk [vmem:[#allocation4 + $0x1d8] sm:$0xff] %vm371, 0.0
          %448 = vst.msk [vmem:[#allocation4 + $0x1e0] sm:$0xff] %vm371, 0.0
          %449 = vst.msk [vmem:[#allocation4 + $0x1e8] sm:$0xff] %vm371, 0.0
          %450 = vst.msk [vmem:[#allocation4 + $0x1f0] sm:$0xff] %vm371, 0.0
          %451 = vst.msk [vmem:[#allocation4 + $0x1f8] sm:$0xff] %vm371, 0.0
          %v452 = vld [vmem:[%s4] sm:$0xff]
          %v453 = vld [vmem:[%s4 + $0x8] sm:$0xff]
          %v454 = vld [vmem:[%s4 + $0x10] sm:$0xff]
          %v455 = vmul.f32 %v452, %v452
          %v456 = vmul.f32 %v453, %v453
          %v457 = vmul.f32 %v454, %v454
          %458 = vadd.xlane.f32.xlu0 %v455
          %v459 = vpop.xlane.xlu0 %458
          %460 = vadd.xlane.f32.xlu0 %v456
          %v461 = vpop.xlane.xlu0 %460
          %462 = vadd.xlane.f32.xlu0 %v457
          %v463 = vpop.xlane.xlu0 %462
          %v464 = vmax.f32 %v459, 1e-24
          %v465 = vmax.f32 %v461, 1e-24
          %v466 = vmax.f32 %v463, 1e-24
          %v467 = vrsqrt.pop %v464
          %v468 = vrsqrt.pop %v465
          %v469 = vrsqrt.pop %v466
          %v470 = vmul.f32 %v452, %v467
          %v471 = vmul.f32 %v453, %v468
          %v472 = vmul.f32 %v454, %v469
          %473 = vst [vmem:[#allocation2] sm:$0xff] %v470
          %474 = vst [vmem:[#allocation2 + $0x8] sm:$0xff] %v471
          %475 = vst [vmem:[#allocation2 + $0x10] sm:$0xff] %v472
        $region52: #{tpu_custom_call.1} parent=39 // pred_fallthru
          _
        %s476 = sadd.s32 %s26, %s27
        %p477 = scmp.lt.s32.totalorder %s27, 1
        %p478 = scmp.lt.s32.totalorder %s476, 2
        %p479 = pnand %p477, %p478
        %p480 = pneg %p479
        // Predicated region
        $region53: #{tpu_custom_call.1} parent=39 // pred_check
          _
        $region54: #{tpu_custom_call.1} parent=39 // pred_check_branch
          %482 = sbr.rel (%p479) target = $region56
        $region55: #{tpu_custom_call.1} parent=39 // pred_region
          %v483 = vld [vmem:[%s296] sm:$0xff]
          %v484 = vld [vmem:[%s296 + $0x8] sm:$0xff]
          %v485 = vld [vmem:[%s296 + $0x10] sm:$0xff]
          %v486 = vld [vmem:[%s296 + $0x18] sm:$0xff]
          %v487 = vld [vmem:[%s296 + $0x20] sm:$0xff]
          %v488 = vld [vmem:[%s296 + $0x28] sm:$0xff]
          %v489 = vld [vmem:[%s296 + $0x30] sm:$0xff]
          %v490 = vld [vmem:[%s296 + $0x38] sm:$0xff]
          %v491 = vld [vmem:[%s296 + $0x40] sm:$0xff]
          %v492 = vld [vmem:[%s296 + $0x48] sm:$0xff]
          %v493 = vld [vmem:[%s296 + $0x50] sm:$0xff]
          %v494 = vld [vmem:[%s296 + $0x58] sm:$0xff]
          %v495 = vld [vmem:[%s296 + $0x60] sm:$0xff]
          %v496 = vld [vmem:[%s296 + $0x68] sm:$0xff]
          %v497 = vld [vmem:[%s296 + $0x70] sm:$0xff]
          %v498 = vld [vmem:[%s296 + $0x78] sm:$0xff]
          %v499 = vld [vmem:[%s296 + $0x80] sm:$0xff]
          %v500 = vld [vmem:[%s296 + $0x88] sm:$0xff]
          %v501 = vld [vmem:[%s296 + $0x90] sm:$0xff]
          %v502 = vld [vmem:[%s296 + $0x98] sm:$0xff]
          %v503 = vld [vmem:[%s296 + $0xa0] sm:$0xff]
          %v504 = vld [vmem:[%s296 + $0xa8] sm:$0xff]
          %v505 = vld [vmem:[%s296 + $0xb0] sm:$0xff]
          %v506 = vld [vmem:[%s296 + $0xb8] sm:$0xff]
          %v507 = vld [vmem:[%s296 + $0xc0] sm:$0xff]
          %v508 = vld [vmem:[%s296 + $0xc8] sm:$0xff]
          %v509 = vld [vmem:[%s296 + $0xd0] sm:$0xff]
          %v510 = vld [vmem:[%s296 + $0xd8] sm:$0xff]
          %v511 = vld [vmem:[%s296 + $0xe0] sm:$0xff]
          %v512 = vld [vmem:[%s296 + $0xe8] sm:$0xff]
          %v513 = vld [vmem:[%s296 + $0xf0] sm:$0xff]
          %v514 = vld [vmem:[%s296 + $0xf8] sm:$0xff]
          %v515 = vld [vmem:[%s296 + $0x100] sm:$0xff]
          %v516 = vld [vmem:[%s296 + $0x108] sm:$0xff]
          %v517 = vld [vmem:[%s296 + $0x110] sm:$0xff]
          %v518 = vld [vmem:[%s296 + $0x118] sm:$0xff]
          %v519 = vld [vmem:[%s296 + $0x120] sm:$0xff]
          %v520 = vld [vmem:[%s296 + $0x128] sm:$0xff]
          %v521 = vld [vmem:[%s296 + $0x130] sm:$0xff]
          %v522 = vld [vmem:[%s296 + $0x138] sm:$0xff]
          %v523 = vld [vmem:[%s296 + $0x140] sm:$0xff]
          %v524 = vld [vmem:[%s296 + $0x148] sm:$0xff]
          %v525 = vld [vmem:[%s296 + $0x150] sm:$0xff]
          %v526 = vld [vmem:[%s296 + $0x158] sm:$0xff]
          %v527 = vld [vmem:[%s296 + $0x160] sm:$0xff]
          %v528 = vld [vmem:[%s296 + $0x168] sm:$0xff]
          %v529 = vld [vmem:[%s296 + $0x170] sm:$0xff]
          %v530 = vld [vmem:[%s296 + $0x178] sm:$0xff]
          %v531 = vld [vmem:[%s296 + $0x180] sm:$0xff]
          %v532 = vld [vmem:[%s296 + $0x188] sm:$0xff]
          %v533 = vld [vmem:[%s296 + $0x190] sm:$0xff]
          %v534 = vld [vmem:[%s296 + $0x198] sm:$0xff]
          %v535 = vld [vmem:[%s296 + $0x1a0] sm:$0xff]
          %v536 = vld [vmem:[%s296 + $0x1a8] sm:$0xff]
          %v537 = vld [vmem:[%s296 + $0x1b0] sm:$0xff]
          %v538 = vld [vmem:[%s296 + $0x1b8] sm:$0xff]
          %v539 = vld [vmem:[%s296 + $0x1c0] sm:$0xff]
          %v540 = vld [vmem:[%s296 + $0x1c8] sm:$0xff]
          %v541 = vld [vmem:[%s296 + $0x1d0] sm:$0xff]
          %v542 = vld [vmem:[%s296 + $0x1d8] sm:$0xff]
          %v543 = vld [vmem:[%s296 + $0x1e0] sm:$0xff]
          %v544 = vld [vmem:[%s296 + $0x1e8] sm:$0xff]
          %v545 = vld [vmem:[%s296 + $0x1f0] sm:$0xff]
          %v546 = vld [vmem:[%s296 + $0x1f8] sm:$0xff]
          %v547 = vld [vmem:[%s354] sm:$0xff]
          %v548 = vld [vmem:[%s354 + $0x8] sm:$0xff]
          %v549 = vld [vmem:[%s354 + $0x10] sm:$0xff]
          %v550 = vld [vmem:[%s354 + $0x18] sm:$0xff]
          %v551 = vld [vmem:[%s354 + $0x20] sm:$0xff]
          %v552 = vld [vmem:[%s354 + $0x28] sm:$0xff]
          %v553 = vld [vmem:[%s354 + $0x30] sm:$0xff]
          %v554 = vld [vmem:[%s354 + $0x38] sm:$0xff]
          %v555 = vld [vmem:[%s354 + $0x40] sm:$0xff]
          %v556 = vld [vmem:[%s354 + $0x48] sm:$0xff]
          %v557 = vld [vmem:[%s354 + $0x50] sm:$0xff]
          %v558 = vld [vmem:[%s354 + $0x58] sm:$0xff]
          %v559 = vld [vmem:[%s354 + $0x60] sm:$0xff]
          %v560 = vld [vmem:[%s354 + $0x68] sm:$0xff]
          %v561 = vld [vmem:[%s354 + $0x70] sm:$0xff]
          %v562 = vld [vmem:[%s354 + $0x78] sm:$0xff]
          %v563 = vld [vmem:[%s3] sm:$0xff]
          %v564 = vld [vmem:[%s3 + $0x8] sm:$0xff]
          %v565 = vld [vmem:[%s3 + $0x10] sm:$0xff]
          %v566 = vld [vmem:[#allocation2] sm:$0xff]
          %v567 = vld [vmem:[#allocation2 + $0x8] sm:$0xff]
          %v568 = vld [vmem:[#allocation2 + $0x10] sm:$0xff]
          %v569 = vlaneseq
          %v570 = vand.u32 %v569, 127
          %571 = vset.pattern.permute.xlu0 0
          %572 = vperm.xlu0 %571, %v547
          %v573 = vpop.permute.xlu0 %572
          %574 = vset.pattern.permute.xlu0 0
          %575 = vperm.xlu0 %574, %v548
          %v576 = vpop.permute.xlu0 %575
          %577 = vset.pattern.permute.xlu0 0
          %578 = vperm.xlu0 %577, %v549
          %v579 = vpop.permute.xlu0 %578
          %580 = vset.pattern.permute.xlu0 0
          %581 = vperm.xlu0 %580, %v550
          %v582 = vpop.permute.xlu0 %581
          %583 = vset.pattern.permute.xlu0 0
          %584 = vperm.xlu0 %583, %v551
          %v585 = vpop.permute.xlu0 %584
          %586 = vset.pattern.permute.xlu0 0
          %587 = vperm.xlu0 %586, %v552
          %v588 = vpop.permute.xlu0 %587
          %589 = vset.pattern.permute.xlu0 0
          %590 = vperm.xlu0 %589, %v553
          %v591 = vpop.permute.xlu0 %590
          %592 = vset.pattern.permute.xlu0 0
          %593 = vperm.xlu0 %592, %v554
          %v594 = vpop.permute.xlu0 %593
          %595 = vset.pattern.permute.xlu0 0
          %596 = vperm.xlu0 %595, %v555
          %v597 = vpop.permute.xlu0 %596
          %598 = vset.pattern.permute.xlu0 0
          %599 = vperm.xlu0 %598, %v556
          %v600 = vpop.permute.xlu0 %599
          %601 = vset.pattern.permute.xlu0 0
          %602 = vperm.xlu0 %601, %v557
          %v603 = vpop.permute.xlu0 %602
          %604 = vset.pattern.permute.xlu0 0
          %605 = vperm.xlu0 %604, %v558
          %v606 = vpop.permute.xlu0 %605
          %607 = vset.pattern.permute.xlu0 0
          %608 = vperm.xlu0 %607, %v559
          %v609 = vpop.permute.xlu0 %608
          %610 = vset.pattern.permute.xlu0 0
          %611 = vperm.xlu0 %610, %v560
          %v612 = vpop.permute.xlu0 %611
          %613 = vset.pattern.permute.xlu0 0
          %614 = vperm.xlu0 %613, %v561
          %v615 = vpop.permute.xlu0 %614
          %616 = vset.pattern.permute.xlu0 0
          %617 = vperm.xlu0 %616, %v562
          %v618 = vpop.permute.xlu0 %617
          %vm619 = vcmp.eq.s32.totalorder %v570, %v573
          %vm620 = vcmp.eq.s32.totalorder %v570, %v576
          %vm621 = vcmp.eq.s32.totalorder %v570, %v579
          %vm622 = vcmp.eq.s32.totalorder %v570, %v582
          %vm623 = vcmp.eq.s32.totalorder %v570, %v585
          %vm624 = vcmp.eq.s32.totalorder %v570, %v588
          %vm625 = vcmp.eq.s32.totalorder %v570, %v591
          %vm626 = vcmp.eq.s32.totalorder %v570, %v594
          %vm627 = vcmp.eq.s32.totalorder %v570, %v597
          %vm628 = vcmp.eq.s32.totalorder %v570, %v600
          %vm629 = vcmp.eq.s32.totalorder %v570, %v603
          %vm630 = vcmp.eq.s32.totalorder %v570, %v606
          %vm631 = vcmp.eq.s32.totalorder %v570, %v609
          %vm632 = vcmp.eq.s32.totalorder %v570, %v612
          %vm633 = vcmp.eq.s32.totalorder %v570, %v615
          %vm634 = vcmp.eq.s32.totalorder %v570, %v618
          %v635 = vsel %vm619, 1, 0
          %v636 = vsel %vm620, 1, 0
          %v637 = vsel %vm621, 1, 0
          %v638 = vsel %vm622, 1, 0
          %v639 = vsel %vm623, 1, 0
          %v640 = vsel %vm624, 1, 0
          %v641 = vsel %vm625, 1, 0
          %v642 = vsel %vm626, 1, 0
          %v643 = vsel %vm627, 1, 0
          %v644 = vsel %vm628, 1, 0
          %v645 = vsel %vm629, 1, 0
          %v646 = vsel %vm630, 1, 0
          %v647 = vsel %vm631, 1, 0
          %v648 = vsel %vm632, 1, 0
          %v649 = vsel %vm633, 1, 0
          %v650 = vsel %vm634, 1, 0
          %v651 = vcvt.s32.f32 %v635
          %v652 = vcvt.s32.f32 %v636
          %v653 = vcvt.s32.f32 %v637
          %v654 = vcvt.s32.f32 %v638
          %v655 = vcvt.s32.f32 %v639
          %v656 = vcvt.s32.f32 %v640
          %v657 = vcvt.s32.f32 %v641
          %v658 = vcvt.s32.f32 %v642
          %v659 = vcvt.s32.f32 %v643
          %v660 = vcvt.s32.f32 %v644
          %v661 = vcvt.s32.f32 %v645
          %v662 = vcvt.s32.f32 %v646
          %v663 = vcvt.s32.f32 %v647
          %v664 = vcvt.s32.f32 %v648
          %v665 = vcvt.s32.f32 %v649
          %v666 = vcvt.s32.f32 %v650
          %vm667 = vcmask 195584
          %v669 = vsel %vm667, %v651, 0
          %v672 = vsel %vm667, %v652, 0
          %v675 = vsel %vm667, %v653, 0
          %v678 = vsel %vm667, %v654, 0
          %v681 = vsel %vm667, %v655, 0
          %v684 = vsel %vm667, %v656, 0
          %v687 = vsel %vm667, %v657, 0
          %v690 = vsel %vm667, %v658, 0
          %v693 = vsel %vm667, %v659, 0
          %v696 = vsel %vm667, %v660, 0
          %v699 = vsel %vm667, %v661, 0
          %v702 = vsel %vm667, %v662, 0
          %v705 = vsel %vm667, %v663, 0
          %v708 = vsel %vm667, %v664, 0
          %v711 = vsel %vm667, %v665, 0
          %v714 = vsel %vm667, %v666, 0
          %716 = vmatprep.subr.mxu0 0.0
          %717 = vmatpush1.msra.mxu0 %v563
          %718 = vmatprep.subr.mxu0 0.0
          %719 = vmatpush1.msra.mxu0 %v564
          %720 = vmatprep.subr.mxu0 0.0
          %721 = vmatpush1.msra.mxu0 %v565
          %722 = vmatprep.subr.mxu0 0.0
          %723 = vmatpush1.msra.mxu0 0.0
          %724 = vmatprep.subr.mxu0 0.0
          %725 = vmatpush1.msra.mxu0 0.0
          %726 = vmatprep.subr.mxu0 0.0
          %727 = vmatpush1.msra.mxu0 0.0
          %728 = vmatprep.subr.mxu0 0.0
          %729 = vmatpush1.msra.mxu0 0.0
          %730 = vmatprep.subr.mxu0 0.0
          %731 = vmatpush1.msra.mxu0 0.0
          %732 = vmatprep.subr.mxu0 0.0
          %733 = vmatpush1.msra.mxu0 0.0
          %734 = vmatprep.subr.mxu0 0.0
          %735 = vmatpush1.msra.mxu0 0.0
          %736 = vmatprep.subr.mxu0 0.0
          %737 = vmatpush1.msra.mxu0 0.0
          %738 = vmatprep.subr.mxu0 0.0
          %739 = vmatpush1.msra.mxu0 0.0
          %740 = vmatprep.subr.mxu0 0.0
          %741 = vmatpush1.msra.mxu0 0.0
          %742 = vmatprep.subr.mxu0 0.0
          %743 = vmatpush1.msra.mxu0 0.0
          %744 = vmatprep.subr.mxu0 0.0
          %745 = vmatpush1.msra.mxu0 0.0
          %746 = vmatprep.subr.mxu0 0.0
          %747 = vmatpush1.msra.mxu0 0.0
          %748 = vmatprep.subr.mxu0 0.0
          %749 = vmatpush1.msra.mxu0 0.0
          %750 = vmatprep.subr.mxu0 0.0
          %751 = vmatpush1.msra.mxu0 0.0
          %752 = vmatprep.subr.mxu0 0.0
          %753 = vmatpush1.msra.mxu0 0.0
          %754 = vmatprep.subr.mxu0 0.0
          %755 = vmatpush1.msra.mxu0 0.0
          %756 = vmatprep.subr.mxu0 0.0
          %757 = vmatpush1.msra.mxu0 0.0
          %758 = vmatprep.subr.mxu0 0.0
          %759 = vmatpush1.msra.mxu0 0.0
          %760 = vmatprep.subr.mxu0 0.0
          %761 = vmatpush1.msra.mxu0 0.0
          %762 = vmatprep.subr.mxu0 0.0
          %763 = vmatpush1.msra.mxu0 0.0
          %764 = vmatprep.subr.mxu0 0.0
          %765 = vmatpush1.msra.mxu0 0.0
          %766 = vmatprep.subr.mxu0 0.0
          %767 = vmatpush1.msra.mxu0 0.0
          %768 = vmatprep.subr.mxu0 0.0
          %769 = vmatpush1.msra.mxu0 0.0
          %770 = vmatprep.subr.mxu0 0.0
          %771 = vmatpush1.msra.mxu0 0.0
          %772 = vmatprep.subr.mxu0 0.0
          %773 = vmatpush1.msra.mxu0 0.0
          %774 = vmatprep.subr.mxu0 0.0
          %775 = vmatpush1.msra.mxu0 0.0
          %776 = vmatprep.subr.mxu0 0.0
          %777 = vmatpush1.msra.mxu0 0.0
          %778 = vmatprep.subr.mxu0 0.0
          %779 = vmatpush1.msra.mxu0 0.0
          %780 = vmatprep.mubr.f32.mxu0 0.0
          %781 = vmatmul.mubr.f32.gmra.mrb[0].mxu0 %v669
          %v782 = vpop.f32.mrb[0].mxu0
          %v783 = vadd.f32 0.0, %v782
          %v784 = vpop.f32.mrb[0].mxu0
          %785 = vmatprep.mubr.f32.mxu0 0.0
          %786 = vmatmul.mubr.f32.gmra.mrb[0].mxu0 %v672
          %v787 = vpop.f32.mrb[0].mxu0
          %v788 = vadd.f32 0.0, %v787
          %v789 = vpop.f32.mrb[0].mxu0
          %790 = vmatprep.mubr.f32.mxu0 0.0
          %791 = vmatmul.mubr.f32.gmra.mrb[0].mxu0 %v675
          %v792 = vpop.f32.mrb[0].mxu0
          %v793 = vadd.f32 0.0, %v792
          %v794 = vpop.f32.mrb[0].mxu0
          %795 = vmatprep.mubr.f32.mxu0 0.0
          %796 = vmatmul.mubr.f32.gmra.mrb[0].mxu0 %v678
          %v797 = vpop.f32.mrb[0].mxu0
          %v798 = vadd.f32 0.0, %v797
          %v799 = vpop.f32.mrb[0].mxu0
          %800 = vmatprep.mubr.f32.mxu0 0.0
          %801 = vmatmul.mubr.f32.gmra.mrb[0].mxu0 %v681
          %v802 = vpop.f32.mrb[0].mxu0
          %v803 = vadd.f32 0.0, %v802
          %v804 = vpop.f32.mrb[0].mxu0
          %805 = vmatprep.mubr.f32.mxu0 0.0
          %806 = vmatmul.mubr.f32.gmra.mrb[0].mxu0 %v684
          %v807 = vpop.f32.mrb[0].mxu0
          %v808 = vadd.f32 0.0, %v807
          %v809 = vpop.f32.mrb[0].mxu0
          %810 = vmatprep.mubr.f32.mxu0 0.0
          %811 = vmatmul.mubr.f32.gmra.mrb[0].mxu0 %v687
          %v812 = vpop.f32.mrb[0].mxu0
          %v813 = vadd.f32 0.0, %v812
          %v814 = vpop.f32.mrb[0].mxu0
          %815 = vmatprep.mubr.f32.mxu0 0.0
          %816 = vmatmul.mubr.f32.gmra.mrb[0].mxu0 %v690
          %v817 = vpop.f32.mrb[0].mxu0
          %v818 = vadd.f32 0.0, %v817
          %v819 = vpop.f32.mrb[0].mxu0
          %820 = vmatprep.mubr.f32.mxu0 0.0
          %821 = vmatmul.mubr.f32.gmra.mrb[0].mxu0 %v693
          %v822 = vpop.f32.mrb[0].mxu0
          %v823 = vadd.f32 0.0, %v822
          %v824 = vpop.f32.mrb[0].mxu0
          %825 = vmatprep.mubr.f32.mxu0 0.0
          %826 = vmatmul.mubr.f32.gmra.mrb[0].mxu0 %v696
          %v827 = vpop.f32.mrb[0].mxu0
          %v828 = vadd.f32 0.0, %v827
          %v829 = vpop.f32.mrb[0].mxu0
          %830 = vmatprep.mubr.f32.mxu0 0.0
          %831 = vmatmul.mubr.f32.gmra.mrb[0].mxu0 %v699
          %v832 = vpop.f32.mrb[0].mxu0
          %v833 = vadd.f32 0.0, %v832
          %v834 = vpop.f32.mrb[0].mxu0
          %835 = vmatprep.mubr.f32.mxu0 0.0
          %836 = vmatmul.mubr.f32.gmra.mrb[0].mxu0 %v702
          %v837 = vpop.f32.mrb[0].mxu0
          %v838 = vadd.f32 0.0, %v837
          %v839 = vpop.f32.mrb[0].mxu0
          %840 = vmatprep.mubr.f32.mxu0 0.0
          %841 = vmatmul.mubr.f32.gmra.mrb[0].mxu0 %v705
          %v842 = vpop.f32.mrb[0].mxu0
          %v843 = vadd.f32 0.0, %v842
          %v844 = vpop.f32.mrb[0].mxu0
          %845 = vmatprep.mubr.f32.mxu0 0.0
          %846 = vmatmul.mubr.f32.gmra.mrb[0].mxu0 %v708
          %v847 = vpop.f32.mrb[0].mxu0
          %v848 = vadd.f32 0.0, %v847
          %v849 = vpop.f32.mrb[0].mxu0
          %850 = vmatprep.mubr.f32.mxu0 0.0
          %851 = vmatmul.mubr.f32.gmra.mrb[0].mxu0 %v711
          %v852 = vpop.f32.mrb[0].mxu0
          %v853 = vadd.f32 0.0, %v852
          %v854 = vpop.f32.mrb[0].mxu0
          %855 = vmatprep.mubr.f32.mxu0 0.0
          %856 = vmatmul.mubr.f32.gmra.mrb[0].mxu0 %v714
          %v857 = vpop.f32.mrb[0].mxu0
          %v858 = vadd.f32 0.0, %v857
          %v859 = vpop.f32.mrb[0].mxu0
          %860 = vdwg.mxu0
          %861 = vmatprep.subr.mxu0 0.0
          %862 = vmatpush1.msra.mxu0 %v566
          %863 = vmatprep.subr.mxu0 0.0
          %864 = vmatpush1.msra.mxu0 %v567
          %865 = vmatprep.subr.mxu0 0.0
          %866 = vmatpush1.msra.mxu0 %v568
          %867 = vmatprep.subr.mxu0 0.0
          %868 = vmatpush1.msra.mxu0 0.0
          %869 = vmatprep.subr.mxu0 0.0
          %870 = vmatpush1.msra.mxu0 0.0
          %871 = vmatprep.subr.mxu0 0.0
          %872 = vmatpush1.msra.mxu0 0.0
          %873 = vmatprep.subr.mxu0 0.0
          %874 = vmatpush1.msra.mxu0 0.0
          %875 = vmatprep.subr.mxu0 0.0
          %876 = vmatpush1.msra.mxu0 0.0
          %877 = vmatprep.subr.mxu0 0.0
          %878 = vmatpush1.msra.mxu0 0.0
          %879 = vmatprep.subr.mxu0 0.0
          %880 = vmatpush1.msra.mxu0 0.0
          %881 = vmatprep.subr.mxu0 0.0
          %882 = vmatpush1.msra.mxu0 0.0
          %883 = vmatprep.subr.mxu0 0.0
          %884 = vmatpush1.msra.mxu0 0.0
          %885 = vmatprep.subr.mxu0 0.0
          %886 = vmatpush1.msra.mxu0 0.0
          %887 = vmatprep.subr.mxu0 0.0
          %888 = vmatpush1.msra.mxu0 0.0
          %889 = vmatprep.subr.mxu0 0.0
          %890 = vmatpush1.msra.mxu0 0.0
          %891 = vmatprep.subr.mxu0 0.0
          %892 = vmatpush1.msra.mxu0 0.0
          %893 = vmatprep.subr.mxu0 0.0
          %894 = vmatpush1.msra.mxu0 0.0
          %895 = vmatprep.subr.mxu0 0.0
          %896 = vmatpush1.msra.mxu0 0.0
          %897 = vmatprep.subr.mxu0 0.0
          %898 = vmatpush1.msra.mxu0 0.0
          %899 = vmatprep.subr.mxu0 0.0
          %900 = vmatpush1.msra.mxu0 0.0
          %901 = vmatprep.subr.mxu0 0.0
          %902 = vmatpush1.msra.mxu0 0.0
          %903 = vmatprep.subr.mxu0 0.0
          %904 = vmatpush1.msra.mxu0 0.0
          %905 = vmatprep.subr.mxu0 0.0
          %906 = vmatpush1.msra.mxu0 0.0
          %907 = vmatprep.subr.mxu0 0.0
          %908 = vmatpush1.msra.mxu0 0.0
          %909 = vmatprep.subr.mxu0 0.0
          %910 = vmatpush1.msra.mxu0 0.0
          %911 = vmatprep.subr.mxu0 0.0
          %912 = vmatpush1.msra.mxu0 0.0
          %913 = vmatprep.subr.mxu0 0.0
          %914 = vmatpush1.msra.mxu0 0.0
          %915 = vmatprep.subr.mxu0 0.0
          %916 = vmatpush1.msra.mxu0 0.0
          %917 = vmatprep.subr.mxu0 0.0
          %918 = vmatpush1.msra.mxu0 0.0
          %919 = vmatprep.subr.mxu0 0.0
          %920 = vmatpush1.msra.mxu0 0.0
          %921 = vmatprep.subr.mxu0 0.0
          %922 = vmatpush1.msra.mxu0 0.0
          %923 = vmatprep.subr.mxu0 0.0
          %924 = vmatpush1.msra.mxu0 0.0
          %925 = vmatprep.mubr.f32.mxu0 0.0
          %926 = vmatmul.mubr.f32.gmra.mrb[0].mxu0 %v669
          %v927 = vpop.f32.mrb[0].mxu0
          %v928 = vadd.f32 0.0, %v927
          %v929 = vpop.f32.mrb[0].mxu0
          %930 = vmatprep.mubr.f32.mxu0 0.0
          %931 = vmatmul.mubr.f32.gmra.mrb[0].mxu0 %v672
          %v932 = vpop.f32.mrb[0].mxu0
          %v933 = vadd.f32 0.0, %v932
          %v934 = vpop.f32.mrb[0].mxu0
          %935 = vmatprep.mubr.f32.mxu0 0.0
          %936 = vmatmul.mubr.f32.gmra.mrb[0].mxu0 %v675
          %v937 = vpop.f32.mrb[0].mxu0
          %v938 = vadd.f32 0.0, %v937
          %v939 = vpop.f32.mrb[0].mxu0
          %940 = vmatprep.mubr.f32.mxu0 0.0
          %941 = vmatmul.mubr.f32.gmra.mrb[0].mxu0 %v678
          %v942 = vpop.f32.mrb[0].mxu0
          %v943 = vadd.f32 0.0, %v942
          %v944 = vpop.f32.mrb[0].mxu0
          %945 = vmatprep.mubr.f32.mxu0 0.0
          %946 = vmatmul.mubr.f32.gmra.mrb[0].mxu0 %v681
          %v947 = vpop.f32.mrb[0].mxu0
          %v948 = vadd.f32 0.0, %v947
          %v949 = vpop.f32.mrb[0].mxu0
          %950 = vmatprep.mubr.f32.mxu0 0.0
          %951 = vmatmul.mubr.f32.gmra.mrb[0].mxu0 %v684
          %v952 = vpop.f32.mrb[0].mxu0
          %v953 = vadd.f32 0.0, %v952
          %v954 = vpop.f32.mrb[0].mxu0
          %955 = vmatprep.mubr.f32.mxu0 0.0
          %956 = vmatmul.mubr.f32.gmra.mrb[0].mxu0 %v687
          %v957 = vpop.f32.mrb[0].mxu0
          %v958 = vadd.f32 0.0, %v957
          %v959 = vpop.f32.mrb[0].mxu0
          %960 = vmatprep.mubr.f32.mxu0 0.0
          %961 = vmatmul.mubr.f32.gmra.mrb[0].mxu0 %v690
          %v962 = vpop.f32.mrb[0].mxu0
          %v963 = vadd.f32 0.0, %v962
          %v964 = vpop.f32.mrb[0].mxu0
          %965 = vmatprep.mubr.f32.mxu0 0.0
          %966 = vmatmul.mubr.f32.gmra.mrb[0].mxu0 %v693
          %v967 = vpop.f32.mrb[0].mxu0
          %v968 = vadd.f32 0.0, %v967
          %v969 = vpop.f32.mrb[0].mxu0
          %970 = vmatprep.mubr.f32.mxu0 0.0
          %971 = vmatmul.mubr.f32.gmra.mrb[0].mxu0 %v696
          %v972 = vpop.f32.mrb[0].mxu0
          %v973 = vadd.f32 0.0, %v972
          %v974 = vpop.f32.mrb[0].mxu0
          %975 = vmatprep.mubr.f32.mxu0 0.0
          %976 = vmatmul.mubr.f32.gmra.mrb[0].mxu0 %v699
          %v977 = vpop.f32.mrb[0].mxu0
          %v978 = vadd.f32 0.0, %v977
          %v979 = vpop.f32.mrb[0].mxu0
          %980 = vmatprep.mubr.f32.mxu0 0.0
          %981 = vmatmul.mubr.f32.gmra.mrb[0].mxu0 %v702
          %v982 = vpop.f32.mrb[0].mxu0
          %v983 = vadd.f32 0.0, %v982
          %v984 = vpop.f32.mrb[0].mxu0
          %985 = vmatprep.mubr.f32.mxu0 0.0
          %986 = vmatmul.mubr.f32.gmra.mrb[0].mxu0 %v705
          %v987 = vpop.f32.mrb[0].mxu0
          %v988 = vadd.f32 0.0, %v987
          %v989 = vpop.f32.mrb[0].mxu0
          %990 = vmatprep.mubr.f32.mxu0 0.0
          %991 = vmatmul.mubr.f32.gmra.mrb[0].mxu0 %v708
          %v992 = vpop.f32.mrb[0].mxu0
          %v993 = vadd.f32 0.0, %v992
          %v994 = vpop.f32.mrb[0].mxu0
          %995 = vmatprep.mubr.f32.mxu0 0.0
          %996 = vmatmul.mubr.f32.gmra.mrb[0].mxu0 %v711
          %v997 = vpop.f32.mrb[0].mxu0
          %v998 = vadd.f32 0.0, %v997
          %v999 = vpop.f32.mrb[0].mxu0
          %1000 = vmatprep.mubr.f32.mxu0 0.0
          %1001 = vmatmul.mubr.f32.gmra.mrb[0].mxu0 %v714
          %v1002 = vpop.f32.mrb[0].mxu0
          %v1003 = vadd.f32 0.0, %v1002
          %v1004 = vpop.f32.mrb[0].mxu0
          %1005 = vdwg.mxu0
          %1006 = vset.pattern.permute.xlu0 1
          %1007 = vperm.xlu0 %1006, %v547
          %v1008 = vpop.permute.xlu0 %1007
          %1009 = vset.pattern.permute.xlu0 1
          %1010 = vperm.xlu0 %1009, %v548
          %v1011 = vpop.permute.xlu0 %1010
          %1012 = vset.pattern.permute.xlu0 1
          %1013 = vperm.xlu0 %1012, %v549
          %v1014 = vpop.permute.xlu0 %1013
          %1015 = vset.pattern.permute.xlu0 1
          %1016 = vperm.xlu0 %1015, %v550
          %v1017 = vpop.permute.xlu0 %1016
          %1018 = vset.pattern.permute.xlu0 1
          %1019 = vperm.xlu0 %1018, %v551
          %v1020 = vpop.permute.xlu0 %1019
          %1021 = vset.pattern.permute.xlu0 1
          %1022 = vperm.xlu0 %1021, %v552
          %v1023 = vpop.permute.xlu0 %1022
          %1024 = vset.pattern.permute.xlu0 1
          %1025 = vperm.xlu0 %1024, %v553
          %v1026 = vpop.permute.xlu0 %1025
          %1027 = vset.pattern.permute.xlu0 1
          %1028 = vperm.xlu0 %1027, %v554
          %v1029 = vpop.permute.xlu0 %1028
          %1030 = vset.pattern.permute.xlu0 1
          %1031 = vperm.xlu0 %1030, %v555
          %v1032 = vpop.permute.xlu0 %1031
          %1033 = vset.pattern.permute.xlu0 1
          %1034 = vperm.xlu0 %1033, %v556
          %v1035 = vpop.permute.xlu0 %1034
          %1036 = vset.pattern.permute.xlu0 1
          %1037 = vperm.xlu0 %1036, %v557
          %v1038 = vpop.permute.xlu0 %1037
          %1039 = vset.pattern.permute.xlu0 1
          %1040 = vperm.xlu0 %1039, %v558
          %v1041 = vpop.permute.xlu0 %1040
          %1042 = vset.pattern.permute.xlu0 1
          %1043 = vperm.xlu0 %1042, %v559
          %v1044 = vpop.permute.xlu0 %1043
          %1045 = vset.pattern.permute.xlu0 1
          %1046 = vperm.xlu0 %1045, %v560
          %v1047 = vpop.permute.xlu0 %1046
          %1048 = vset.pattern.permute.xlu0 1
          %1049 = vperm.xlu0 %1048, %v561
          %v1050 = vpop.permute.xlu0 %1049
          %1051 = vset.pattern.permute.xlu0 1
          %1052 = vperm.xlu0 %1051, %v562
          %v1053 = vpop.permute.xlu0 %1052
          %vm1054 = vcmp.eq.s32.totalorder %v570, %v1008
          %vm1055 = vcmp.eq.s32.totalorder %v570, %v1011
          %vm1056 = vcmp.eq.s32.totalorder %v570, %v1014
          %vm1057 = vcmp.eq.s32.totalorder %v570, %v1017
          %vm1058 = vcmp.eq.s32.totalorder %v570, %v1020
          %vm1059 = vcmp.eq.s32.totalorder %v570, %v1023
          %vm1060 = vcmp.eq.s32.totalorder %v570, %v1026
          %vm1061 = vcmp.eq.s32.totalorder %v570, %v1029
          %vm1062 = vcmp.eq.s32.totalorder %v570, %v1032
          %vm1063 = vcmp.eq.s32.totalorder %v570, %v1035
          %vm1064 = vcmp.eq.s32.totalorder %v570, %v1038
          %vm1065 = vcmp.eq.s32.totalorder %v570, %v1041
          %vm1066 = vcmp.eq.s32.totalorder %v570, %v1044
          %vm1067 = vcmp.eq.s32.totalorder %v570, %v1047
          %vm1068 = vcmp.eq.s32.totalorder %v570, %v1050
          %vm1069 = vcmp.eq.s32.totalorder %v570, %v1053
          %v1070 = vsel %vm1054, 1, 0
          %v1071 = vsel %vm1055, 1, 0
          %v1072 = vsel %vm1056, 1, 0
          %v1073 = vsel %vm1057, 1, 0
          %v1074 = vsel %vm1058, 1, 0
          %v1075 = vsel %vm1059, 1, 0
          %v1076 = vsel %vm1060, 1, 0
          %v1077 = vsel %vm1061, 1, 0
          %v1078 = vsel %vm1062, 1, 0
          %v1079 = vsel %vm1063, 1, 0
          %v1080 = vsel %vm1064, 1, 0
          %v1081 = vsel %vm1065, 1, 0
          %v1082 = vsel %vm1066, 1, 0
          %v1083 = vsel %vm1067, 1, 0
          %v1084 = vsel %vm1068, 1, 0
          %v1085 = vsel %vm1069, 1, 0
          %v1086 = vcvt.s32.f32 %v1070
          %v1087 = vcvt.s32.f32 %v1071
          %v1088 = vcvt.s32.f32 %v1072
          %v1089 = vcvt.s32.f32 %v1073
          %v1090 = vcvt.s32.f32 %v1074
          %v1091 = vcvt.s32.f32 %v1075
          %v1092 = vcvt.s32.f32 %v1076
          %v1093 = vcvt.s32.f32 %v1077
          %v1094 = vcvt.s32.f32 %v1078
          %v1095 = vcvt.s32.f32 %v1079
          %v1096 = vcvt.s32.f32 %v1080
          %v1097 = vcvt.s32.f32 %v1081
          %v1098 = vcvt.s32.f32 %v1082
          %v1099 = vcvt.s32.f32 %v1083
          %v1100 = vcvt.s32.f32 %v1084
          %v1101 = vcvt.s32.f32 %v1085
          %v1103 = vsel %vm667, %v1086, 0
          %v1106 = vsel %vm667, %v1087, 0
          %v1109 = vsel %vm667, %v1088, 0
          %v1112 = vsel %vm667, %v1089, 0
          %v1115 = vsel %vm667, %v1090, 0
          %v1118 = vsel %vm667, %v1091, 0
          %v1121 = vsel %vm667, %v1092, 0
          %v1124 = vsel %vm667, %v1093, 0
          %v1127 = vsel %vm667, %v1094, 0
          %v1130 = vsel %vm667, %v1095, 0
          %v1133 = vsel %vm667, %v1096, 0
          %v1136 = vsel %vm667, %v1097, 0
          %v1139 = vsel %vm667, %v1098, 0
          %v1142 = vsel %vm667, %v1099, 0
          %v1145 = vsel %vm667, %v1100, 0
          %v1148 = vsel %vm667, %v1101, 0
          %1150 = vmatprep.subr.mxu0 0.0
          %1151 = vmatpush1.msra.mxu0 %v563
          %1152 = vmatprep.subr.mxu0 0.0
          %1153 = vmatpush1.msra.mxu0 %v564
          %1154 = vmatprep.subr.mxu0 0.0
          %1155 = vmatpush1.msra.mxu0 %v565
          %1156 = vmatprep.subr.mxu0 0.0
          %1157 = vmatpush1.msra.mxu0 0.0
          %1158 = vmatprep.subr.mxu0 0.0
          %1159 = vmatpush1.msra.mxu0 0.0
          %1160 = vmatprep.subr.mxu0 0.0
          %1161 = vmatpush1.msra.mxu0 0.0
          %1162 = vmatprep.subr.mxu0 0.0
          %1163 = vmatpush1.msra.mxu0 0.0
          %1164 = vmatprep.subr.mxu0 0.0
          %1165 = vmatpush1.msra.mxu0 0.0
          %1166 = vmatprep.subr.mxu0 0.0
          %1167 = vmatpush1.msra.mxu0 0.0
          %1168 = vmatprep.subr.mxu0 0.0
          %1169 = vmatpush1.msra.mxu0 0.0
          %1170 = vmatprep.subr.mxu0 0.0
          %1171 = vmatpush1.msra.mxu0 0.0
          %1172 = vmatprep.subr.mxu0 0.0
          %1173 = vmatpush1.msra.mxu0 0.0
          %1174 = vmatprep.subr.mxu0 0.0
          %1175 = vmatpush1.msra.mxu0 0.0
          %1176 = vmatprep.subr.mxu0 0.0
          %1177 = vmatpush1.msra.mxu0 0.0
          %1178 = vmatprep.subr.mxu0 0.0
          %1179 = vmatpush1.msra.mxu0 0.0
          %1180 = vmatprep.subr.mxu0 0.0
          %1181 = vmatpush1.msra.mxu0 0.0
          %1182 = vmatprep.subr.mxu0 0.0
          %1183 = vmatpush1.msra.mxu0 0.0
          %1184 = vmatprep.subr.mxu0 0.0
          %1185 = vmatpush1.msra.mxu0 0.0
          %1186 = vmatprep.subr.mxu0 0.0
          %1187 = vmatpush1.msra.mxu0 0.0
          %1188 = vmatprep.subr.mxu0 0.0
          %1189 = vmatpush1.msra.mxu0 0.0
          %1190 = vmatprep.subr.mxu0 0.0
          %1191 = vmatpush1.msra.mxu0 0.0
          %1192 = vmatprep.subr.mxu0 0.0
          %1193 = vmatpush1.msra.mxu0 0.0
          %1194 = vmatprep.subr.mxu0 0.0
          %1195 = vmatpush1.msra.mxu0 0.0
          %1196 = vmatprep.subr.mxu0 0.0
          %1197 = vmatpush1.msra.mxu0 0.0
          %1198 = vmatprep.subr.mxu0 0.0
          %1199 = vmatpush1.msra.mxu0 0.0
          %1200 = vmatprep.subr.mxu0 0.0
          %1201 = vmatpush1.msra.mxu0 0.0
          %1202 = vmatprep.subr.mxu0 0.0
          %1203 = vmatpush1.msra.mxu0 0.0
          %1204 = vmatprep.subr.mxu0 0.0
          %1205 = vmatpush1.msra.mxu0 0.0
          %1206 = vmatprep.subr.mxu0 0.0
          %1207 = vmatpush1.msra.mxu0 0.0
          %1208 = vmatprep.subr.mxu0 0.0
          %1209 = vmatpush1.msra.mxu0 0.0
          %1210 = vmatprep.subr.mxu0 0.0
          %1211 = vmatpush1.msra.mxu0 0.0
          %1212 = vmatprep.subr.mxu0 0.0
          %1213 = vmatpush1.msra.mxu0 0.0
          %1214 = vmatprep.mubr.f32.mxu0 0.0
          %1215 = vmatmul.mubr.f32.gmra.mrb[0].mxu0 %v1103
          %v1216 = vpop.f32.mrb[0].mxu0
          %v1217 = vadd.f32 0.0, %v1216
          %v1218 = vpop.f32.mrb[0].mxu0
          %1219 = vmatprep.mubr.f32.mxu0 0.0
          %1220 = vmatmul.mubr.f32.gmra.mrb[0].mxu0 %v1106
          %v1221 = vpop.f32.mrb[0].mxu0
          %v1222 = vadd.f32 0.0, %v1221
          %v1223 = vpop.f32.mrb[0].mxu0
          %1224 = vmatprep.mubr.f32.mxu0 0.0
          %1225 = vmatmul.mubr.f32.gmra.mrb[0].mxu0 %v1109
          %v1226 = vpop.f32.mrb[0].mxu0
          %v1227 = vadd.f32 0.0, %v1226
          %v1228 = vpop.f32.mrb[0].mxu0
          %1229 = vmatprep.mubr.f32.mxu0 0.0
          %1230 = vmatmul.mubr.f32.gmra.mrb[0].mxu0 %v1112
          %v1231 = vpop.f32.mrb[0].mxu0
          %v1232 = vadd.f32 0.0, %v1231
          %v1233 = vpop.f32.mrb[0].mxu0
          %1234 = vmatprep.mubr.f32.mxu0 0.0
          %1235 = vmatmul.mubr.f32.gmra.mrb[0].mxu0 %v1115
          %v1236 = vpop.f32.mrb[0].mxu0
          %v1237 = vadd.f32 0.0, %v1236
          %v1238 = vpop.f32.mrb[0].mxu0
          %1239 = vmatprep.mubr.f32.mxu0 0.0
          %1240 = vmatmul.mubr.f32.gmra.mrb[0].mxu0 %v1118
          %v1241 = vpop.f32.mrb[0].mxu0
          %v1242 = vadd.f32 0.0, %v1241
          %v1243 = vpop.f32.mrb[0].mxu0
          %1244 = vmatprep.mubr.f32.mxu0 0.0
          %1245 = vmatmul.mubr.f32.gmra.mrb[0].mxu0 %v1121
          %v1246 = vpop.f32.mrb[0].mxu0
          %v1247 = vadd.f32 0.0, %v1246
          %v1248 = vpop.f32.mrb[0].mxu0
          %1249 = vmatprep.mubr.f32.mxu0 0.0
          %1250 = vmatmul.mubr.f32.gmra.mrb[0].mxu0 %v1124
          %v1251 = vpop.f32.mrb[0].mxu0
          %v1252 = vadd.f32 0.0, %v1251
          %v1253 = vpop.f32.mrb[0].mxu0
          %1254 = vmatprep.mubr.f32.mxu0 0.0
          %1255 = vmatmul.mubr.f32.gmra.mrb[0].mxu0 %v1127
          %v1256 = vpop.f32.mrb[0].mxu0
          %v1257 = vadd.f32 0.0, %v1256
          %v1258 = vpop.f32.mrb[0].mxu0
          %1259 = vmatprep.mubr.f32.mxu0 0.0
          %1260 = vmatmul.mubr.f32.gmra.mrb[0].mxu0 %v1130
          %v1261 = vpop.f32.mrb[0].mxu0
          %v1262 = vadd.f32 0.0, %v1261
          %v1263 = vpop.f32.mrb[0].mxu0
          %1264 = vmatprep.mubr.f32.mxu0 0.0
          %1265 = vmatmul.mubr.f32.gmra.mrb[0].mxu0 %v1133
          %v1266 = vpop.f32.mrb[0].mxu0
          %v1267 = vadd.f32 0.0, %v1266
          %v1268 = vpop.f32.mrb[0].mxu0
          %1269 = vmatprep.mubr.f32.mxu0 0.0
          %1270 = vmatmul.mubr.f32.gmra.mrb[0].mxu0 %v1136
          %v1271 = vpop.f32.mrb[0].mxu0
          %v1272 = vadd.f32 0.0, %v1271
          %v1273 = vpop.f32.mrb[0].mxu0
          %1274 = vmatprep.mubr.f32.mxu0 0.0
          %1275 = vmatmul.mubr.f32.gmra.mrb[0].mxu0 %v1139
          %v1276 = vpop.f32.mrb[0].mxu0
          %v1277 = vadd.f32 0.0, %v1276
          %v1278 = vpop.f32.mrb[0].mxu0
          %1279 = vmatprep.mubr.f32.mxu0 0.0
          %1280 = vmatmul.mubr.f32.gmra.mrb[0].mxu0 %v1142
          %v1281 = vpop.f32.mrb[0].mxu0
          %v1282 = vadd.f32 0.0, %v1281
          %v1283 = vpop.f32.mrb[0].mxu0
          %1284 = vmatprep.mubr.f32.mxu0 0.0
          %1285 = vmatmul.mubr.f32.gmra.mrb[0].mxu0 %v1145
          %v1286 = vpop.f32.mrb[0].mxu0
          %v1287 = vadd.f32 0.0, %v1286
          %v1288 = vpop.f32.mrb[0].mxu0
          %1289 = vmatprep.mubr.f32.mxu0 0.0
          %1290 = vmatmul.mubr.f32.gmra.mrb[0].mxu0 %v1148
          %v1291 = vpop.f32.mrb[0].mxu0
          %v1292 = vadd.f32 0.0, %v1291
          %v1293 = vpop.f32.mrb[0].mxu0
          %1294 = vdwg.mxu0
          %1295 = vmatprep.subr.mxu0 0.0
          %1296 = vmatpush1.msra.mxu0 %v566
          %1297 = vmatprep.subr.mxu0 0.0
          %1298 = vmatpush1.msra.mxu0 %v567
          %1299 = vmatprep.subr.mxu0 0.0
          %1300 = vmatpush1.msra.mxu0 %v568
          %1301 = vmatprep.subr.mxu0 0.0
          %1302 = vmatpush1.msra.mxu0 0.0
          %1303 = vmatprep.subr.mxu0 0.0
          %1304 = vmatpush1.msra.mxu0 0.0
          %1305 = vmatprep.subr.mxu0 0.0
          %1306 = vmatpush1.msra.mxu0 0.0
          %1307 = vmatprep.subr.mxu0 0.0
          %1308 = vmatpush1.msra.mxu0 0.0
          %1309 = vmatprep.subr.mxu0 0.0
          %1310 = vmatpush1.msra.mxu0 0.0
          %1311 = vmatprep.subr.mxu0 0.0
          %1312 = vmatpush1.msra.mxu0 0.0
          %1313 = vmatprep.subr.mxu0 0.0
          %1314 = vmatpush1.msra.mxu0 0.0
          %1315 = vmatprep.subr.mxu0 0.0
          %1316 = vmatpush1.msra.mxu0 0.0
          %1317 = vmatprep.subr.mxu0 0.0
          %1318 = vmatpush1.msra.mxu0 0.0
          %1319 = vmatprep.subr.mxu0 0.0
          %1320 = vmatpush1.msra.mxu0 0.0
          %1321 = vmatprep.subr.mxu0 0.0
          %1322 = vmatpush1.msra.mxu0 0.0
          %1323 = vmatprep.subr.mxu0 0.0
          %1324 = vmatpush1.msra.mxu0 0.0
          %1325 = vmatprep.subr.mxu0 0.0
          %1326 = vmatpush1.msra.mxu0 0.0
          %1327 = vmatprep.subr.mxu0 0.0
          %1328 = vmatpush1.msra.mxu0 0.0
          %1329 = vmatprep.subr.mxu0 0.0
          %1330 = vmatpush1.msra.mxu0 0.0
          %1331 = vmatprep.subr.mxu0 0.0
          %1332 = vmatpush1.msra.mxu0 0.0
          %1333 = vmatprep.subr.mxu0 0.0
          %1334 = vmatpush1.msra.mxu0 0.0
          %1335 = vmatprep.subr.mxu0 0.0
          %1336 = vmatpush1.msra.mxu0 0.0
          %1337 = vmatprep.subr.mxu0 0.0
          %1338 = vmatpush1.msra.mxu0 0.0
          %1339 = vmatprep.subr.mxu0 0.0
          %1340 = vmatpush1.msra.mxu0 0.0
          %1341 = vmatprep.subr.mxu0 0.0
          %1342 = vmatpush1.msra.mxu0 0.0
          %1343 = vmatprep.subr.mxu0 0.0
          %1344 = vmatpush1.msra.mxu0 0.0
          %1345 = vmatprep.subr.mxu0 0.0
          %1346 = vmatpush1.msra.mxu0 0.0
          %1347 = vmatprep.subr.mxu0 0.0
          %1348 = vmatpush1.msra.mxu0 0.0
          %1349 = vmatprep.subr.mxu0 0.0
          %1350 = vmatpush1.msra.mxu0 0.0
          %1351 = vmatprep.subr.mxu0 0.0
          %1352 = vmatpush1.msra.mxu0 0.0
          %1353 = vmatprep.subr.mxu0 0.0
          %1354 = vmatpush1.msra.mxu0 0.0
          %1355 = vmatprep.subr.mxu0 0.0
          %1356 = vmatpush1.msra.mxu0 0.0
          %1357 = vmatprep.subr.mxu0 0.0
          %1358 = vmatpush1.msra.mxu0 0.0
          %1359 = vmatprep.mubr.f32.mxu0 0.0
          %1360 = vmatmul.mubr.f32.gmra.mrb[0].mxu0 %v1103
          %v1361 = vpop.f32.mrb[0].mxu0
          %v1362 = vadd.f32 0.0, %v1361
          %v1363 = vpop.f32.mrb[0].mxu0
          %1364 = vmatprep.mubr.f32.mxu0 0.0
          %1365 = vmatmul.mubr.f32.gmra.mrb[0].mxu0 %v1106
          %v1366 = vpop.f32.mrb[0].mxu0
          %v1367 = vadd.f32 0.0, %v1366
          %v1368 = vpop.f32.mrb[0].mxu0
          %1369 = vmatprep.mubr.f32.mxu0 0.0
          %1370 = vmatmul.mubr.f32.gmra.mrb[0].mxu0 %v1109
          %v1371 = vpop.f32.mrb[0].mxu0
          %v1372 = vadd.f32 0.0, %v1371
          %v1373 = vpop.f32.mrb[0].mxu0
          %1374 = vmatprep.mubr.f32.mxu0 0.0
          %1375 = vmatmul.mubr.f32.gmra.mrb[0].mxu0 %v1112
          %v1376 = vpop.f32.mrb[0].mxu0
          %v1377 = vadd.f32 0.0, %v1376
          %v1378 = vpop.f32.mrb[0].mxu0
          %1379 = vmatprep.mubr.f32.mxu0 0.0
          %1380 = vmatmul.mubr.f32.gmra.mrb[0].mxu0 %v1115
          %v1381 = vpop.f32.mrb[0].mxu0
          %v1382 = vadd.f32 0.0, %v1381
          %v1383 = vpop.f32.mrb[0].mxu0
          %1384 = vmatprep.mubr.f32.mxu0 0.0
          %1385 = vmatmul.mubr.f32.gmra.mrb[0].mxu0 %v1118
          %v1386 = vpop.f32.mrb[0].mxu0
          %v1387 = vadd.f32 0.0, %v1386
          %v1388 = vpop.f32.mrb[0].mxu0
          %1389 = vmatprep.mubr.f32.mxu0 0.0
          %1390 = vmatmul.mubr.f32.gmra.mrb[0].mxu0 %v1121
          %v1391 = vpop.f32.mrb[0].mxu0
          %v1392 = vadd.f32 0.0, %v1391
          %v1393 = vpop.f32.mrb[0].mxu0
          %1394 = vmatprep.mubr.f32.mxu0 0.0
          %1395 = vmatmul.mubr.f32.gmra.mrb[0].mxu0 %v1124
          %v1396 = vpop.f32.mrb[0].mxu0
          %v1397 = vadd.f32 0.0, %v1396
          %v1398 = vpop.f32.mrb[0].mxu0
          %1399 = vmatprep.mubr.f32.mxu0 0.0
          %1400 = vmatmul.mubr.f32.gmra.mrb[0].mxu0 %v1127
          %v1401 = vpop.f32.mrb[0].mxu0
          %v1402 = vadd.f32 0.0, %v1401
          %v1403 = vpop.f32.mrb[0].mxu0
          %1404 = vmatprep.mubr.f32.mxu0 0.0
          %1405 = vmatmul.mubr.f32.gmra.mrb[0].mxu0 %v1130
          %v1406 = vpop.f32.mrb[0].mxu0
          %v1407 = vadd.f32 0.0, %v1406
          %v1408 = vpop.f32.mrb[0].mxu0
          %1409 = vmatprep.mubr.f32.mxu0 0.0
          %1410 = vmatmul.mubr.f32.gmra.mrb[0].mxu0 %v1133
          %v1411 = vpop.f32.mrb[0].mxu0
          %v1412 = vadd.f32 0.0, %v1411
          %v1413 = vpop.f32.mrb[0].mxu0
          %1414 = vmatprep.mubr.f32.mxu0 0.0
          %1415 = vmatmul.mubr.f32.gmra.mrb[0].mxu0 %v1136
          %v1416 = vpop.f32.mrb[0].mxu0
          %v1417 = vadd.f32 0.0, %v1416
          %v1418 = vpop.f32.mrb[0].mxu0
          %1419 = vmatprep.mubr.f32.mxu0 0.0
          %1420 = vmatmul.mubr.f32.gmra.mrb[0].mxu0 %v1139
          %v1421 = vpop.f32.mrb[0].mxu0
          %v1422 = vadd.f32 0.0, %v1421
          %v1423 = vpop.f32.mrb[0].mxu0
          %1424 = vmatprep.mubr.f32.mxu0 0.0
          %1425 = vmatmul.mubr.f32.gmra.mrb[0].mxu0 %v1142
          %v1426 = vpop.f32.mrb[0].mxu0
          %v1427 = vadd.f32 0.0, %v1426
          %v1428 = vpop.f32.mrb[0].mxu0
          %1429 = vmatprep.mubr.f32.mxu0 0.0
          %1430 = vmatmul.mubr.f32.gmra.mrb[0].mxu0 %v1145
          %v1431 = vpop.f32.mrb[0].mxu0
          %v1432 = vadd.f32 0.0, %v1431
          %v1433 = vpop.f32.mrb[0].mxu0
          %1434 = vmatprep.mubr.f32.mxu0 0.0
          %1435 = vmatmul.mubr.f32.gmra.mrb[0].mxu0 %v1148
          %v1436 = vpop.f32.mrb[0].mxu0
          %v1437 = vadd.f32 0.0, %v1436
          %v1438 = vpop.f32.mrb[0].mxu0
          %1439 = vdwg.mxu0
          %v1440 = vmul.f32 %v483, %v928
          %v1441 = vmul.f32 %v487, %v933
          %v1442 = vmul.f32 %v491, %v938
          %v1443 = vmul.f32 %v495, %v943
          %v1444 = vmul.f32 %v499, %v948
          %v1445 = vmul.f32 %v503, %v953
          %v1446 = vmul.f32 %v507, %v958
          %v1447 = vmul.f32 %v511, %v963
          %v1448 = vmul.f32 %v515, %v968
          %v1449 = vmul.f32 %v519, %v973
          %v1450 = vmul.f32 %v523, %v978
          %v1451 = vmul.f32 %v527, %v983
          %v1452 = vmul.f32 %v531, %v988
          %v1453 = vmul.f32 %v535, %v993
          %v1454 = vmul.f32 %v539, %v998
          %v1455 = vmul.f32 %v543, %v1003
          %1456 = vadd.xlane.f32.xlu0 %v1440
          %v1457 = vpop.xlane.xlu0 %1456
          %1458 = vadd.xlane.f32.xlu0 %v1441
          %v1459 = vpop.xlane.xlu0 %1458
          %1460 = vadd.xlane.f32.xlu0 %v1442
          %v1461 = vpop.xlane.xlu0 %1460
          %1462 = vadd.xlane.f32.xlu0 %v1443
          %v1463 = vpop.xlane.xlu0 %1462
          %1464 = vadd.xlane.f32.xlu0 %v1444
          %v1465 = vpop.xlane.xlu0 %1464
          %1466 = vadd.xlane.f32.xlu0 %v1445
          %v1467 = vpop.xlane.xlu0 %1466
          %1468 = vadd.xlane.f32.xlu0 %v1446
          %v1469 = vpop.xlane.xlu0 %1468
          %1470 = vadd.xlane.f32.xlu0 %v1447
          %v1471 = vpop.xlane.xlu0 %1470
          %1472 = vadd.xlane.f32.xlu0 %v1448
          %v1473 = vpop.xlane.xlu0 %1472
          %1474 = vadd.xlane.f32.xlu0 %v1449
          %v1475 = vpop.xlane.xlu0 %1474
          %1476 = vadd.xlane.f32.xlu0 %v1450
          %v1477 = vpop.xlane.xlu0 %1476
          %1478 = vadd.xlane.f32.xlu0 %v1451
          %v1479 = vpop.xlane.xlu0 %1478
          %1480 = vadd.xlane.f32.xlu0 %v1452
          %v1481 = vpop.xlane.xlu0 %1480
          %1482 = vadd.xlane.f32.xlu0 %v1453
          %v1483 = vpop.xlane.xlu0 %1482
          %1484 = vadd.xlane.f32.xlu0 %v1454
          %v1485 = vpop.xlane.xlu0 %1484
          %1486 = vadd.xlane.f32.xlu0 %v1455
          %v1487 = vpop.xlane.xlu0 %1486
          %v1488 = vmul.f32 %v1457, %v928
          %v1489 = vmul.f32 %v1459, %v933
          %v1490 = vmul.f32 %v1461, %v938
          %v1491 = vmul.f32 %v1463, %v943
          %v1492 = vmul.f32 %v1465, %v948
          %v1493 = vmul.f32 %v1467, %v953
          %v1494 = vmul.f32 %v1469, %v958
          %v1495 = vmul.f32 %v1471, %v963
          %v1496 = vmul.f32 %v1473, %v968
          %v1497 = vmul.f32 %v1475, %v973
          %v1498 = vmul.f32 %v1477, %v978
          %v1499 = vmul.f32 %v1479, %v983
          %v1500 = vmul.f32 %v1481, %v988
          %v1501 = vmul.f32 %v1483, %v993
          %v1502 = vmul.f32 %v1485, %v998
          %v1503 = vmul.f32 %v1487, %v1003
          %v1504 = vsub.f32 %v483, %v1488
          %v1505 = vsub.f32 %v487, %v1489
          %v1506 = vsub.f32 %v491, %v1490
          %v1507 = vsub.f32 %v495, %v1491
          %v1508 = vsub.f32 %v499, %v1492
          %v1509 = vsub.f32 %v503, %v1493
          %v1510 = vsub.f32 %v507, %v1494
          %v1511 = vsub.f32 %v511, %v1495
          %v1512 = vsub.f32 %v515, %v1496
          %v1513 = vsub.f32 %v519, %v1497
          %v1514 = vsub.f32 %v523, %v1498
          %v1515 = vsub.f32 %v527, %v1499
          %v1516 = vsub.f32 %v531, %v1500
          %v1517 = vsub.f32 %v535, %v1501
          %v1518 = vsub.f32 %v539, %v1502
          %v1519 = vsub.f32 %v543, %v1503
          %v1520 = vmul.f32 %v484, %v928
          %v1521 = vmul.f32 %v488, %v933
          %v1522 = vmul.f32 %v492, %v938
          %v1523 = vmul.f32 %v496, %v943
          %v1524 = vmul.f32 %v500, %v948
          %v1525 = vmul.f32 %v504, %v953
          %v1526 = vmul.f32 %v508, %v958
          %v1527 = vmul.f32 %v512, %v963
          %v1528 = vmul.f32 %v516, %v968
          %v1529 = vmul.f32 %v520, %v973
          %v1530 = vmul.f32 %v524, %v978
          %v1531 = vmul.f32 %v528, %v983
          %v1532 = vmul.f32 %v532, %v988
          %v1533 = vmul.f32 %v536, %v993
          %v1534 = vmul.f32 %v540, %v998
          %v1535 = vmul.f32 %v544, %v1003
          %1536 = vadd.xlane.f32.xlu0 %v1520
          %v1537 = vpop.xlane.xlu0 %1536
          %1538 = vadd.xlane.f32.xlu0 %v1521
          %v1539 = vpop.xlane.xlu0 %1538
          %1540 = vadd.xlane.f32.xlu0 %v1522
          %v1541 = vpop.xlane.xlu0 %1540
          %1542 = vadd.xlane.f32.xlu0 %v1523
          %v1543 = vpop.xlane.xlu0 %1542
          %1544 = vadd.xlane.f32.xlu0 %v1524
          %v1545 = vpop.xlane.xlu0 %1544
          %1546 = vadd.xlane.f32.xlu0 %v1525
          %v1547 = vpop.xlane.xlu0 %1546
          %1548 = vadd.xlane.f32.xlu0 %v1526
          %v1549 = vpop.xlane.xlu0 %1548
          %1550 = vadd.xlane.f32.xlu0 %v1527
          %v1551 = vpop.xlane.xlu0 %1550
          %1552 = vadd.xlane.f32.xlu0 %v1528
          %v1553 = vpop.xlane.xlu0 %1552
          %1554 = vadd.xlane.f32.xlu0 %v1529
          %v1555 = vpop.xlane.xlu0 %1554
          %1556 = vadd.xlane.f32.xlu0 %v1530
          %v1557 = vpop.xlane.xlu0 %1556
          %1558 = vadd.xlane.f32.xlu0 %v1531
          %v1559 = vpop.xlane.xlu0 %1558
          %1560 = vadd.xlane.f32.xlu0 %v1532
          %v1561 = vpop.xlane.xlu0 %1560
          %1562 = vadd.xlane.f32.xlu0 %v1533
          %v1563 = vpop.xlane.xlu0 %1562
          %1564 = vadd.xlane.f32.xlu0 %v1534
          %v1565 = vpop.xlane.xlu0 %1564
          %1566 = vadd.xlane.f32.xlu0 %v1535
          %v1567 = vpop.xlane.xlu0 %1566
          %v1568 = vmul.f32 %v1537, %v928
          %v1569 = vmul.f32 %v1539, %v933
          %v1570 = vmul.f32 %v1541, %v938
          %v1571 = vmul.f32 %v1543, %v943
          %v1572 = vmul.f32 %v1545, %v948
          %v1573 = vmul.f32 %v1547, %v953
          %v1574 = vmul.f32 %v1549, %v958
          %v1575 = vmul.f32 %v1551, %v963
          %v1576 = vmul.f32 %v1553, %v968
          %v1577 = vmul.f32 %v1555, %v973
          %v1578 = vmul.f32 %v1557, %v978
          %v1579 = vmul.f32 %v1559, %v983
          %v1580 = vmul.f32 %v1561, %v988
          %v1581 = vmul.f32 %v1563, %v993
          %v1582 = vmul.f32 %v1565, %v998
          %v1583 = vmul.f32 %v1567, %v1003
          %v1584 = vsub.f32 %v484, %v1568
          %v1585 = vsub.f32 %v488, %v1569
          %v1586 = vsub.f32 %v492, %v1570
          %v1587 = vsub.f32 %v496, %v1571
          %v1588 = vsub.f32 %v500, %v1572
          %v1589 = vsub.f32 %v504, %v1573
          %v1590 = vsub.f32 %v508, %v1574
          %v1591 = vsub.f32 %v512, %v1575
          %v1592 = vsub.f32 %v516, %v1576
          %v1593 = vsub.f32 %v520, %v1577
          %v1594 = vsub.f32 %v524, %v1578
          %v1595 = vsub.f32 %v528, %v1579
          %v1596 = vsub.f32 %v532, %v1580
          %v1597 = vsub.f32 %v536, %v1581
          %v1598 = vsub.f32 %v540, %v1582
          %v1599 = vsub.f32 %v544, %v1583
          %v1600 = vadd.f32 %v1504, %v783
          %v1601 = vadd.f32 %v1505, %v788
          %v1602 = vadd.f32 %v1506, %v793
          %v1603 = vadd.f32 %v1507, %v798
          %v1604 = vadd.f32 %v1508, %v803
          %v1605 = vadd.f32 %v1509, %v808
          %v1606 = vadd.f32 %v1510, %v813
          %v1607 = vadd.f32 %v1511, %v818
          %v1608 = vadd.f32 %v1512, %v823
          %v1609 = vadd.f32 %v1513, %v828
          %v1610 = vadd.f32 %v1514, %v833
          %v1611 = vadd.f32 %v1515, %v838
          %v1612 = vadd.f32 %v1516, %v843
          %v1613 = vadd.f32 %v1517, %v848
          %v1614 = vadd.f32 %v1518, %v853
          %v1615 = vadd.f32 %v1519, %v858
          %v1616 = vsub.f32 %v1600, %v1584
          %v1617 = vsub.f32 %v1601, %v1585
          %v1618 = vsub.f32 %v1602, %v1586
          %v1619 = vsub.f32 %v1603, %v1587
          %v1620 = vsub.f32 %v1604, %v1588
          %v1621 = vsub.f32 %v1605, %v1589
          %v1622 = vsub.f32 %v1606, %v1590
          %v1623 = vsub.f32 %v1607, %v1591
          %v1624 = vsub.f32 %v1608, %v1592
          %v1625 = vsub.f32 %v1609, %v1593
          %v1626 = vsub.f32 %v1610, %v1594
          %v1627 = vsub.f32 %v1611, %v1595
          %v1628 = vsub.f32 %v1612, %v1596
          %v1629 = vsub.f32 %v1613, %v1597
          %v1630 = vsub.f32 %v1614, %v1598
          %v1631 = vsub.f32 %v1615, %v1599
          %v1632 = vadd.f32 %v1616, 1e-06
          %v1633 = vadd.f32 %v1617, 1e-06
          %v1634 = vadd.f32 %v1618, 1e-06
          %v1635 = vadd.f32 %v1619, 1e-06
          %v1636 = vadd.f32 %v1620, 1e-06
          %v1637 = vadd.f32 %v1621, 1e-06
          %v1638 = vadd.f32 %v1622, 1e-06
          %v1639 = vadd.f32 %v1623, 1e-06
          %v1640 = vadd.f32 %v1624, 1e-06
          %v1641 = vadd.f32 %v1625, 1e-06
          %v1642 = vadd.f32 %v1626, 1e-06
          %v1643 = vadd.f32 %v1627, 1e-06
          %v1644 = vadd.f32 %v1628, 1e-06
          %v1645 = vadd.f32 %v1629, 1e-06
          %v1646 = vadd.f32 %v1630, 1e-06
          %v1647 = vadd.f32 %v1631, 1e-06
          %v1648 = vmul.f32 %v1632, %v1632
          %v1649 = vmul.f32 %v1633, %v1633
          %v1650 = vmul.f32 %v1634, %v1634
          %v1651 = vmul.f32 %v1635, %v1635
          %v1652 = vmul.f32 %v1636, %v1636
          %v1653 = vmul.f32 %v1637, %v1637
          %v1654 = vmul.f32 %v1638, %v1638
          %v1655 = vmul.f32 %v1639, %v1639
          %v1656 = vmul.f32 %v1640, %v1640
          %v1657 = vmul.f32 %v1641, %v1641
          %v1658 = vmul.f32 %v1642, %v1642
          %v1659 = vmul.f32 %v1643, %v1643
          %v1660 = vmul.f32 %v1644, %v1644
          %v1661 = vmul.f32 %v1645, %v1645
          %v1662 = vmul.f32 %v1646, %v1646
          %v1663 = vmul.f32 %v1647, %v1647
          %1664 = vadd.xlane.f32.xlu0 %v1648
          %v1665 = vpop.xlane.xlu0 %1664
          %1666 = vadd.xlane.f32.xlu0 %v1649
          %v1667 = vpop.xlane.xlu0 %1666
          %1668 = vadd.xlane.f32.xlu0 %v1650
          %v1669 = vpop.xlane.xlu0 %1668
          %1670 = vadd.xlane.f32.xlu0 %v1651
          %v1671 = vpop.xlane.xlu0 %1670
          %1672 = vadd.xlane.f32.xlu0 %v1652
          %v1673 = vpop.xlane.xlu0 %1672
          %1674 = vadd.xlane.f32.xlu0 %v1653
          %v1675 = vpop.xlane.xlu0 %1674
          %1676 = vadd.xlane.f32.xlu0 %v1654
          %v1677 = vpop.xlane.xlu0 %1676
          %1678 = vadd.xlane.f32.xlu0 %v1655
          %v1679 = vpop.xlane.xlu0 %1678
          %1680 = vadd.xlane.f32.xlu0 %v1656
          %v1681 = vpop.xlane.xlu0 %1680
          %1682 = vadd.xlane.f32.xlu0 %v1657
          %v1683 = vpop.xlane.xlu0 %1682
          %1684 = vadd.xlane.f32.xlu0 %v1658
          %v1685 = vpop.xlane.xlu0 %1684
          %1686 = vadd.xlane.f32.xlu0 %v1659
          %v1687 = vpop.xlane.xlu0 %1686
          %1688 = vadd.xlane.f32.xlu0 %v1660
          %v1689 = vpop.xlane.xlu0 %1688
          %1690 = vadd.xlane.f32.xlu0 %v1661
          %v1691 = vpop.xlane.xlu0 %1690
          %1692 = vadd.xlane.f32.xlu0 %v1662
          %v1693 = vpop.xlane.xlu0 %1692
          %1694 = vadd.xlane.f32.xlu0 %v1663
          %v1695 = vpop.xlane.xlu0 %1694
          %v1696 = vmul.f32 %v485, %v1362
          %v1697 = vmul.f32 %v489, %v1367
          %v1698 = vmul.f32 %v493, %v1372
          %v1699 = vmul.f32 %v497, %v1377
          %v1700 = vmul.f32 %v501, %v1382
          %v1701 = vmul.f32 %v505, %v1387
          %v1702 = vmul.f32 %v509, %v1392
          %v1703 = vmul.f32 %v513, %v1397
          %v1704 = vmul.f32 %v517, %v1402
          %v1705 = vmul.f32 %v521, %v1407
          %v1706 = vmul.f32 %v525, %v1412
          %v1707 = vmul.f32 %v529, %v1417
          %v1708 = vmul.f32 %v533, %v1422
          %v1709 = vmul.f32 %v537, %v1427
          %v1710 = vmul.f32 %v541, %v1432
          %v1711 = vmul.f32 %v545, %v1437
          %1712 = vadd.xlane.f32.xlu0 %v1696
          %v1713 = vpop.xlane.xlu0 %1712
          %1714 = vadd.xlane.f32.xlu0 %v1697
          %v1715 = vpop.xlane.xlu0 %1714
          %1716 = vadd.xlane.f32.xlu0 %v1698
          %v1717 = vpop.xlane.xlu0 %1716
          %1718 = vadd.xlane.f32.xlu0 %v1699
          %v1719 = vpop.xlane.xlu0 %1718
          %1720 = vadd.xlane.f32.xlu0 %v1700
          %v1721 = vpop.xlane.xlu0 %1720
          %1722 = vadd.xlane.f32.xlu0 %v1701
          %v1723 = vpop.xlane.xlu0 %1722
          %1724 = vadd.xlane.f32.xlu0 %v1702
          %v1725 = vpop.xlane.xlu0 %1724
          %1726 = vadd.xlane.f32.xlu0 %v1703
          %v1727 = vpop.xlane.xlu0 %1726
          %1728 = vadd.xlane.f32.xlu0 %v1704
          %v1729 = vpop.xlane.xlu0 %1728
          %1730 = vadd.xlane.f32.xlu0 %v1705
          %v1731 = vpop.xlane.xlu0 %1730
          %1732 = vadd.xlane.f32.xlu0 %v1706
          %v1733 = vpop.xlane.xlu0 %1732
          %1734 = vadd.xlane.f32.xlu0 %v1707
          %v1735 = vpop.xlane.xlu0 %1734
          %1736 = vadd.xlane.f32.xlu0 %v1708
          %v1737 = vpop.xlane.xlu0 %1736
          %1738 = vadd.xlane.f32.xlu0 %v1709
          %v1739 = vpop.xlane.xlu0 %1738
          %1740 = vadd.xlane.f32.xlu0 %v1710
          %v1741 = vpop.xlane.xlu0 %1740
          %1742 = vadd.xlane.f32.xlu0 %v1711
          %v1743 = vpop.xlane.xlu0 %1742
          %v1744 = vmul.f32 %v1713, %v1362
          %v1745 = vmul.f32 %v1715, %v1367
          %v1746 = vmul.f32 %v1717, %v1372
          %v1747 = vmul.f32 %v1719, %v1377
          %v1748 = vmul.f32 %v1721, %v1382
          %v1749 = vmul.f32 %v1723, %v1387
          %v1750 = vmul.f32 %v1725, %v1392
          %v1751 = vmul.f32 %v1727, %v1397
          %v1752 = vmul.f32 %v1729, %v1402
          %v1753 = vmul.f32 %v1731, %v1407
          %v1754 = vmul.f32 %v1733, %v1412
          %v1755 = vmul.f32 %v1735, %v1417
          %v1756 = vmul.f32 %v1737, %v1422
          %v1757 = vmul.f32 %v1739, %v1427
          %v1758 = vmul.f32 %v1741, %v1432
          %v1759 = vmul.f32 %v1743, %v1437
          %v1760 = vsub.f32 %v485, %v1744
          %v1761 = vsub.f32 %v489, %v1745
          %v1762 = vsub.f32 %v493, %v1746
          %v1763 = vsub.f32 %v497, %v1747
          %v1764 = vsub.f32 %v501, %v1748
          %v1765 = vsub.f32 %v505, %v1749
          %v1766 = vsub.f32 %v509, %v1750
          %v1767 = vsub.f32 %v513, %v1751
          %v1768 = vsub.f32 %v517, %v1752
          %v1769 = vsub.f32 %v521, %v1753
          %v1770 = vsub.f32 %v525, %v1754
          %v1771 = vsub.f32 %v529, %v1755
          %v1772 = vsub.f32 %v533, %v1756
          %v1773 = vsub.f32 %v537, %v1757
          %v1774 = vsub.f32 %v541, %v1758
          %v1775 = vsub.f32 %v545, %v1759
          %v1776 = vmul.f32 %v486, %v1362
          %v1777 = vmul.f32 %v490, %v1367
          %v1778 = vmul.f32 %v494, %v1372
          %v1779 = vmul.f32 %v498, %v1377
          %v1780 = vmul.f32 %v502, %v1382
          %v1781 = vmul.f32 %v506, %v1387
          %v1782 = vmul.f32 %v510, %v1392
          %v1783 = vmul.f32 %v514, %v1397
          %v1784 = vmul.f32 %v518, %v1402
          %v1785 = vmul.f32 %v522, %v1407
          %v1786 = vmul.f32 %v526, %v1412
          %v1787 = vmul.f32 %v530, %v1417
          %v1788 = vmul.f32 %v534, %v1422
          %v1789 = vmul.f32 %v538, %v1427
          %v1790 = vmul.f32 %v542, %v1432
          %v1791 = vmul.f32 %v546, %v1437
          %1792 = vadd.xlane.f32.xlu0 %v1776
          %v1793 = vpop.xlane.xlu0 %1792
          %1794 = vadd.xlane.f32.xlu0 %v1777
          %v1795 = vpop.xlane.xlu0 %1794
          %1796 = vadd.xlane.f32.xlu0 %v1778
          %v1797 = vpop.xlane.xlu0 %1796
          %1798 = vadd.xlane.f32.xlu0 %v1779
          %v1799 = vpop.xlane.xlu0 %1798
          %1800 = vadd.xlane.f32.xlu0 %v1780
          %v1801 = vpop.xlane.xlu0 %1800
          %1802 = vadd.xlane.f32.xlu0 %v1781
          %v1803 = vpop.xlane.xlu0 %1802
          %1804 = vadd.xlane.f32.xlu0 %v1782
          %v1805 = vpop.xlane.xlu0 %1804
          %1806 = vadd.xlane.f32.xlu0 %v1783
          %v1807 = vpop.xlane.xlu0 %1806
          %1808 = vadd.xlane.f32.xlu0 %v1784
          %v1809 = vpop.xlane.xlu0 %1808
          %1810 = vadd.xlane.f32.xlu0 %v1785
          %v1811 = vpop.xlane.xlu0 %1810
          %1812 = vadd.xlane.f32.xlu0 %v1786
          %v1813 = vpop.xlane.xlu0 %1812
          %1814 = vadd.xlane.f32.xlu0 %v1787
          %v1815 = vpop.xlane.xlu0 %1814
          %1816 = vadd.xlane.f32.xlu0 %v1788
          %v1817 = vpop.xlane.xlu0 %1816
          %1818 = vadd.xlane.f32.xlu0 %v1789
          %v1819 = vpop.xlane.xlu0 %1818
          %1820 = vadd.xlane.f32.xlu0 %v1790
          %v1821 = vpop.xlane.xlu0 %1820
          %1822 = vadd.xlane.f32.xlu0 %v1791
          %v1823 = vpop.xlane.xlu0 %1822
          %v1824 = vmul.f32 %v1793, %v1362
          %v1825 = vmul.f32 %v1795, %v1367
          %v1826 = vmul.f32 %v1797, %v1372
          %v1827 = vmul.f32 %v1799, %v1377
          %v1828 = vmul.f32 %v1801, %v1382
          %v1829 = vmul.f32 %v1803, %v1387
          %v1830 = vmul.f32 %v1805, %v1392
          %v1831 = vmul.f32 %v1807, %v1397
          %v1832 = vmul.f32 %v1809, %v1402
          %v1833 = vmul.f32 %v1811, %v1407
          %v1834 = vmul.f32 %v1813, %v1412
          %v1835 = vmul.f32 %v1815, %v1417
          %v1836 = vmul.f32 %v1817, %v1422
          %v1837 = vmul.f32 %v1819, %v1427
          %v1838 = vmul.f32 %v1821, %v1432
          %v1839 = vmul.f32 %v1823, %v1437
          %v1840 = vsub.f32 %v486, %v1824
          %v1841 = vsub.f32 %v490, %v1825
          %v1842 = vsub.f32 %v494, %v1826
          %v1843 = vsub.f32 %v498, %v1827
          %v1844 = vsub.f32 %v502, %v1828
          %v1845 = vsub.f32 %v506, %v1829
          %v1846 = vsub.f32 %v510, %v1830
          %v1847 = vsub.f32 %v514, %v1831
          %v1848 = vsub.f32 %v518, %v1832
          %v1849 = vsub.f32 %v522, %v1833
          %v1850 = vsub.f32 %v526, %v1834
          %v1851 = vsub.f32 %v530, %v1835
          %v1852 = vsub.f32 %v534, %v1836
          %v1853 = vsub.f32 %v538, %v1837
          %v1854 = vsub.f32 %v542, %v1838
          %v1855 = vsub.f32 %v546, %v1839
          %v1856 = vadd.f32 %v1760, %v1217
          %v1857 = vadd.f32 %v1761, %v1222
          %v1858 = vadd.f32 %v1762, %v1227
          %v1859 = vadd.f32 %v1763, %v1232
          %v1860 = vadd.f32 %v1764, %v1237
          %v1861 = vadd.f32 %v1765, %v1242
          %v1862 = vadd.f32 %v1766, %v1247
          %v1863 = vadd.f32 %v1767, %v1252
          %v1864 = vadd.f32 %v1768, %v1257
          %v1865 = vadd.f32 %v1769, %v1262
          %v1866 = vadd.f32 %v1770, %v1267
          %v1867 = vadd.f32 %v1771, %v1272
          %v1868 = vadd.f32 %v1772, %v1277
          %v1869 = vadd.f32 %v1773, %v1282
          %v1870 = vadd.f32 %v1774, %v1287
          %v1871 = vadd.f32 %v1775, %v1292
          %v1872 = vsub.f32 %v1856, %v1840
          %v1873 = vsub.f32 %v1857, %v1841
          %v1874 = vsub.f32 %v1858, %v1842
          %v1875 = vsub.f32 %v1859, %v1843
          %v1876 = vsub.f32 %v1860, %v1844
          %v1877 = vsub.f32 %v1861, %v1845
          %v1878 = vsub.f32 %v1862, %v1846
          %v1879 = vsub.f32 %v1863, %v1847
          %v1880 = vsub.f32 %v1864, %v1848
          %v1881 = vsub.f32 %v1865, %v1849
          %v1882 = vsub.f32 %v1866, %v1850
          %v1883 = vsub.f32 %v1867, %v1851
          %v1884 = vsub.f32 %v1868, %v1852
          %v1885 = vsub.f32 %v1869, %v1853
          %v1886 = vsub.f32 %v1870, %v1854
          %v1887 = vsub.f32 %v1871, %v1855
          %v1888 = vadd.f32 %v1872, 1e-06
          %v1889 = vadd.f32 %v1873, 1e-06
          %v1890 = vadd.f32 %v1874, 1e-06
          %v1891 = vadd.f32 %v1875, 1e-06
          %v1892 = vadd.f32 %v1876, 1e-06
          %v1893 = vadd.f32 %v1877, 1e-06
          %v1894 = vadd.f32 %v1878, 1e-06
          %v1895 = vadd.f32 %v1879, 1e-06
          %v1896 = vadd.f32 %v1880, 1e-06
          %v1897 = vadd.f32 %v1881, 1e-06
          %v1898 = vadd.f32 %v1882, 1e-06
          %v1899 = vadd.f32 %v1883, 1e-06
          %v1900 = vadd.f32 %v1884, 1e-06
          %v1901 = vadd.f32 %v1885, 1e-06
          %v1902 = vadd.f32 %v1886, 1e-06
          %v1903 = vadd.f32 %v1887, 1e-06
          %v1904 = vmul.f32 %v1888, %v1888
          %v1905 = vmul.f32 %v1889, %v1889
          %v1906 = vmul.f32 %v1890, %v1890
          %v1907 = vmul.f32 %v1891, %v1891
          %v1908 = vmul.f32 %v1892, %v1892
          %v1909 = vmul.f32 %v1893, %v1893
          %v1910 = vmul.f32 %v1894, %v1894
          %v1911 = vmul.f32 %v1895, %v1895
          %v1912 = vmul.f32 %v1896, %v1896
          %v1913 = vmul.f32 %v1897, %v1897
          %v1914 = vmul.f32 %v1898, %v1898
          %v1915 = vmul.f32 %v1899, %v1899
          %v1916 = vmul.f32 %v1900, %v1900
          %v1917 = vmul.f32 %v1901, %v1901
          %v1918 = vmul.f32 %v1902, %v1902
          %v1919 = vmul.f32 %v1903, %v1903
          %1920 = vadd.xlane.f32.xlu0 %v1904
          %v1921 = vpop.xlane.xlu0 %1920
          %1922 = vadd.xlane.f32.xlu0 %v1905
          %v1923 = vpop.xlane.xlu0 %1922
          %1924 = vadd.xlane.f32.xlu0 %v1906
          %v1925 = vpop.xlane.xlu0 %1924
          %1926 = vadd.xlane.f32.xlu0 %v1907
          %v1927 = vpop.xlane.xlu0 %1926
          %1928 = vadd.xlane.f32.xlu0 %v1908
          %v1929 = vpop.xlane.xlu0 %1928
          %1930 = vadd.xlane.f32.xlu0 %v1909
          %v1931 = vpop.xlane.xlu0 %1930
          %1932 = vadd.xlane.f32.xlu0 %v1910
          %v1933 = vpop.xlane.xlu0 %1932
          %1934 = vadd.xlane.f32.xlu0 %v1911
          %v1935 = vpop.xlane.xlu0 %1934
          %1936 = vadd.xlane.f32.xlu0 %v1912
          %v1937 = vpop.xlane.xlu0 %1936
          %1938 = vadd.xlane.f32.xlu0 %v1913
          %v1939 = vpop.xlane.xlu0 %1938
          %1940 = vadd.xlane.f32.xlu0 %v1914
          %v1941 = vpop.xlane.xlu0 %1940
          %1942 = vadd.xlane.f32.xlu0 %v1915
          %v1943 = vpop.xlane.xlu0 %1942
          %1944 = vadd.xlane.f32.xlu0 %v1916
          %v1945 = vpop.xlane.xlu0 %1944
          %1946 = vadd.xlane.f32.xlu0 %v1917
          %v1947 = vpop.xlane.xlu0 %1946
          %1948 = vadd.xlane.f32.xlu0 %v1918
          %v1949 = vpop.xlane.xlu0 %1948
          %1950 = vadd.xlane.f32.xlu0 %v1919
          %v1951 = vpop.xlane.xlu0 %1950
          %v1952 = vadd.f32 %v1665, 1.0
          %v1953 = vadd.f32 %v1667, 1.0
          %v1954 = vadd.f32 %v1669, 1.0
          %v1955 = vadd.f32 %v1671, 1.0
          %v1956 = vadd.f32 %v1673, 1.0
          %v1957 = vadd.f32 %v1675, 1.0
          %v1958 = vadd.f32 %v1677, 1.0
          %v1959 = vadd.f32 %v1679, 1.0
          %v1960 = vadd.f32 %v1681, 1.0
          %v1961 = vadd.f32 %v1683, 1.0
          %v1962 = vadd.f32 %v1685, 1.0
          %v1963 = vadd.f32 %v1687, 1.0
          %v1964 = vadd.f32 %v1689, 1.0
          %v1965 = vadd.f32 %v1691, 1.0
          %v1966 = vadd.f32 %v1693, 1.0
          %v1967 = vadd.f32 %v1695, 1.0
          %v1968 = vsub.f32 %v1952, %v1921
          %v1969 = vsub.f32 %v1953, %v1923
          %v1970 = vsub.f32 %v1954, %v1925
          %v1971 = vsub.f32 %v1955, %v1927
          %v1972 = vsub.f32 %v1956, %v1929
          %v1973 = vsub.f32 %v1957, %v1931
          %v1974 = vsub.f32 %v1958, %v1933
          %v1975 = vsub.f32 %v1959, %v1935
          %v1976 = vsub.f32 %v1960, %v1937
          %v1977 = vsub.f32 %v1961, %v1939
          %v1978 = vsub.f32 %v1962, %v1941
          %v1979 = vsub.f32 %v1963, %v1943
          %v1980 = vsub.f32 %v1964, %v1945
          %v1981 = vsub.f32 %v1965, %v1947
          %v1982 = vsub.f32 %v1966, %v1949
          %v1983 = vsub.f32 %v1967, %v1951
          %v1984 = vmax.f32 %v1968, 0.0
          %v1985 = vmax.f32 %v1969, 0.0
          %v1986 = vmax.f32 %v1970, 0.0
          %v1987 = vmax.f32 %v1971, 0.0
          %v1988 = vmax.f32 %v1972, 0.0
          %v1989 = vmax.f32 %v1973, 0.0
          %v1990 = vmax.f32 %v1974, 0.0
          %v1991 = vmax.f32 %v1975, 0.0
          %v1992 = vmax.f32 %v1976, 0.0
          %v1993 = vmax.f32 %v1977, 0.0
          %v1994 = vmax.f32 %v1978, 0.0
          %v1995 = vmax.f32 %v1979, 0.0
          %v1996 = vmax.f32 %v1980, 0.0
          %v1997 = vmax.f32 %v1981, 0.0
          %v1998 = vmax.f32 %v1982, 0.0
          %v1999 = vmax.f32 %v1983, 0.0
          %v2000 = vlaneseq
          %v2001 = vshrl.u32 %v2000, 7
          %v2002 = vadd.s32 %v2001, 8
          %v2003 = vadd.s32 %v2001, 16
          %v2004 = vadd.s32 %v2001, 24
          %v2005 = vadd.s32 %v2001, 32
          %v2006 = vadd.s32 %v2001, 40
          %v2007 = vadd.s32 %v2001, 48
          %v2008 = vadd.s32 %v2001, 56
          %v2009 = vadd.s32 %v2001, 64
          %v2010 = vadd.s32 %v2001, 72
          %v2011 = vadd.s32 %v2001, 80
          %v2012 = vadd.s32 %v2001, 88
          %v2013 = vadd.s32 %v2001, 96
          %v2014 = vadd.s32 %v2001, 104
          %v2015 = vadd.s32 %v2001, 112
          %v2016 = vadd.s32 %v2001, 120
          %s2017 = smul.u32 %s476, 128
          %v2018 = vstv %s2017
          %v2019 = vadd.s32 %v2001, %v2018
          %v2020 = vadd.s32 %v2002, %v2018
          %v2021 = vadd.s32 %v2003, %v2018
          %v2022 = vadd.s32 %v2004, %v2018
          %v2023 = vadd.s32 %v2005, %v2018
          %v2024 = vadd.s32 %v2006, %v2018
          %v2025 = vadd.s32 %v2007, %v2018
          %v2026 = vadd.s32 %v2008, %v2018
          %v2027 = vadd.s32 %v2009, %v2018
          %v2028 = vadd.s32 %v2010, %v2018
          %v2029 = vadd.s32 %v2011, %v2018
          %v2030 = vadd.s32 %v2012, %v2018
          %v2031 = vadd.s32 %v2013, %v2018
          %v2032 = vadd.s32 %v2014, %v2018
          %v2033 = vadd.s32 %v2015, %v2018
          %v2034 = vadd.s32 %v2016, %v2018
          %v2035 = vld [vmem:[#allocation3] sm:$0xff]
          %v2036 = vld [vmem:[#allocation3 + $0x8] sm:$0xff]
          %v2037 = vld [vmem:[#allocation3 + $0x10] sm:$0xff]
          %v2038 = vld [vmem:[#allocation3 + $0x18] sm:$0xff]
          %v2039 = vld [vmem:[#allocation3 + $0x20] sm:$0xff]
          %v2040 = vld [vmem:[#allocation3 + $0x28] sm:$0xff]
          %v2041 = vld [vmem:[#allocation3 + $0x30] sm:$0xff]
          %v2042 = vld [vmem:[#allocation3 + $0x38] sm:$0xff]
          %v2043 = vld [vmem:[#allocation3 + $0x40] sm:$0xff]
          %v2044 = vld [vmem:[#allocation3 + $0x48] sm:$0xff]
          %v2045 = vld [vmem:[#allocation3 + $0x50] sm:$0xff]
          %v2046 = vld [vmem:[#allocation3 + $0x58] sm:$0xff]
          %v2047 = vld [vmem:[#allocation3 + $0x60] sm:$0xff]
          %v2048 = vld [vmem:[#allocation3 + $0x68] sm:$0xff]
          %v2049 = vld [vmem:[#allocation3 + $0x70] sm:$0xff]
          %v2050 = vld [vmem:[#allocation3 + $0x78] sm:$0xff]
          %vm2051 = vcmp.lt.s32.totalorder %v2019, 192
          %vm2052 = vcmp.lt.s32.totalorder %v2020, 192
          %vm2053 = vcmp.lt.s32.totalorder %v2021, 192
          %vm2054 = vcmp.lt.s32.totalorder %v2022, 192
          %vm2055 = vcmp.lt.s32.totalorder %v2023, 192
          %vm2056 = vcmp.lt.s32.totalorder %v2024, 192
          %vm2057 = vcmp.lt.s32.totalorder %v2025, 192
          %vm2058 = vcmp.lt.s32.totalorder %v2026, 192
          %vm2059 = vcmp.lt.s32.totalorder %v2027, 192
          %vm2060 = vcmp.lt.s32.totalorder %v2028, 192
          %vm2061 = vcmp.lt.s32.totalorder %v2029, 192
          %vm2062 = vcmp.lt.s32.totalorder %v2030, 192
          %vm2063 = vcmp.lt.s32.totalorder %v2031, 192
          %vm2064 = vcmp.lt.s32.totalorder %v2032, 192
          %vm2065 = vcmp.lt.s32.totalorder %v2033, 192
          %vm2066 = vcmp.lt.s32.totalorder %v2034, 192
          %v2067 = vsel %vm2051, %v1984, 0.0
          %v2068 = vsel %vm2052, %v1985, 0.0
          %v2069 = vsel %vm2053, %v1986, 0.0
          %v2070 = vsel %vm2054, %v1987, 0.0
          %v2071 = vsel %vm2055, %v1988, 0.0
          %v2072 = vsel %vm2056, %v1989, 0.0
          %v2073 = vsel %vm2057, %v1990, 0.0
          %v2074 = vsel %vm2058, %v1991, 0.0
          %v2075 = vsel %vm2059, %v1992, 0.0
          %v2076 = vsel %vm2060, %v1993, 0.0
          %v2077 = vsel %vm2061, %v1994, 0.0
          %v2078 = vsel %vm2062, %v1995, 0.0
          %v2079 = vsel %vm2063, %v1996, 0.0
          %v2080 = vsel %vm2064, %v1997, 0.0
          %v2081 = vsel %vm2065, %v1998, 0.0
          %v2082 = vsel %vm2066, %v1999, 0.0
          %v2083 = vadd.f32 %v2035, %v2067
          %v2084 = vadd.f32 %v2036, %v2068
          %v2085 = vadd.f32 %v2037, %v2069
          %v2086 = vadd.f32 %v2038, %v2070
          %v2087 = vadd.f32 %v2039, %v2071
          %v2088 = vadd.f32 %v2040, %v2072
          %v2089 = vadd.f32 %v2041, %v2073
          %v2090 = vadd.f32 %v2042, %v2074
          %v2091 = vadd.f32 %v2043, %v2075
          %v2092 = vadd.f32 %v2044, %v2076
          %v2093 = vadd.f32 %v2045, %v2077
          %v2094 = vadd.f32 %v2046, %v2078
          %v2095 = vadd.f32 %v2047, %v2079
          %v2096 = vadd.f32 %v2048, %v2080
          %v2097 = vadd.f32 %v2049, %v2081
          %v2098 = vadd.f32 %v2050, %v2082
          %vm2099 = vcmask 7168
          %2100 = vst.msk [vmem:[#allocation3] sm:$0xff] %vm2099, %v2083
          %2101 = vst.msk [vmem:[#allocation3 + $0x8] sm:$0xff] %vm2099, %v2084
          %2102 = vst.msk [vmem:[#allocation3 + $0x10] sm:$0xff] %vm2099, %v2085
          %2103 = vst.msk [vmem:[#allocation3 + $0x18] sm:$0xff] %vm2099, %v2086
          %2104 = vst.msk [vmem:[#allocation3 + $0x20] sm:$0xff] %vm2099, %v2087
          %2105 = vst.msk [vmem:[#allocation3 + $0x28] sm:$0xff] %vm2099, %v2088
          %2106 = vst.msk [vmem:[#allocation3 + $0x30] sm:$0xff] %vm2099, %v2089
          %2107 = vst.msk [vmem:[#allocation3 + $0x38] sm:$0xff] %vm2099, %v2090
          %2108 = vst.msk [vmem:[#allocation3 + $0x40] sm:$0xff] %vm2099, %v2091
          %2109 = vst.msk [vmem:[#allocation3 + $0x48] sm:$0xff] %vm2099, %v2092
          %2110 = vst.msk [vmem:[#allocation3 + $0x50] sm:$0xff] %vm2099, %v2093
          %2111 = vst.msk [vmem:[#allocation3 + $0x58] sm:$0xff] %vm2099, %v2094
          %2112 = vst.msk [vmem:[#allocation3 + $0x60] sm:$0xff] %vm2099, %v2095
          %2113 = vst.msk [vmem:[#allocation3 + $0x68] sm:$0xff] %vm2099, %v2096
          %2114 = vst.msk [vmem:[#allocation3 + $0x70] sm:$0xff] %vm2099, %v2097
          %2115 = vst.msk [vmem:[#allocation3 + $0x78] sm:$0xff] %vm2099, %v2098
        $region56: #{tpu_custom_call.1} parent=39 // pred_fallthru
          _
        %s2116 = smul.u32 %s26, 2
        %s2117 = sadd.s32 %s2116, %s27
        %p2118 = scmp.lt.s32.totalorder %s27, 2
        %p2119 = scmp.lt.s32.totalorder %s2117, 4
        %p2120 = pnand %p2118, %p2119
        %p2121 = pneg %p2120
        // Predicated region
        $region57: #{tpu_custom_call.1} parent=39 // pred_check
          _
        $region58: #{tpu_custom_call.1} parent=39 // pred_check_branch
          %2123 = sbr.rel (%p2120) target = $region60
        $region59: #{tpu_custom_call.1} parent=39 // pred_region
          %v2124 = vld [vmem:[%s305] sm:$0xff]
          %v2125 = vld [vmem:[%s305 + $0x8] sm:$0xff]
          %v2126 = vld [vmem:[%s305 + $0x10] sm:$0xff]
          %v2127 = vld [vmem:[%s305 + $0x18] sm:$0xff]
          %v2128 = vld [vmem:[%s305 + $0x20] sm:$0xff]
          %v2129 = vld [vmem:[%s305 + $0x28] sm:$0xff]
          %v2130 = vld [vmem:[%s305 + $0x30] sm:$0xff]
          %v2131 = vld [vmem:[%s305 + $0x38] sm:$0xff]
          %v2132 = vld [vmem:[%s305 + $0x40] sm:$0xff]
          %v2133 = vld [vmem:[%s305 + $0x48] sm:$0xff]
          %v2134 = vld [vmem:[%s305 + $0x50] sm:$0xff]
          %v2135 = vld [vmem:[%s305 + $0x58] sm:$0xff]
          %v2136 = vld [vmem:[%s305 + $0x60] sm:$0xff]
          %v2137 = vld [vmem:[%s305 + $0x68] sm:$0xff]
          %v2138 = vld [vmem:[%s305 + $0x70] sm:$0xff]
          %v2139 = vld [vmem:[%s305 + $0x78] sm:$0xff]
          %v2140 = vld [vmem:[%s305 + $0x80] sm:$0xff]
          %v2141 = vld [vmem:[%s305 + $0x88] sm:$0xff]
          %v2142 = vld [vmem:[%s305 + $0x90] sm:$0xff]
          %v2143 = vld [vmem:[%s305 + $0x98] sm:$0xff]
          %v2144 = vld [vmem:[%s305 + $0xa0] sm:$0xff]
          %v2145 = vld [vmem:[%s305 + $0xa8] sm:$0xff]
          %v2146 = vld [vmem:[%s305 + $0xb0] sm:$0xff]
          %v2147 = vld [vmem:[%s305 + $0xb8] sm:$0xff]
          %v2148 = vld [vmem:[%s305 + $0xc0] sm:$0xff]
          %v2149 = vld [vmem:[%s305 + $0xc8] sm:$0xff]
          %v2150 = vld [vmem:[%s305 + $0xd0] sm:$0xff]
          %v2151 = vld [vmem:[%s305 + $0xd8] sm:$0xff]
          %v2152 = vld [vmem:[%s305 + $0xe0] sm:$0xff]
          %v2153 = vld [vmem:[%s305 + $0xe8] sm:$0xff]
          %v2154 = vld [vmem:[%s305 + $0xf0] sm:$0xff]
          %v2155 = vld [vmem:[%s305 + $0xf8] sm:$0xff]
          %v2156 = vld [vmem:[%s305 + $0x100] sm:$0xff]
          %v2157 = vld [vmem:[%s305 + $0x108] sm:$0xff]
          %v2158 = vld [vmem:[%s305 + $0x110] sm:$0xff]
          %v2159 = vld [vmem:[%s305 + $0x118] sm:$0xff]
          %v2160 = vld [vmem:[%s305 + $0x120] sm:$0xff]
          %v2161 = vld [vmem:[%s305 + $0x128] sm:$0xff]
          %v2162 = vld [vmem:[%s305 + $0x130] sm:$0xff]
          %v2163 = vld [vmem:[%s305 + $0x138] sm:$0xff]
          %v2164 = vld [vmem:[%s305 + $0x140] sm:$0xff]
          %v2165 = vld [vmem:[%s305 + $0x148] sm:$0xff]
          %v2166 = vld [vmem:[%s305 + $0x150] sm:$0xff]
          %v2167 = vld [vmem:[%s305 + $0x158] sm:$0xff]
          %v2168 = vld [vmem:[%s305 + $0x160] sm:$0xff]
          %v2169 = vld [vmem:[%s305 + $0x168] sm:$0xff]
          %v2170 = vld [vmem:[%s305 + $0x170] sm:$0xff]
          %v2171 = vld [vmem:[%s305 + $0x178] sm:$0xff]
          %v2172 = vld [vmem:[%s305 + $0x180] sm:$0xff]
          %v2173 = vld [vmem:[%s305 + $0x188] sm:$0xff]
          %v2174 = vld [vmem:[%s305 + $0x190] sm:$0xff]
          %v2175 = vld [vmem:[%s305 + $0x198] sm:$0xff]
          %v2176 = vld [vmem:[%s305 + $0x1a0] sm:$0xff]
          %v2177 = vld [vmem:[%s305 + $0x1a8] sm:$0xff]
          %v2178 = vld [vmem:[%s305 + $0x1b0] sm:$0xff]
          %v2179 = vld [vmem:[%s305 + $0x1b8] sm:$0xff]
          %v2180 = vld [vmem:[%s305 + $0x1c0] sm:$0xff]
          %v2181 = vld [vmem:[%s305 + $0x1c8] sm:$0xff]
          %v2182 = vld [vmem:[%s305 + $0x1d0] sm:$0xff]
          %v2183 = vld [vmem:[%s305 + $0x1d8] sm:$0xff]
          %v2184 = vld [vmem:[%s305 + $0x1e0] sm:$0xff]
          %v2185 = vld [vmem:[%s305 + $0x1e8] sm:$0xff]
          %v2186 = vld [vmem:[%s305 + $0x1f0] sm:$0xff]
          %v2187 = vld [vmem:[%s305 + $0x1f8] sm:$0xff]
          %v2188 = vmul.f32 %v2124, %v2124
          %v2189 = vmul.f32 %v2125, %v2125
          %v2190 = vmul.f32 %v2126, %v2126
          %v2191 = vmul.f32 %v2127, %v2127
          %v2192 = vmul.f32 %v2128, %v2128
          %v2193 = vmul.f32 %v2129, %v2129
          %v2194 = vmul.f32 %v2130, %v2130
          %v2195 = vmul.f32 %v2131, %v2131
          %v2196 = vmul.f32 %v2132, %v2132
          %v2197 = vmul.f32 %v2133, %v2133
          %v2198 = vmul.f32 %v2134, %v2134
          %v2199 = vmul.f32 %v2135, %v2135
          %v2200 = vmul.f32 %v2136, %v2136
          %v2201 = vmul.f32 %v2137, %v2137
          %v2202 = vmul.f32 %v2138, %v2138
          %v2203 = vmul.f32 %v2139, %v2139
          %v2204 = vmul.f32 %v2140, %v2140
          %v2205 = vmul.f32 %v2141, %v2141
          %v2206 = vmul.f32 %v2142, %v2142
          %v2207 = vmul.f32 %v2143, %v2143
          %v2208 = vmul.f32 %v2144, %v2144
          %v2209 = vmul.f32 %v2145, %v2145
          %v2210 = vmul.f32 %v2146, %v2146
          %v2211 = vmul.f32 %v2147, %v2147
          %v2212 = vmul.f32 %v2148, %v2148
          %v2213 = vmul.f32 %v2149, %v2149
          %v2214 = vmul.f32 %v2150, %v2150
          %v2215 = vmul.f32 %v2151, %v2151
          %v2216 = vmul.f32 %v2152, %v2152
          %v2217 = vmul.f32 %v2153, %v2153
          %v2218 = vmul.f32 %v2154, %v2154
          %v2219 = vmul.f32 %v2155, %v2155
          %v2220 = vmul.f32 %v2156, %v2156
          %v2221 = vmul.f32 %v2157, %v2157
          %v2222 = vmul.f32 %v2158, %v2158
          %v2223 = vmul.f32 %v2159, %v2159
          %v2224 = vmul.f32 %v2160, %v2160
          %v2225 = vmul.f32 %v2161, %v2161
          %v2226 = vmul.f32 %v2162, %v2162
          %v2227 = vmul.f32 %v2163, %v2163
          %v2228 = vmul.f32 %v2164, %v2164
          %v2229 = vmul.f32 %v2165, %v2165
          %v2230 = vmul.f32 %v2166, %v2166
          %v2231 = vmul.f32 %v2167, %v2167
          %v2232 = vmul.f32 %v2168, %v2168
          %v2233 = vmul.f32 %v2169, %v2169
          %v2234 = vmul.f32 %v2170, %v2170
          %v2235 = vmul.f32 %v2171, %v2171
          %v2236 = vmul.f32 %v2172, %v2172
          %v2237 = vmul.f32 %v2173, %v2173
          %v2238 = vmul.f32 %v2174, %v2174
          %v2239 = vmul.f32 %v2175, %v2175
          %v2240 = vmul.f32 %v2176, %v2176
          %v2241 = vmul.f32 %v2177, %v2177
          %v2242 = vmul.f32 %v2178, %v2178
          %v2243 = vmul.f32 %v2179, %v2179
          %v2244 = vmul.f32 %v2180, %v2180
          %v2245 = vmul.f32 %v2181, %v2181
          %v2246 = vmul.f32 %v2182, %v2182
          %v2247 = vmul.f32 %v2183, %v2183
          %v2248 = vmul.f32 %v2184, %v2184
          %v2249 = vmul.f32 %v2185, %v2185
          %v2250 = vmul.f32 %v2186, %v2186
          %v2251 = vmul.f32 %v2187, %v2187
          %2252 = vadd.xlane.f32.xlu0 %v2188
          %v2253 = vpop.xlane.xlu0 %2252
          %2254 = vadd.xlane.f32.xlu0 %v2189
          %v2255 = vpop.xlane.xlu0 %2254
          %2256 = vadd.xlane.f32.xlu0 %v2190
          %v2257 = vpop.xlane.xlu0 %2256
          %2258 = vadd.xlane.f32.xlu0 %v2191
          %v2259 = vpop.xlane.xlu0 %2258
          %2260 = vadd.xlane.f32.xlu0 %v2192
          %v2261 = vpop.xlane.xlu0 %2260
          %2262 = vadd.xlane.f32.xlu0 %v2193
          %v2263 = vpop.xlane.xlu0 %2262
          %2264 = vadd.xlane.f32.xlu0 %v2194
          %v2265 = vpop.xlane.xlu0 %2264
          %2266 = vadd.xlane.f32.xlu0 %v2195
          %v2267 = vpop.xlane.xlu0 %2266
          %2268 = vadd.xlane.f32.xlu0 %v2196
          %v2269 = vpop.xlane.xlu0 %2268
          %2270 = vadd.xlane.f32.xlu0 %v2197
          %v2271 = vpop.xlane.xlu0 %2270
          %2272 = vadd.xlane.f32.xlu0 %v2198
          %v2273 = vpop.xlane.xlu0 %2272
          %2274 = vadd.xlane.f32.xlu0 %v2199
          %v2275 = vpop.xlane.xlu0 %2274
          %2276 = vadd.xlane.f32.xlu0 %v2200
          %v2277 = vpop.xlane.xlu0 %2276
          %2278 = vadd.xlane.f32.xlu0 %v2201
          %v2279 = vpop.xlane.xlu0 %2278
          %2280 = vadd.xlane.f32.xlu0 %v2202
          %v2281 = vpop.xlane.xlu0 %2280
          %2282 = vadd.xlane.f32.xlu0 %v2203
          %v2283 = vpop.xlane.xlu0 %2282
          %2284 = vadd.xlane.f32.xlu0 %v2204
          %v2285 = vpop.xlane.xlu0 %2284
          %2286 = vadd.xlane.f32.xlu0 %v2205
          %v2287 = vpop.xlane.xlu0 %2286
          %2288 = vadd.xlane.f32.xlu0 %v2206
          %v2289 = vpop.xlane.xlu0 %2288
          %2290 = vadd.xlane.f32.xlu0 %v2207
          %v2291 = vpop.xlane.xlu0 %2290
          %2292 = vadd.xlane.f32.xlu0 %v2208
          %v2293 = vpop.xlane.xlu0 %2292
          %2294 = vadd.xlane.f32.xlu0 %v2209
          %v2295 = vpop.xlane.xlu0 %2294
          %2296 = vadd.xlane.f32.xlu0 %v2210
          %v2297 = vpop.xlane.xlu0 %2296
          %2298 = vadd.xlane.f32.xlu0 %v2211
          %v2299 = vpop.xlane.xlu0 %2298
          %2300 = vadd.xlane.f32.xlu0 %v2212
          %v2301 = vpop.xlane.xlu0 %2300
          %2302 = vadd.xlane.f32.xlu0 %v2213
          %v2303 = vpop.xlane.xlu0 %2302
          %2304 = vadd.xlane.f32.xlu0 %v2214
          %v2305 = vpop.xlane.xlu0 %2304
          %2306 = vadd.xlane.f32.xlu0 %v2215
          %v2307 = vpop.xlane.xlu0 %2306
          %2308 = vadd.xlane.f32.xlu0 %v2216
          %v2309 = vpop.xlane.xlu0 %2308
          %2310 = vadd.xlane.f32.xlu0 %v2217
          %v2311 = vpop.xlane.xlu0 %2310
          %2312 = vadd.xlane.f32.xlu0 %v2218
          %v2313 = vpop.xlane.xlu0 %2312
          %2314 = vadd.xlane.f32.xlu0 %v2219
          %v2315 = vpop.xlane.xlu0 %2314
          %2316 = vadd.xlane.f32.xlu0 %v2220
          %v2317 = vpop.xlane.xlu0 %2316
          %2318 = vadd.xlane.f32.xlu0 %v2221
          %v2319 = vpop.xlane.xlu0 %2318
          %2320 = vadd.xlane.f32.xlu0 %v2222
          %v2321 = vpop.xlane.xlu0 %2320
          %2322 = vadd.xlane.f32.xlu0 %v2223
          %v2323 = vpop.xlane.xlu0 %2322
          %2324 = vadd.xlane.f32.xlu0 %v2224
          %v2325 = vpop.xlane.xlu0 %2324
          %2326 = vadd.xlane.f32.xlu0 %v2225
          %v2327 = vpop.xlane.xlu0 %2326
          %2328 = vadd.xlane.f32.xlu0 %v2226
          %v2329 = vpop.xlane.xlu0 %2328
          %2330 = vadd.xlane.f32.xlu0 %v2227
          %v2331 = vpop.xlane.xlu0 %2330
          %2332 = vadd.xlane.f32.xlu0 %v2228
          %v2333 = vpop.xlane.xlu0 %2332
          %2334 = vadd.xlane.f32.xlu0 %v2229
          %v2335 = vpop.xlane.xlu0 %2334
          %2336 = vadd.xlane.f32.xlu0 %v2230
          %v2337 = vpop.xlane.xlu0 %2336
          %2338 = vadd.xlane.f32.xlu0 %v2231
          %v2339 = vpop.xlane.xlu0 %2338
          %2340 = vadd.xlane.f32.xlu0 %v2232
          %v2341 = vpop.xlane.xlu0 %2340
          %2342 = vadd.xlane.f32.xlu0 %v2233
          %v2343 = vpop.xlane.xlu0 %2342
          %2344 = vadd.xlane.f32.xlu0 %v2234
          %v2345 = vpop.xlane.xlu0 %2344
          %2346 = vadd.xlane.f32.xlu0 %v2235
          %v2347 = vpop.xlane.xlu0 %2346
          %2348 = vadd.xlane.f32.xlu0 %v2236
          %v2349 = vpop.xlane.xlu0 %2348
          %2350 = vadd.xlane.f32.xlu0 %v2237
          %v2351 = vpop.xlane.xlu0 %2350
          %2352 = vadd.xlane.f32.xlu0 %v2238
          %v2353 = vpop.xlane.xlu0 %2352
          %2354 = vadd.xlane.f32.xlu0 %v2239
          %v2355 = vpop.xlane.xlu0 %2354
          %2356 = vadd.xlane.f32.xlu0 %v2240
          %v2357 = vpop.xlane.xlu0 %2356
          %2358 = vadd.xlane.f32.xlu0 %v2241
          %v2359 = vpop.xlane.xlu0 %2358
          %2360 = vadd.xlane.f32.xlu0 %v2242
          %v2361 = vpop.xlane.xlu0 %2360
          %2362 = vadd.xlane.f32.xlu0 %v2243
          %v2363 = vpop.xlane.xlu0 %2362
          %2364 = vadd.xlane.f32.xlu0 %v2244
          %v2365 = vpop.xlane.xlu0 %2364
          %2366 = vadd.xlane.f32.xlu0 %v2245
          %v2367 = vpop.xlane.xlu0 %2366
          %2368 = vadd.xlane.f32.xlu0 %v2246
          %v2369 = vpop.xlane.xlu0 %2368
          %2370 = vadd.xlane.f32.xlu0 %v2247
          %v2371 = vpop.xlane.xlu0 %2370
          %2372 = vadd.xlane.f32.xlu0 %v2248
          %v2373 = vpop.xlane.xlu0 %2372
          %2374 = vadd.xlane.f32.xlu0 %v2249
          %v2375 = vpop.xlane.xlu0 %2374
          %2376 = vadd.xlane.f32.xlu0 %v2250
          %v2377 = vpop.xlane.xlu0 %2376
          %2378 = vadd.xlane.f32.xlu0 %v2251
          %v2379 = vpop.xlane.xlu0 %2378
          %v2380 = vrsqrt.pop %v2253
          %v2381 = vmul.f32 %v2253, %v2380
          %vm2382 = vcmp.eq.f32.partialorder %v2253, inf
          %v2383 = vsel %vm2382, %v2253, %v2381
          %vm2384 = vcmp.eq.f32.partialorder %v2253, 0.0
          %v2385 = vand.u32 %v2253, 2147483648
          %v2386 = vsel %vm2384, %v2385, %v2383
          %v2387 = vrsqrt.pop %v2255
          %v2388 = vmul.f32 %v2255, %v2387
          %vm2389 = vcmp.eq.f32.partialorder %v2255, inf
          %v2390 = vsel %vm2389, %v2255, %v2388
          %vm2391 = vcmp.eq.f32.partialorder %v2255, 0.0
          %v2392 = vand.u32 %v2255, 2147483648
          %v2393 = vsel %vm2391, %v2392, %v2390
          %v2394 = vrsqrt.pop %v2257
          %v2395 = vmul.f32 %v2257, %v2394
          %vm2396 = vcmp.eq.f32.partialorder %v2257, inf
          %v2397 = vsel %vm2396, %v2257, %v2395
          %vm2398 = vcmp.eq.f32.partialorder %v2257, 0.0
          %v2399 = vand.u32 %v2257, 2147483648
          %v2400 = vsel %vm2398, %v2399, %v2397
          %v2401 = vrsqrt.pop %v2259
          %v2402 = vmul.f32 %v2259, %v2401
          %vm2403 = vcmp.eq.f32.partialorder %v2259, inf
          %v2404 = vsel %vm2403, %v2259, %v2402
          %vm2405 = vcmp.eq.f32.partialorder %v2259, 0.0
          %v2406 = vand.u32 %v2259, 2147483648
          %v2407 = vsel %vm2405, %v2406, %v2404
          %v2408 = vrsqrt.pop %v2261
          %v2409 = vmul.f32 %v2261, %v2408
          %vm2410 = vcmp.eq.f32.partialorder %v2261, inf
          %v2411 = vsel %vm2410, %v2261, %v2409
          %vm2412 = vcmp.eq.f32.partialorder %v2261, 0.0
          %v2413 = vand.u32 %v2261, 2147483648
          %v2414 = vsel %vm2412, %v2413, %v2411
          %v2415 = vrsqrt.pop %v2263
          %v2416 = vmul.f32 %v2263, %v2415
          %vm2417 = vcmp.eq.f32.partialorder %v2263, inf
          %v2418 = vsel %vm2417, %v2263, %v2416
          %vm2419 = vcmp.eq.f32.partialorder %v2263, 0.0
          %v2420 = vand.u32 %v2263, 2147483648
          %v2421 = vsel %vm2419, %v2420, %v2418
          %v2422 = vrsqrt.pop %v2265
          %v2423 = vmul.f32 %v2265, %v2422
          %vm2424 = vcmp.eq.f32.partialorder %v2265, inf
          %v2425 = vsel %vm2424, %v2265, %v2423
          %vm2426 = vcmp.eq.f32.partialorder %v2265, 0.0
          %v2427 = vand.u32 %v2265, 2147483648
          %v2428 = vsel %vm2426, %v2427, %v2425
          %v2429 = vrsqrt.pop %v2267
          %v2430 = vmul.f32 %v2267, %v2429
          %vm2431 = vcmp.eq.f32.partialorder %v2267, inf
          %v2432 = vsel %vm2431, %v2267, %v2430
          %vm2433 = vcmp.eq.f32.partialorder %v2267, 0.0
          %v2434 = vand.u32 %v2267, 2147483648
          %v2435 = vsel %vm2433, %v2434, %v2432
          %v2436 = vrsqrt.pop %v2269
          %v2437 = vmul.f32 %v2269, %v2436
          %vm2438 = vcmp.eq.f32.partialorder %v2269, inf
          %v2439 = vsel %vm2438, %v2269, %v2437
          %vm2440 = vcmp.eq.f32.partialorder %v2269, 0.0
          %v2441 = vand.u32 %v2269, 2147483648
          %v2442 = vsel %vm2440, %v2441, %v2439
          %v2443 = vrsqrt.pop %v2271
          %v2444 = vmul.f32 %v2271, %v2443
          %vm2445 = vcmp.eq.f32.partialorder %v2271, inf
          %v2446 = vsel %vm2445, %v2271, %v2444
          %vm2447 = vcmp.eq.f32.partialorder %v2271, 0.0
          %v2448 = vand.u32 %v2271, 2147483648
          %v2449 = vsel %vm2447, %v2448, %v2446
          %v2450 = vrsqrt.pop %v2273
          %v2451 = vmul.f32 %v2273, %v2450
          %vm2452 = vcmp.eq.f32.partialorder %v2273, inf
          %v2453 = vsel %vm2452, %v2273, %v2451
          %vm2454 = vcmp.eq.f32.partialorder %v2273, 0.0
          %v2455 = vand.u32 %v2273, 2147483648
          %v2456 = vsel %vm2454, %v2455, %v2453
          %v2457 = vrsqrt.pop %v2275
          %v2458 = vmul.f32 %v2275, %v2457
          %vm2459 = vcmp.eq.f32.partialorder %v2275, inf
          %v2460 = vsel %vm2459, %v2275, %v2458
          %vm2461 = vcmp.eq.f32.partialorder %v2275, 0.0
          %v2462 = vand.u32 %v2275, 2147483648
          %v2463 = vsel %vm2461, %v2462, %v2460
          %v2464 = vrsqrt.pop %v2277
          %v2465 = vmul.f32 %v2277, %v2464
          %vm2466 = vcmp.eq.f32.partialorder %v2277, inf
          %v2467 = vsel %vm2466, %v2277, %v2465
          %vm2468 = vcmp.eq.f32.partialorder %v2277, 0.0
          %v2469 = vand.u32 %v2277, 2147483648
          %v2470 = vsel %vm2468, %v2469, %v2467
          %v2471 = vrsqrt.pop %v2279
          %v2472 = vmul.f32 %v2279, %v2471
          %vm2473 = vcmp.eq.f32.partialorder %v2279, inf
          %v2474 = vsel %vm2473, %v2279, %v2472
          %vm2475 = vcmp.eq.f32.partialorder %v2279, 0.0
          %v2476 = vand.u32 %v2279, 2147483648
          %v2477 = vsel %vm2475, %v2476, %v2474
          %v2478 = vrsqrt.pop %v2281
          %v2479 = vmul.f32 %v2281, %v2478
          %vm2480 = vcmp.eq.f32.partialorder %v2281, inf
          %v2481 = vsel %vm2480, %v2281, %v2479
          %vm2482 = vcmp.eq.f32.partialorder %v2281, 0.0
          %v2483 = vand.u32 %v2281, 2147483648
          %v2484 = vsel %vm2482, %v2483, %v2481
          %v2485 = vrsqrt.pop %v2283
          %v2486 = vmul.f32 %v2283, %v2485
          %vm2487 = vcmp.eq.f32.partialorder %v2283, inf
          %v2488 = vsel %vm2487, %v2283, %v2486
          %vm2489 = vcmp.eq.f32.partialorder %v2283, 0.0
          %v2490 = vand.u32 %v2283, 2147483648
          %v2491 = vsel %vm2489, %v2490, %v2488
          %v2492 = vrsqrt.pop %v2285
          %v2493 = vmul.f32 %v2285, %v2492
          %vm2494 = vcmp.eq.f32.partialorder %v2285, inf
          %v2495 = vsel %vm2494, %v2285, %v2493
          %vm2496 = vcmp.eq.f32.partialorder %v2285, 0.0
          %v2497 = vand.u32 %v2285, 2147483648
          %v2498 = vsel %vm2496, %v2497, %v2495
          %v2499 = vrsqrt.pop %v2287
          %v2500 = vmul.f32 %v2287, %v2499
          %vm2501 = vcmp.eq.f32.partialorder %v2287, inf
          %v2502 = vsel %vm2501, %v2287, %v2500
          %vm2503 = vcmp.eq.f32.partialorder %v2287, 0.0
          %v2504 = vand.u32 %v2287, 2147483648
          %v2505 = vsel %vm2503, %v2504, %v2502
          %v2506 = vrsqrt.pop %v2289
          %v2507 = vmul.f32 %v2289, %v2506
          %vm2508 = vcmp.eq.f32.partialorder %v2289, inf
          %v2509 = vsel %vm2508, %v2289, %v2507
          %vm2510 = vcmp.eq.f32.partialorder %v2289, 0.0
          %v2511 = vand.u32 %v2289, 2147483648
          %v2512 = vsel %vm2510, %v2511, %v2509
          %v2513 = vrsqrt.pop %v2291
          %v2514 = vmul.f32 %v2291, %v2513
          %vm2515 = vcmp.eq.f32.partialorder %v2291, inf
          %v2516 = vsel %vm2515, %v2291, %v2514
          %vm2517 = vcmp.eq.f32.partialorder %v2291, 0.0
          %v2518 = vand.u32 %v2291, 2147483648
          %v2519 = vsel %vm2517, %v2518, %v2516
          %v2520 = vrsqrt.pop %v2293
          %v2521 = vmul.f32 %v2293, %v2520
          %vm2522 = vcmp.eq.f32.partialorder %v2293, inf
          %v2523 = vsel %vm2522, %v2293, %v2521
          %vm2524 = vcmp.eq.f32.partialorder %v2293, 0.0
          %v2525 = vand.u32 %v2293, 2147483648
          %v2526 = vsel %vm2524, %v2525, %v2523
          %v2527 = vrsqrt.pop %v2295
          %v2528 = vmul.f32 %v2295, %v2527
          %vm2529 = vcmp.eq.f32.partialorder %v2295, inf
          %v2530 = vsel %vm2529, %v2295, %v2528
          %vm2531 = vcmp.eq.f32.partialorder %v2295, 0.0
          %v2532 = vand.u32 %v2295, 2147483648
          %v2533 = vsel %vm2531, %v2532, %v2530
          %v2534 = vrsqrt.pop %v2297
          %v2535 = vmul.f32 %v2297, %v2534
          %vm2536 = vcmp.eq.f32.partialorder %v2297, inf
          %v2537 = vsel %vm2536, %v2297, %v2535
          %vm2538 = vcmp.eq.f32.partialorder %v2297, 0.0
          %v2539 = vand.u32 %v2297, 2147483648
          %v2540 = vsel %vm2538, %v2539, %v2537
          %v2541 = vrsqrt.pop %v2299
          %v2542 = vmul.f32 %v2299, %v2541
          %vm2543 = vcmp.eq.f32.partialorder %v2299, inf
          %v2544 = vsel %vm2543, %v2299, %v2542
          %vm2545 = vcmp.eq.f32.partialorder %v2299, 0.0
          %v2546 = vand.u32 %v2299, 2147483648
          %v2547 = vsel %vm2545, %v2546, %v2544
          %v2548 = vrsqrt.pop %v2301
          %v2549 = vmul.f32 %v2301, %v2548
          %vm2550 = vcmp.eq.f32.partialorder %v2301, inf
          %v2551 = vsel %vm2550, %v2301, %v2549
          %vm2552 = vcmp.eq.f32.partialorder %v2301, 0.0
          %v2553 = vand.u32 %v2301, 2147483648
          %v2554 = vsel %vm2552, %v2553, %v2551
          %v2555 = vrsqrt.pop %v2303
          %v2556 = vmul.f32 %v2303, %v2555
          %vm2557 = vcmp.eq.f32.partialorder %v2303, inf
          %v2558 = vsel %vm2557, %v2303, %v2556
          %vm2559 = vcmp.eq.f32.partialorder %v2303, 0.0
          %v2560 = vand.u32 %v2303, 2147483648
          %v2561 = vsel %vm2559, %v2560, %v2558
          %v2562 = vrsqrt.pop %v2305
          %v2563 = vmul.f32 %v2305, %v2562
          %vm2564 = vcmp.eq.f32.partialorder %v2305, inf
          %v2565 = vsel %vm2564, %v2305, %v2563
          %vm2566 = vcmp.eq.f32.partialorder %v2305, 0.0
          %v2567 = vand.u32 %v2305, 2147483648
          %v2568 = vsel %vm2566, %v2567, %v2565
          %v2569 = vrsqrt.pop %v2307
          %v2570 = vmul.f32 %v2307, %v2569
          %vm2571 = vcmp.eq.f32.partialorder %v2307, inf
          %v2572 = vsel %vm2571, %v2307, %v2570
          %vm2573 = vcmp.eq.f32.partialorder %v2307, 0.0
          %v2574 = vand.u32 %v2307, 2147483648
          %v2575 = vsel %vm2573, %v2574, %v2572
          %v2576 = vrsqrt.pop %v2309
          %v2577 = vmul.f32 %v2309, %v2576
          %vm2578 = vcmp.eq.f32.partialorder %v2309, inf
          %v2579 = vsel %vm2578, %v2309, %v2577
          %vm2580 = vcmp.eq.f32.partialorder %v2309, 0.0
          %v2581 = vand.u32 %v2309, 2147483648
          %v2582 = vsel %vm2580, %v2581, %v2579
          %v2583 = vrsqrt.pop %v2311
          %v2584 = vmul.f32 %v2311, %v2583
          %vm2585 = vcmp.eq.f32.partialorder %v2311, inf
          %v2586 = vsel %vm2585, %v2311, %v2584
          %vm2587 = vcmp.eq.f32.partialorder %v2311, 0.0
          %v2588 = vand.u32 %v2311, 2147483648
          %v2589 = vsel %vm2587, %v2588, %v2586
          %v2590 = vrsqrt.pop %v2313
          %v2591 = vmul.f32 %v2313, %v2590
          %vm2592 = vcmp.eq.f32.partialorder %v2313, inf
          %v2593 = vsel %vm2592, %v2313, %v2591
          %vm2594 = vcmp.eq.f32.partialorder %v2313, 0.0
          %v2595 = vand.u32 %v2313, 2147483648
          %v2596 = vsel %vm2594, %v2595, %v2593
          %v2597 = vrsqrt.pop %v2315
          %v2598 = vmul.f32 %v2315, %v2597
          %vm2599 = vcmp.eq.f32.partialorder %v2315, inf
          %v2600 = vsel %vm2599, %v2315, %v2598
          %vm2601 = vcmp.eq.f32.partialorder %v2315, 0.0
          %v2602 = vand.u32 %v2315, 2147483648
          %v2603 = vsel %vm2601, %v2602, %v2600
          %v2604 = vrsqrt.pop %v2317
          %v2605 = vmul.f32 %v2317, %v2604
          %vm2606 = vcmp.eq.f32.partialorder %v2317, inf
          %v2607 = vsel %vm2606, %v2317, %v2605
          %vm2608 = vcmp.eq.f32.partialorder %v2317, 0.0
          %v2609 = vand.u32 %v2317, 2147483648
          %v2610 = vsel %vm2608, %v2609, %v2607
          %v2611 = vrsqrt.pop %v2319
          %v2612 = vmul.f32 %v2319, %v2611
          %vm2613 = vcmp.eq.f32.partialorder %v2319, inf
          %v2614 = vsel %vm2613, %v2319, %v2612
          %vm2615 = vcmp.eq.f32.partialorder %v2319, 0.0
          %v2616 = vand.u32 %v2319, 2147483648
          %v2617 = vsel %vm2615, %v2616, %v2614
          %v2618 = vrsqrt.pop %v2321
          %v2619 = vmul.f32 %v2321, %v2618
          %vm2620 = vcmp.eq.f32.partialorder %v2321, inf
          %v2621 = vsel %vm2620, %v2321, %v2619
          %vm2622 = vcmp.eq.f32.partialorder %v2321, 0.0
          %v2623 = vand.u32 %v2321, 2147483648
          %v2624 = vsel %vm2622, %v2623, %v2621
          %v2625 = vrsqrt.pop %v2323
          %v2626 = vmul.f32 %v2323, %v2625
          %vm2627 = vcmp.eq.f32.partialorder %v2323, inf
          %v2628 = vsel %vm2627, %v2323, %v2626
          %vm2629 = vcmp.eq.f32.partialorder %v2323, 0.0
          %v2630 = vand.u32 %v2323, 2147483648
          %v2631 = vsel %vm2629, %v2630, %v2628
          %v2632 = vrsqrt.pop %v2325
          %v2633 = vmul.f32 %v2325, %v2632
          %vm2634 = vcmp.eq.f32.partialorder %v2325, inf
          %v2635 = vsel %vm2634, %v2325, %v2633
          %vm2636 = vcmp.eq.f32.partialorder %v2325, 0.0
          %v2637 = vand.u32 %v2325, 2147483648
          %v2638 = vsel %vm2636, %v2637, %v2635
          %v2639 = vrsqrt.pop %v2327
          %v2640 = vmul.f32 %v2327, %v2639
          %vm2641 = vcmp.eq.f32.partialorder %v2327, inf
          %v2642 = vsel %vm2641, %v2327, %v2640
          %vm2643 = vcmp.eq.f32.partialorder %v2327, 0.0
          %v2644 = vand.u32 %v2327, 2147483648
          %v2645 = vsel %vm2643, %v2644, %v2642
          %v2646 = vrsqrt.pop %v2329
          %v2647 = vmul.f32 %v2329, %v2646
          %vm2648 = vcmp.eq.f32.partialorder %v2329, inf
          %v2649 = vsel %vm2648, %v2329, %v2647
          %vm2650 = vcmp.eq.f32.partialorder %v2329, 0.0
          %v2651 = vand.u32 %v2329, 2147483648
          %v2652 = vsel %vm2650, %v2651, %v2649
          %v2653 = vrsqrt.pop %v2331
          %v2654 = vmul.f32 %v2331, %v2653
          %vm2655 = vcmp.eq.f32.partialorder %v2331, inf
          %v2656 = vsel %vm2655, %v2331, %v2654
          %vm2657 = vcmp.eq.f32.partialorder %v2331, 0.0
          %v2658 = vand.u32 %v2331, 2147483648
          %v2659 = vsel %vm2657, %v2658, %v2656
          %v2660 = vrsqrt.pop %v2333
          %v2661 = vmul.f32 %v2333, %v2660
          %vm2662 = vcmp.eq.f32.partialorder %v2333, inf
          %v2663 = vsel %vm2662, %v2333, %v2661
          %vm2664 = vcmp.eq.f32.partialorder %v2333, 0.0
          %v2665 = vand.u32 %v2333, 2147483648
          %v2666 = vsel %vm2664, %v2665, %v2663
          %v2667 = vrsqrt.pop %v2335
          %v2668 = vmul.f32 %v2335, %v2667
          %vm2669 = vcmp.eq.f32.partialorder %v2335, inf
          %v2670 = vsel %vm2669, %v2335, %v2668
          %vm2671 = vcmp.eq.f32.partialorder %v2335, 0.0
          %v2672 = vand.u32 %v2335, 2147483648
          %v2673 = vsel %vm2671, %v2672, %v2670
          %v2674 = vrsqrt.pop %v2337
          %v2675 = vmul.f32 %v2337, %v2674
          %vm2676 = vcmp.eq.f32.partialorder %v2337, inf
          %v2677 = vsel %vm2676, %v2337, %v2675
          %vm2678 = vcmp.eq.f32.partialorder %v2337, 0.0
          %v2679 = vand.u32 %v2337, 2147483648
          %v2680 = vsel %vm2678, %v2679, %v2677
          %v2681 = vrsqrt.pop %v2339
          %v2682 = vmul.f32 %v2339, %v2681
          %vm2683 = vcmp.eq.f32.partialorder %v2339, inf
          %v2684 = vsel %vm2683, %v2339, %v2682
          %vm2685 = vcmp.eq.f32.partialorder %v2339, 0.0
          %v2686 = vand.u32 %v2339, 2147483648
          %v2687 = vsel %vm2685, %v2686, %v2684
          %v2688 = vrsqrt.pop %v2341
          %v2689 = vmul.f32 %v2341, %v2688
          %vm2690 = vcmp.eq.f32.partialorder %v2341, inf
          %v2691 = vsel %vm2690, %v2341, %v2689
          %vm2692 = vcmp.eq.f32.partialorder %v2341, 0.0
          %v2693 = vand.u32 %v2341, 2147483648
          %v2694 = vsel %vm2692, %v2693, %v2691
          %v2695 = vrsqrt.pop %v2343
          %v2696 = vmul.f32 %v2343, %v2695
          %vm2697 = vcmp.eq.f32.partialorder %v2343, inf
          %v2698 = vsel %vm2697, %v2343, %v2696
          %vm2699 = vcmp.eq.f32.partialorder %v2343, 0.0
          %v2700 = vand.u32 %v2343, 2147483648
          %v2701 = vsel %vm2699, %v2700, %v2698
          %v2702 = vrsqrt.pop %v2345
          %v2703 = vmul.f32 %v2345, %v2702
          %vm2704 = vcmp.eq.f32.partialorder %v2345, inf
          %v2705 = vsel %vm2704, %v2345, %v2703
          %vm2706 = vcmp.eq.f32.partialorder %v2345, 0.0
          %v2707 = vand.u32 %v2345, 2147483648
          %v2708 = vsel %vm2706, %v2707, %v2705
          %v2709 = vrsqrt.pop %v2347
          %v2710 = vmul.f32 %v2347, %v2709
          %vm2711 = vcmp.eq.f32.partialorder %v2347, inf
          %v2712 = vsel %vm2711, %v2347, %v2710
          %vm2713 = vcmp.eq.f32.partialorder %v2347, 0.0
          %v2714 = vand.u32 %v2347, 2147483648
          %v2715 = vsel %vm2713, %v2714, %v2712
          %v2716 = vrsqrt.pop %v2349
          %v2717 = vmul.f32 %v2349, %v2716
          %vm2718 = vcmp.eq.f32.partialorder %v2349, inf
          %v2719 = vsel %vm2718, %v2349, %v2717
          %vm2720 = vcmp.eq.f32.partialorder %v2349, 0.0
          %v2721 = vand.u32 %v2349, 2147483648
          %v2722 = vsel %vm2720, %v2721, %v2719
          %v2723 = vrsqrt.pop %v2351
          %v2724 = vmul.f32 %v2351, %v2723
          %vm2725 = vcmp.eq.f32.partialorder %v2351, inf
          %v2726 = vsel %vm2725, %v2351, %v2724
          %vm2727 = vcmp.eq.f32.partialorder %v2351, 0.0
          %v2728 = vand.u32 %v2351, 2147483648
          %v2729 = vsel %vm2727, %v2728, %v2726
          %v2730 = vrsqrt.pop %v2353
          %v2731 = vmul.f32 %v2353, %v2730
          %vm2732 = vcmp.eq.f32.partialorder %v2353, inf
          %v2733 = vsel %vm2732, %v2353, %v2731
          %vm2734 = vcmp.eq.f32.partialorder %v2353, 0.0
          %v2735 = vand.u32 %v2353, 2147483648
          %v2736 = vsel %vm2734, %v2735, %v2733
          %v2737 = vrsqrt.pop %v2355
          %v2738 = vmul.f32 %v2355, %v2737
          %vm2739 = vcmp.eq.f32.partialorder %v2355, inf
          %v2740 = vsel %vm2739, %v2355, %v2738
          %vm2741 = vcmp.eq.f32.partialorder %v2355, 0.0
          %v2742 = vand.u32 %v2355, 2147483648
          %v2743 = vsel %vm2741, %v2742, %v2740
          %v2744 = vrsqrt.pop %v2357
          %v2745 = vmul.f32 %v2357, %v2744
          %vm2746 = vcmp.eq.f32.partialorder %v2357, inf
          %v2747 = vsel %vm2746, %v2357, %v2745
          %vm2748 = vcmp.eq.f32.partialorder %v2357, 0.0
          %v2749 = vand.u32 %v2357, 2147483648
          %v2750 = vsel %vm2748, %v2749, %v2747
          %v2751 = vrsqrt.pop %v2359
          %v2752 = vmul.f32 %v2359, %v2751
          %vm2753 = vcmp.eq.f32.partialorder %v2359, inf
          %v2754 = vsel %vm2753, %v2359, %v2752
          %vm2755 = vcmp.eq.f32.partialorder %v2359, 0.0
          %v2756 = vand.u32 %v2359, 2147483648
          %v2757 = vsel %vm2755, %v2756, %v2754
          %v2758 = vrsqrt.pop %v2361
          %v2759 = vmul.f32 %v2361, %v2758
          %vm2760 = vcmp.eq.f32.partialorder %v2361, inf
          %v2761 = vsel %vm2760, %v2361, %v2759
          %vm2762 = vcmp.eq.f32.partialorder %v2361, 0.0
          %v2763 = vand.u32 %v2361, 2147483648
          %v2764 = vsel %vm2762, %v2763, %v2761
          %v2765 = vrsqrt.pop %v2363
          %v2766 = vmul.f32 %v2363, %v2765
          %vm2767 = vcmp.eq.f32.partialorder %v2363, inf
          %v2768 = vsel %vm2767, %v2363, %v2766
          %vm2769 = vcmp.eq.f32.partialorder %v2363, 0.0
          %v2770 = vand.u32 %v2363, 2147483648
          %v2771 = vsel %vm2769, %v2770, %v2768
          %v2772 = vrsqrt.pop %v2365
          %v2773 = vmul.f32 %v2365, %v2772
          %vm2774 = vcmp.eq.f32.partialorder %v2365, inf
          %v2775 = vsel %vm2774, %v2365, %v2773
          %vm2776 = vcmp.eq.f32.partialorder %v2365, 0.0
          %v2777 = vand.u32 %v2365, 2147483648
          %v2778 = vsel %vm2776, %v2777, %v2775
          %v2779 = vrsqrt.pop %v2367
          %v2780 = vmul.f32 %v2367, %v2779
          %vm2781 = vcmp.eq.f32.partialorder %v2367, inf
          %v2782 = vsel %vm2781, %v2367, %v2780
          %vm2783 = vcmp.eq.f32.partialorder %v2367, 0.0
          %v2784 = vand.u32 %v2367, 2147483648
          %v2785 = vsel %vm2783, %v2784, %v2782
          %v2786 = vrsqrt.pop %v2369
          %v2787 = vmul.f32 %v2369, %v2786
          %vm2788 = vcmp.eq.f32.partialorder %v2369, inf
          %v2789 = vsel %vm2788, %v2369, %v2787
          %vm2790 = vcmp.eq.f32.partialorder %v2369, 0.0
          %v2791 = vand.u32 %v2369, 2147483648
          %v2792 = vsel %vm2790, %v2791, %v2789
          %v2793 = vrsqrt.pop %v2371
          %v2794 = vmul.f32 %v2371, %v2793
          %vm2795 = vcmp.eq.f32.partialorder %v2371, inf
          %v2796 = vsel %vm2795, %v2371, %v2794
          %vm2797 = vcmp.eq.f32.partialorder %v2371, 0.0
          %v2798 = vand.u32 %v2371, 2147483648
          %v2799 = vsel %vm2797, %v2798, %v2796
          %v2800 = vrsqrt.pop %v2373
          %v2801 = vmul.f32 %v2373, %v2800
          %vm2802 = vcmp.eq.f32.partialorder %v2373, inf
          %v2803 = vsel %vm2802, %v2373, %v2801
          %vm2804 = vcmp.eq.f32.partialorder %v2373, 0.0
          %v2805 = vand.u32 %v2373, 2147483648
          %v2806 = vsel %vm2804, %v2805, %v2803
          %v2807 = vrsqrt.pop %v2375
          %v2808 = vmul.f32 %v2375, %v2807
          %vm2809 = vcmp.eq.f32.partialorder %v2375, inf
          %v2810 = vsel %vm2809, %v2375, %v2808
          %vm2811 = vcmp.eq.f32.partialorder %v2375, 0.0
          %v2812 = vand.u32 %v2375, 2147483648
          %v2813 = vsel %vm2811, %v2812, %v2810
          %v2814 = vrsqrt.pop %v2377
          %v2815 = vmul.f32 %v2377, %v2814
          %vm2816 = vcmp.eq.f32.partialorder %v2377, inf
          %v2817 = vsel %vm2816, %v2377, %v2815
          %vm2818 = vcmp.eq.f32.partialorder %v2377, 0.0
          %v2819 = vand.u32 %v2377, 2147483648
          %v2820 = vsel %vm2818, %v2819, %v2817
          %v2821 = vrsqrt.pop %v2379
          %v2822 = vmul.f32 %v2379, %v2821
          %vm2823 = vcmp.eq.f32.partialorder %v2379, inf
          %v2824 = vsel %vm2823, %v2379, %v2822
          %vm2825 = vcmp.eq.f32.partialorder %v2379, 0.0
          %v2826 = vand.u32 %v2379, 2147483648
          %v2827 = vsel %vm2825, %v2826, %v2824
          %v2828 = vld [vmem:[#allocation4] sm:$0xff]
          %v2829 = vld [vmem:[#allocation4 + $0x8] sm:$0xff]
          %v2830 = vld [vmem:[#allocation4 + $0x10] sm:$0xff]
          %v2831 = vld [vmem:[#allocation4 + $0x18] sm:$0xff]
          %v2832 = vld [vmem:[#allocation4 + $0x20] sm:$0xff]
          %v2833 = vld [vmem:[#allocation4 + $0x28] sm:$0xff]
          %v2834 = vld [vmem:[#allocation4 + $0x30] sm:$0xff]
          %v2835 = vld [vmem:[#allocation4 + $0x38] sm:$0xff]
          %v2836 = vld [vmem:[#allocation4 + $0x40] sm:$0xff]
          %v2837 = vld [vmem:[#allocation4 + $0x48] sm:$0xff]
          %v2838 = vld [vmem:[#allocation4 + $0x50] sm:$0xff]
          %v2839 = vld [vmem:[#allocation4 + $0x58] sm:$0xff]
          %v2840 = vld [vmem:[#allocation4 + $0x60] sm:$0xff]
          %v2841 = vld [vmem:[#allocation4 + $0x68] sm:$0xff]
          %v2842 = vld [vmem:[#allocation4 + $0x70] sm:$0xff]
          %v2843 = vld [vmem:[#allocation4 + $0x78] sm:$0xff]
          %v2844 = vld [vmem:[#allocation4 + $0x80] sm:$0xff]
          %v2845 = vld [vmem:[#allocation4 + $0x88] sm:$0xff]
          %v2846 = vld [vmem:[#allocation4 + $0x90] sm:$0xff]
          %v2847 = vld [vmem:[#allocation4 + $0x98] sm:$0xff]
          %v2848 = vld [vmem:[#allocation4 + $0xa0] sm:$0xff]
          %v2849 = vld [vmem:[#allocation4 + $0xa8] sm:$0xff]
          %v2850 = vld [vmem:[#allocation4 + $0xb0] sm:$0xff]
          %v2851 = vld [vmem:[#allocation4 + $0xb8] sm:$0xff]
          %v2852 = vld [vmem:[#allocation4 + $0xc0] sm:$0xff]
          %v2853 = vld [vmem:[#allocation4 + $0xc8] sm:$0xff]
          %v2854 = vld [vmem:[#allocation4 + $0xd0] sm:$0xff]
          %v2855 = vld [vmem:[#allocation4 + $0xd8] sm:$0xff]
          %v2856 = vld [vmem:[#allocation4 + $0xe0] sm:$0xff]
          %v2857 = vld [vmem:[#allocation4 + $0xe8] sm:$0xff]
          %v2858 = vld [vmem:[#allocation4 + $0xf0] sm:$0xff]
          %v2859 = vld [vmem:[#allocation4 + $0xf8] sm:$0xff]
          %v2860 = vld [vmem:[#allocation4 + $0x100] sm:$0xff]
          %v2861 = vld [vmem:[#allocation4 + $0x108] sm:$0xff]
          %v2862 = vld [vmem:[#allocation4 + $0x110] sm:$0xff]
          %v2863 = vld [vmem:[#allocation4 + $0x118] sm:$0xff]
          %v2864 = vld [vmem:[#allocation4 + $0x120] sm:$0xff]
          %v2865 = vld [vmem:[#allocation4 + $0x128] sm:$0xff]
          %v2866 = vld [vmem:[#allocation4 + $0x130] sm:$0xff]
          %v2867 = vld [vmem:[#allocation4 + $0x138] sm:$0xff]
          %v2868 = vld [vmem:[#allocation4 + $0x140] sm:$0xff]
          %v2869 = vld [vmem:[#allocation4 + $0x148] sm:$0xff]
          %v2870 = vld [vmem:[#allocation4 + $0x150] sm:$0xff]
          %v2871 = vld [vmem:[#allocation4 + $0x158] sm:$0xff]
          %v2872 = vld [vmem:[#allocation4 + $0x160] sm:$0xff]
          %v2873 = vld [vmem:[#allocation4 + $0x168] sm:$0xff]
          %v2874 = vld [vmem:[#allocation4 + $0x170] sm:$0xff]
          %v2875 = vld [vmem:[#allocation4 + $0x178] sm:$0xff]
          %v2876 = vld [vmem:[#allocation4 + $0x180] sm:$0xff]
          %v2877 = vld [vmem:[#allocation4 + $0x188] sm:$0xff]
          %v2878 = vld [vmem:[#allocation4 + $0x190] sm:$0xff]
          %v2879 = vld [vmem:[#allocation4 + $0x198] sm:$0xff]
          %v2880 = vld [vmem:[#allocation4 + $0x1a0] sm:$0xff]
          %v2881 = vld [vmem:[#allocation4 + $0x1a8] sm:$0xff]
          %v2882 = vld [vmem:[#allocation4 + $0x1b0] sm:$0xff]
          %v2883 = vld [vmem:[#allocation4 + $0x1b8] sm:$0xff]
          %v2884 = vld [vmem:[#allocation4 + $0x1c0] sm:$0xff]
          %v2885 = vld [vmem:[#allocation4 + $0x1c8] sm:$0xff]
          %v2886 = vld [vmem:[#allocation4 + $0x1d0] sm:$0xff]
          %v2887 = vld [vmem:[#allocation4 + $0x1d8] sm:$0xff]
          %v2888 = vld [vmem:[#allocation4 + $0x1e0] sm:$0xff]
          %v2889 = vld [vmem:[#allocation4 + $0x1e8] sm:$0xff]
          %v2890 = vld [vmem:[#allocation4 + $0x1f0] sm:$0xff]
          %v2891 = vld [vmem:[#allocation4 + $0x1f8] sm:$0xff]
          %v2892 = vsub.f32 %v2386, 1.0
          %v2893 = vsub.f32 %v2393, 1.0
          %v2894 = vsub.f32 %v2400, 1.0
          %v2895 = vsub.f32 %v2407, 1.0
          %v2896 = vsub.f32 %v2414, 1.0
          %v2897 = vsub.f32 %v2421, 1.0
          %v2898 = vsub.f32 %v2428, 1.0
          %v2899 = vsub.f32 %v2435, 1.0
          %v2900 = vsub.f32 %v2442, 1.0
          %v2901 = vsub.f32 %v2449, 1.0
          %v2902 = vsub.f32 %v2456, 1.0
          %v2903 = vsub.f32 %v2463, 1.0
          %v2904 = vsub.f32 %v2470, 1.0
          %v2905 = vsub.f32 %v2477, 1.0
          %v2906 = vsub.f32 %v2484, 1.0
          %v2907 = vsub.f32 %v2491, 1.0
          %v2908 = vsub.f32 %v2498, 1.0
          %v2909 = vsub.f32 %v2505, 1.0
          %v2910 = vsub.f32 %v2512, 1.0
          %v2911 = vsub.f32 %v2519, 1.0
          %v2912 = vsub.f32 %v2526, 1.0
          %v2913 = vsub.f32 %v2533, 1.0
          %v2914 = vsub.f32 %v2540, 1.0
          %v2915 = vsub.f32 %v2547, 1.0
          %v2916 = vsub.f32 %v2554, 1.0
          %v2917 = vsub.f32 %v2561, 1.0
          %v2918 = vsub.f32 %v2568, 1.0
          %v2919 = vsub.f32 %v2575, 1.0
          %v2920 = vsub.f32 %v2582, 1.0
          %v2921 = vsub.f32 %v2589, 1.0
          %v2922 = vsub.f32 %v2596, 1.0
          %v2923 = vsub.f32 %v2603, 1.0
          %v2924 = vsub.f32 %v2610, 1.0
          %v2925 = vsub.f32 %v2617, 1.0
          %v2926 = vsub.f32 %v2624, 1.0
          %v2927 = vsub.f32 %v2631, 1.0
          %v2928 = vsub.f32 %v2638, 1.0
          %v2929 = vsub.f32 %v2645, 1.0
          %v2930 = vsub.f32 %v2652, 1.0
          %v2931 = vsub.f32 %v2659, 1.0
          %v2932 = vsub.f32 %v2666, 1.0
          %v2933 = vsub.f32 %v2673, 1.0
          %v2934 = vsub.f32 %v2680, 1.0
          %v2935 = vsub.f32 %v2687, 1.0
          %v2936 = vsub.f32 %v2694, 1.0
          %v2937 = vsub.f32 %v2701, 1.0
          %v2938 = vsub.f32 %v2708, 1.0
          %v2939 = vsub.f32 %v2715, 1.0
          %v2940 = vsub.f32 %v2722, 1.0
          %v2941 = vsub.f32 %v2729, 1.0
          %v2942 = vsub.f32 %v2736, 1.0
          %v2943 = vsub.f32 %v2743, 1.0
          %v2944 = vsub.f32 %v2750, 1.0
          %v2945 = vsub.f32 %v2757, 1.0
          %v2946 = vsub.f32 %v2764, 1.0
          %v2947 = vsub.f32 %v2771, 1.0
          %v2948 = vsub.f32 %v2778, 1.0
          %v2949 = vsub.f32 %v2785, 1.0
          %v2950 = vsub.f32 %v2792, 1.0
          %v2951 = vsub.f32 %v2799, 1.0
          %v2952 = vsub.f32 %v2806, 1.0
          %v2953 = vsub.f32 %v2813, 1.0
          %v2954 = vsub.f32 %v2820, 1.0
          %v2955 = vsub.f32 %v2827, 1.0
          %v2956 = vmax.f32 %v2892, 0.0
          %v2957 = vmax.f32 %v2893, 0.0
          %v2958 = vmax.f32 %v2894, 0.0
          %v2959 = vmax.f32 %v2895, 0.0
          %v2960 = vmax.f32 %v2896, 0.0
          %v2961 = vmax.f32 %v2897, 0.0
          %v2962 = vmax.f32 %v2898, 0.0
          %v2963 = vmax.f32 %v2899, 0.0
          %v2964 = vmax.f32 %v2900, 0.0
          %v2965 = vmax.f32 %v2901, 0.0
          %v2966 = vmax.f32 %v2902, 0.0
          %v2967 = vmax.f32 %v2903, 0.0
          %v2968 = vmax.f32 %v2904, 0.0
          %v2969 = vmax.f32 %v2905, 0.0
          %v2970 = vmax.f32 %v2906, 0.0
          %v2971 = vmax.f32 %v2907, 0.0
          %v2972 = vmax.f32 %v2908, 0.0
          %v2973 = vmax.f32 %v2909, 0.0
          %v2974 = vmax.f32 %v2910, 0.0
          %v2975 = vmax.f32 %v2911, 0.0
          %v2976 = vmax.f32 %v2912, 0.0
          %v2977 = vmax.f32 %v2913, 0.0
          %v2978 = vmax.f32 %v2914, 0.0
          %v2979 = vmax.f32 %v2915, 0.0
          %v2980 = vmax.f32 %v2916, 0.0
          %v2981 = vmax.f32 %v2917, 0.0
          %v2982 = vmax.f32 %v2918, 0.0
          %v2983 = vmax.f32 %v2919, 0.0
          %v2984 = vmax.f32 %v2920, 0.0
          %v2985 = vmax.f32 %v2921, 0.0
          %v2986 = vmax.f32 %v2922, 0.0
          %v2987 = vmax.f32 %v2923, 0.0
          %v2988 = vmax.f32 %v2924, 0.0
          %v2989 = vmax.f32 %v2925, 0.0
          %v2990 = vmax.f32 %v2926, 0.0
          %v2991 = vmax.f32 %v2927, 0.0
          %v2992 = vmax.f32 %v2928, 0.0
          %v2993 = vmax.f32 %v2929, 0.0
          %v2994 = vmax.f32 %v2930, 0.0
          %v2995 = vmax.f32 %v2931, 0.0
          %v2996 = vmax.f32 %v2932, 0.0
          %v2997 = vmax.f32 %v2933, 0.0
          %v2998 = vmax.f32 %v2934, 0.0
          %v2999 = vmax.f32 %v2935, 0.0
          %v3000 = vmax.f32 %v2936, 0.0
          %v3001 = vmax.f32 %v2937, 0.0
          %v3002 = vmax.f32 %v2938, 0.0
          %v3003 = vmax.f32 %v2939, 0.0
          %v3004 = vmax.f32 %v2940, 0.0
          %v3005 = vmax.f32 %v2941, 0.0
          %v3006 = vmax.f32 %v2942, 0.0
          %v3007 = vmax.f32 %v2943, 0.0
          %v3008 = vmax.f32 %v2944, 0.0
          %v3009 = vmax.f32 %v2945, 0.0
          %v3010 = vmax.f32 %v2946, 0.0
          %v3011 = vmax.f32 %v2947, 0.0
          %v3012 = vmax.f32 %v2948, 0.0
          %v3013 = vmax.f32 %v2949, 0.0
          %v3014 = vmax.f32 %v2950, 0.0
          %v3015 = vmax.f32 %v2951, 0.0
          %v3016 = vmax.f32 %v2952, 0.0
          %v3017 = vmax.f32 %v2953, 0.0
          %v3018 = vmax.f32 %v2954, 0.0
          %v3019 = vmax.f32 %v2955, 0.0
          %v3020 = vadd.f32 %v2828, %v2956
          %v3021 = vadd.f32 %v2829, %v2957
          %v3022 = vadd.f32 %v2830, %v2958
          %v3023 = vadd.f32 %v2831, %v2959
          %v3024 = vadd.f32 %v2832, %v2960
          %v3025 = vadd.f32 %v2833, %v2961
          %v3026 = vadd.f32 %v2834, %v2962
          %v3027 = vadd.f32 %v2835, %v2963
          %v3028 = vadd.f32 %v2836, %v2964
          %v3029 = vadd.f32 %v2837, %v2965
          %v3030 = vadd.f32 %v2838, %v2966
          %v3031 = vadd.f32 %v2839, %v2967
          %v3032 = vadd.f32 %v2840, %v2968
          %v3033 = vadd.f32 %v2841, %v2969
          %v3034 = vadd.f32 %v2842, %v2970
          %v3035 = vadd.f32 %v2843, %v2971
          %v3036 = vadd.f32 %v2844, %v2972
          %v3037 = vadd.f32 %v2845, %v2973
          %v3038 = vadd.f32 %v2846, %v2974
          %v3039 = vadd.f32 %v2847, %v2975
          %v3040 = vadd.f32 %v2848, %v2976
          %v3041 = vadd.f32 %v2849, %v2977
          %v3042 = vadd.f32 %v2850, %v2978
          %v3043 = vadd.f32 %v2851, %v2979
          %v3044 = vadd.f32 %v2852, %v2980
          %v3045 = vadd.f32 %v2853, %v2981
          %v3046 = vadd.f32 %v2854, %v2982
          %v3047 = vadd.f32 %v2855, %v2983
          %v3048 = vadd.f32 %v2856, %v2984
          %v3049 = vadd.f32 %v2857, %v2985
          %v3050 = vadd.f32 %v2858, %v2986
          %v3051 = vadd.f32 %v2859, %v2987
          %v3052 = vadd.f32 %v2860, %v2988
          %v3053 = vadd.f32 %v2861, %v2989
          %v3054 = vadd.f32 %v2862, %v2990
          %v3055 = vadd.f32 %v2863, %v2991
          %v3056 = vadd.f32 %v2864, %v2992
          %v3057 = vadd.f32 %v2865, %v2993
          %v3058 = vadd.f32 %v2866, %v2994
          %v3059 = vadd.f32 %v2867, %v2995
          %v3060 = vadd.f32 %v2868, %v2996
          %v3061 = vadd.f32 %v2869, %v2997
          %v3062 = vadd.f32 %v2870, %v2998
          %v3063 = vadd.f32 %v2871, %v2999
          %v3064 = vadd.f32 %v2872, %v3000
          %v3065 = vadd.f32 %v2873, %v3001
          %v3066 = vadd.f32 %v2874, %v3002
          %v3067 = vadd.f32 %v2875, %v3003
          %v3068 = vadd.f32 %v2876, %v3004
          %v3069 = vadd.f32 %v2877, %v3005
          %v3070 = vadd.f32 %v2878, %v3006
          %v3071 = vadd.f32 %v2879, %v3007
          %v3072 = vadd.f32 %v2880, %v3008
          %v3073 = vadd.f32 %v2881, %v3009
          %v3074 = vadd.f32 %v2882, %v3010
          %v3075 = vadd.f32 %v2883, %v3011
          %v3076 = vadd.f32 %v2884, %v3012
          %v3077 = vadd.f32 %v2885, %v3013
          %v3078 = vadd.f32 %v2886, %v3014
          %v3079 = vadd.f32 %v2887, %v3015
          %v3080 = vadd.f32 %v2888, %v3016
          %v3081 = vadd.f32 %v2889, %v3017
          %v3082 = vadd.f32 %v2890, %v3018
          %v3083 = vadd.f32 %v2891, %v3019
          %vm3084 = vcmask 7168
          %3085 = vst.msk [vmem:[#allocation4] sm:$0xff] %vm3084, %v3020
          %3086 = vst.msk [vmem:[#allocation4 + $0x8] sm:$0xff] %vm3084, %v3021
          %3087 = vst.msk [vmem:[#allocation4 + $0x10] sm:$0xff] %vm3084, %v3022
          %3088 = vst.msk [vmem:[#allocation4 + $0x18] sm:$0xff] %vm3084, %v3023
          %3089 = vst.msk [vmem:[#allocation4 + $0x20] sm:$0xff] %vm3084, %v3024
          %3090 = vst.msk [vmem:[#allocation4 + $0x28] sm:$0xff] %vm3084, %v3025
          %3091 = vst.msk [vmem:[#allocation4 + $0x30] sm:$0xff] %vm3084, %v3026
          %3092 = vst.msk [vmem:[#allocation4 + $0x38] sm:$0xff] %vm3084, %v3027
          %3093 = vst.msk [vmem:[#allocation4 + $0x40] sm:$0xff] %vm3084, %v3028
          %3094 = vst.msk [vmem:[#allocation4 + $0x48] sm:$0xff] %vm3084, %v3029
          %3095 = vst.msk [vmem:[#allocation4 + $0x50] sm:$0xff] %vm3084, %v3030
          %3096 = vst.msk [vmem:[#allocation4 + $0x58] sm:$0xff] %vm3084, %v3031
          %3097 = vst.msk [vmem:[#allocation4 + $0x60] sm:$0xff] %vm3084, %v3032
          %3098 = vst.msk [vmem:[#allocation4 + $0x68] sm:$0xff] %vm3084, %v3033
          %3099 = vst.msk [vmem:[#allocation4 + $0x70] sm:$0xff] %vm3084, %v3034
          %3100 = vst.msk [vmem:[#allocation4 + $0x78] sm:$0xff] %vm3084, %v3035
          %3101 = vst.msk [vmem:[#allocation4 + $0x80] sm:$0xff] %vm3084, %v3036
          %3102 = vst.msk [vmem:[#allocation4 + $0x88] sm:$0xff] %vm3084, %v3037
          %3103 = vst.msk [vmem:[#allocation4 + $0x90] sm:$0xff] %vm3084, %v3038
          %3104 = vst.msk [vmem:[#allocation4 + $0x98] sm:$0xff] %vm3084, %v3039
          %3105 = vst.msk [vmem:[#allocation4 + $0xa0] sm:$0xff] %vm3084, %v3040
          %3106 = vst.msk [vmem:[#allocation4 + $0xa8] sm:$0xff] %vm3084, %v3041
          %3107 = vst.msk [vmem:[#allocation4 + $0xb0] sm:$0xff] %vm3084, %v3042
          %3108 = vst.msk [vmem:[#allocation4 + $0xb8] sm:$0xff] %vm3084, %v3043
          %3109 = vst.msk [vmem:[#allocation4 + $0xc0] sm:$0xff] %vm3084, %v3044
          %3110 = vst.msk [vmem:[#allocation4 + $0xc8] sm:$0xff] %vm3084, %v3045
          %3111 = vst.msk [vmem:[#allocation4 + $0xd0] sm:$0xff] %vm3084, %v3046
          %3112 = vst.msk [vmem:[#allocation4 + $0xd8] sm:$0xff] %vm3084, %v3047
          %3113 = vst.msk [vmem:[#allocation4 + $0xe0] sm:$0xff] %vm3084, %v3048
          %3114 = vst.msk [vmem:[#allocation4 + $0xe8] sm:$0xff] %vm3084, %v3049
          %3115 = vst.msk [vmem:[#allocation4 + $0xf0] sm:$0xff] %vm3084, %v3050
          %3116 = vst.msk [vmem:[#allocation4 + $0xf8] sm:$0xff] %vm3084, %v3051
          %3117 = vst.msk [vmem:[#allocation4 + $0x100] sm:$0xff] %vm3084, %v3052
          %3118 = vst.msk [vmem:[#allocation4 + $0x108] sm:$0xff] %vm3084, %v3053
          %3119 = vst.msk [vmem:[#allocation4 + $0x110] sm:$0xff] %vm3084, %v3054
          %3120 = vst.msk [vmem:[#allocation4 + $0x118] sm:$0xff] %vm3084, %v3055
          %3121 = vst.msk [vmem:[#allocation4 + $0x120] sm:$0xff] %vm3084, %v3056
          %3122 = vst.msk [vmem:[#allocation4 + $0x128] sm:$0xff] %vm3084, %v3057
          %3123 = vst.msk [vmem:[#allocation4 + $0x130] sm:$0xff] %vm3084, %v3058
          %3124 = vst.msk [vmem:[#allocation4 + $0x138] sm:$0xff] %vm3084, %v3059
          %3125 = vst.msk [vmem:[#allocation4 + $0x140] sm:$0xff] %vm3084, %v3060
          %3126 = vst.msk [vmem:[#allocation4 + $0x148] sm:$0xff] %vm3084, %v3061
          %3127 = vst.msk [vmem:[#allocation4 + $0x150] sm:$0xff] %vm3084, %v3062
          %3128 = vst.msk [vmem:[#allocation4 + $0x158] sm:$0xff] %vm3084, %v3063
          %3129 = vst.msk [vmem:[#allocation4 + $0x160] sm:$0xff] %vm3084, %v3064
          %3130 = vst.msk [vmem:[#allocation4 + $0x168] sm:$0xff] %vm3084, %v3065
          %3131 = vst.msk [vmem:[#allocation4 + $0x170] sm:$0xff] %vm3084, %v3066
          %3132 = vst.msk [vmem:[#allocation4 + $0x178] sm:$0xff] %vm3084, %v3067
          %3133 = vst.msk [vmem:[#allocation4 + $0x180] sm:$0xff] %vm3084, %v3068
          %3134 = vst.msk [vmem:[#allocation4 + $0x188] sm:$0xff] %vm3084, %v3069
          %3135 = vst.msk [vmem:[#allocation4 + $0x190] sm:$0xff] %vm3084, %v3070
          %3136 = vst.msk [vmem:[#allocation4 + $0x198] sm:$0xff] %vm3084, %v3071
          %3137 = vst.msk [vmem:[#allocation4 + $0x1a0] sm:$0xff] %vm3084, %v3072
          %3138 = vst.msk [vmem:[#allocation4 + $0x1a8] sm:$0xff] %vm3084, %v3073
          %3139 = vst.msk [vmem:[#allocation4 + $0x1b0] sm:$0xff] %vm3084, %v3074
          %3140 = vst.msk [vmem:[#allocation4 + $0x1b8] sm:$0xff] %vm3084, %v3075
          %3141 = vst.msk [vmem:[#allocation4 + $0x1c0] sm:$0xff] %vm3084, %v3076
          %3142 = vst.msk [vmem:[#allocation4 + $0x1c8] sm:$0xff] %vm3084, %v3077
          %3143 = vst.msk [vmem:[#allocation4 + $0x1d0] sm:$0xff] %vm3084, %v3078
          %3144 = vst.msk [vmem:[#allocation4 + $0x1d8] sm:$0xff] %vm3084, %v3079
          %3145 = vst.msk [vmem:[#allocation4 + $0x1e0] sm:$0xff] %vm3084, %v3080
          %3146 = vst.msk [vmem:[#allocation4 + $0x1e8] sm:$0xff] %vm3084, %v3081
          %3147 = vst.msk [vmem:[#allocation4 + $0x1f0] sm:$0xff] %vm3084, %v3082
          %3148 = vst.msk [vmem:[#allocation4 + $0x1f8] sm:$0xff] %vm3084, %v3083
        $region60: #{tpu_custom_call.1} parent=39 // pred_fallthru
          _
        %p3149 = scmp.eq.s32.totalorder %s27, 1
        // Predicated region
        $region61: #{tpu_custom_call.1} parent=39 // pred_check
          %p3150 = pneg %p3149
        $region62: #{tpu_custom_call.1} parent=39 // pred_check_branch
          %3152 = sbr.rel (%p3150) target = $region64
        $region63: #{tpu_custom_call.1} parent=39 // pred_region
          %v3153 = vld [vmem:[#allocation3] sm:$0xff]
          %v3154 = vld [vmem:[#allocation3 + $0x8] sm:$0xff]
          %v3155 = vld [vmem:[#allocation3 + $0x10] sm:$0xff]
          %v3156 = vld [vmem:[#allocation3 + $0x18] sm:$0xff]
          %v3157 = vld [vmem:[#allocation3 + $0x20] sm:$0xff]
          %v3158 = vld [vmem:[#allocation3 + $0x28] sm:$0xff]
          %v3159 = vld [vmem:[#allocation3 + $0x30] sm:$0xff]
          %v3160 = vld [vmem:[#allocation3 + $0x38] sm:$0xff]
          %v3161 = vld [vmem:[#allocation3 + $0x40] sm:$0xff]
          %v3162 = vld [vmem:[#allocation3 + $0x48] sm:$0xff]
          %v3163 = vld [vmem:[#allocation3 + $0x50] sm:$0xff]
          %v3164 = vld [vmem:[#allocation3 + $0x58] sm:$0xff]
          %v3165 = vld [vmem:[#allocation3 + $0x60] sm:$0xff]
          %v3166 = vld [vmem:[#allocation3 + $0x68] sm:$0xff]
          %v3167 = vld [vmem:[#allocation3 + $0x70] sm:$0xff]
          %v3168 = vld [vmem:[#allocation3 + $0x78] sm:$0xff]
          %vm3169 = vcmask 7168
          %v3170 = vsel %vm3169, %v3153, 0.0
          %v3171 = vsel %vm3169, %v3154, 0.0
          %v3172 = vadd.f32 %v3170, %v3171
          %v3173 = vsel %vm3169, %v3155, 0.0
          %v3174 = vadd.f32 %v3172, %v3173
          %v3175 = vsel %vm3169, %v3156, 0.0
          %v3176 = vadd.f32 %v3174, %v3175
          %v3177 = vsel %vm3169, %v3157, 0.0
          %v3178 = vadd.f32 %v3176, %v3177
          %v3179 = vsel %vm3169, %v3158, 0.0
          %v3180 = vadd.f32 %v3178, %v3179
          %v3181 = vsel %vm3169, %v3159, 0.0
          %v3182 = vadd.f32 %v3180, %v3181
          %v3183 = vsel %vm3169, %v3160, 0.0
          %v3184 = vadd.f32 %v3182, %v3183
          %v3185 = vsel %vm3169, %v3161, 0.0
          %v3186 = vadd.f32 %v3184, %v3185
          %v3187 = vsel %vm3169, %v3162, 0.0
          %v3188 = vadd.f32 %v3186, %v3187
          %v3189 = vsel %vm3169, %v3163, 0.0
          %v3190 = vadd.f32 %v3188, %v3189
          %v3191 = vsel %vm3169, %v3164, 0.0
          %v3192 = vadd.f32 %v3190, %v3191
          %v3193 = vsel %vm3169, %v3165, 0.0
          %v3194 = vadd.f32 %v3192, %v3193
          %v3195 = vsel %vm3169, %v3166, 0.0
          %v3196 = vadd.f32 %v3194, %v3195
          %v3197 = vsel %vm3169, %v3167, 0.0
          %v3198 = vadd.f32 %v3196, %v3197
          %v3199 = vsel %vm3169, %v3168, 0.0
          %v3200 = vadd.f32 %v3198, %v3199
          %3201 = vadd.xlane.f32.xlu0 %v3200
          %v3202 = vpop.xlane.xlu0 %3201
          %v3203 = vrot.slane %v3202, 4
          %v3204 = vadd.f32 %v3202, %v3203
          %v3205 = vrot.slane %v3204, 2
          %v3206 = vadd.f32 %v3204, %v3205
          %v3207 = vrot.slane %v3206, 1
          %v3208 = vadd.f32 %v3206, %v3207
          %s3209 = vtos %v3208
          %v3210 = vstv %s3209
          %v3211 = vld [vmem:[#allocation4] sm:$0xff]
          %v3212 = vld [vmem:[#allocation4 + $0x8] sm:$0xff]
          %v3213 = vld [vmem:[#allocation4 + $0x10] sm:$0xff]
          %v3214 = vld [vmem:[#allocation4 + $0x18] sm:$0xff]
          %v3215 = vld [vmem:[#allocation4 + $0x20] sm:$0xff]
          %v3216 = vld [vmem:[#allocation4 + $0x28] sm:$0xff]
          %v3217 = vld [vmem:[#allocation4 + $0x30] sm:$0xff]
          %v3218 = vld [vmem:[#allocation4 + $0x38] sm:$0xff]
          %v3219 = vld [vmem:[#allocation4 + $0x40] sm:$0xff]
          %v3220 = vld [vmem:[#allocation4 + $0x48] sm:$0xff]
          %v3221 = vld [vmem:[#allocation4 + $0x50] sm:$0xff]
          %v3222 = vld [vmem:[#allocation4 + $0x58] sm:$0xff]
          %v3223 = vld [vmem:[#allocation4 + $0x60] sm:$0xff]
          %v3224 = vld [vmem:[#allocation4 + $0x68] sm:$0xff]
          %v3225 = vld [vmem:[#allocation4 + $0x70] sm:$0xff]
          %v3226 = vld [vmem:[#allocation4 + $0x78] sm:$0xff]
          %v3227 = vld [vmem:[#allocation4 + $0x80] sm:$0xff]
          %v3228 = vld [vmem:[#allocation4 + $0x88] sm:$0xff]
          %v3229 = vld [vmem:[#allocation4 + $0x90] sm:$0xff]
          %v3230 = vld [vmem:[#allocation4 + $0x98] sm:$0xff]
          %v3231 = vld [vmem:[#allocation4 + $0xa0] sm:$0xff]
          %v3232 = vld [vmem:[#allocation4 + $0xa8] sm:$0xff]
          %v3233 = vld [vmem:[#allocation4 + $0xb0] sm:$0xff]
          %v3234 = vld [vmem:[#allocation4 + $0xb8] sm:$0xff]
          %v3235 = vld [vmem:[#allocation4 + $0xc0] sm:$0xff]
          %v3236 = vld [vmem:[#allocation4 + $0xc8] sm:$0xff]
          %v3237 = vld [vmem:[#allocation4 + $0xd0] sm:$0xff]
          %v3238 = vld [vmem:[#allocation4 + $0xd8] sm:$0xff]
          %v3239 = vld [vmem:[#allocation4 + $0xe0] sm:$0xff]
          %v3240 = vld [vmem:[#allocation4 + $0xe8] sm:$0xff]
          %v3241 = vld [vmem:[#allocation4 + $0xf0] sm:$0xff]
          %v3242 = vld [vmem:[#allocation4 + $0xf8] sm:$0xff]
          %v3243 = vld [vmem:[#allocation4 + $0x100] sm:$0xff]
          %v3244 = vld [vmem:[#allocation4 + $0x108] sm:$0xff]
          %v3245 = vld [vmem:[#allocation4 + $0x110] sm:$0xff]
          %v3246 = vld [vmem:[#allocation4 + $0x118] sm:$0xff]
          %v3247 = vld [vmem:[#allocation4 + $0x120] sm:$0xff]
          %v3248 = vld [vmem:[#allocation4 + $0x128] sm:$0xff]
          %v3249 = vld [vmem:[#allocation4 + $0x130] sm:$0xff]
          %v3250 = vld [vmem:[#allocation4 + $0x138] sm:$0xff]
          %v3251 = vld [vmem:[#allocation4 + $0x140] sm:$0xff]
          %v3252 = vld [vmem:[#allocation4 + $0x148] sm:$0xff]
          %v3253 = vld [vmem:[#allocation4 + $0x150] sm:$0xff]
          %v3254 = vld [vmem:[#allocation4 + $0x158] sm:$0xff]
          %v3255 = vld [vmem:[#allocation4 + $0x160] sm:$0xff]
          %v3256 = vld [vmem:[#allocation4 + $0x168] sm:$0xff]
          %v3257 = vld [vmem:[#allocation4 + $0x170] sm:$0xff]
          %v3258 = vld [vmem:[#allocation4 + $0x178] sm:$0xff]
          %v3259 = vld [vmem:[#allocation4 + $0x180] sm:$0xff]
          %v3260 = vld [vmem:[#allocation4 + $0x188] sm:$0xff]
          %v3261 = vld [vmem:[#allocation4 + $0x190] sm:$0xff]
          %v3262 = vld [vmem:[#allocation4 + $0x198] sm:$0xff]
          %v3263 = vld [vmem:[#allocation4 + $0x1a0] sm:$0xff]
          %v3264 = vld [vmem:[#allocation4 + $0x1a8] sm:$0xff]
          %v3265 = vld [vmem:[#allocation4 + $0x1b0] sm:$0xff]
          %v3266 = vld [vmem:[#allocation4 + $0x1b8] sm:$0xff]
          %v3267 = vld [vmem:[#allocation4 + $0x1c0] sm:$0xff]
          %v3268 = vld [vmem:[#allocation4 + $0x1c8] sm:$0xff]
          %v3269 = vld [vmem:[#allocation4 + $0x1d0] sm:$0xff]
          %v3270 = vld [vmem:[#allocation4 + $0x1d8] sm:$0xff]
          %v3271 = vld [vmem:[#allocation4 + $0x1e0] sm:$0xff]
          %v3272 = vld [vmem:[#allocation4 + $0x1e8] sm:$0xff]
          %v3273 = vld [vmem:[#allocation4 + $0x1f0] sm:$0xff]
          %v3274 = vld [vmem:[#allocation4 + $0x1f8] sm:$0xff]
          %v3275 = vsel %vm3169, %v3211, 0.0
          %v3276 = vsel %vm3169, %v3212, 0.0
          %v3277 = vadd.f32 %v3275, %v3276
          %v3278 = vsel %vm3169, %v3213, 0.0
          %v3279 = vadd.f32 %v3277, %v3278
          %v3280 = vsel %vm3169, %v3214, 0.0
          %v3281 = vadd.f32 %v3279, %v3280
          %v3282 = vsel %vm3169, %v3215, 0.0
          %v3283 = vadd.f32 %v3281, %v3282
          %v3284 = vsel %vm3169, %v3216, 0.0
          %v3285 = vadd.f32 %v3283, %v3284
          %v3286 = vsel %vm3169, %v3217, 0.0
          %v3287 = vadd.f32 %v3285, %v3286
          %v3288 = vsel %vm3169, %v3218, 0.0
          %v3289 = vadd.f32 %v3287, %v3288
          %v3290 = vsel %vm3169, %v3219, 0.0
          %v3291 = vadd.f32 %v3289, %v3290
          %v3292 = vsel %vm3169, %v3220, 0.0
          %v3293 = vadd.f32 %v3291, %v3292
          %v3294 = vsel %vm3169, %v3221, 0.0
          %v3295 = vadd.f32 %v3293, %v3294
          %v3296 = vsel %vm3169, %v3222, 0.0
          %v3297 = vadd.f32 %v3295, %v3296
          %v3298 = vsel %vm3169, %v3223, 0.0
          %v3299 = vadd.f32 %v3297, %v3298
          %v3300 = vsel %vm3169, %v3224, 0.0
          %v3301 = vadd.f32 %v3299, %v3300
          %v3302 = vsel %vm3169, %v3225, 0.0
          %v3303 = vadd.f32 %v3301, %v3302
          %v3304 = vsel %vm3169, %v3226, 0.0
          %v3305 = vadd.f32 %v3303, %v3304
          %v3306 = vsel %vm3169, %v3227, 0.0
          %v3307 = vadd.f32 %v3305, %v3306
          %v3308 = vsel %vm3169, %v3228, 0.0
          %v3309 = vadd.f32 %v3307, %v3308
          %v3310 = vsel %vm3169, %v3229, 0.0
          %v3311 = vadd.f32 %v3309, %v3310
          %v3312 = vsel %vm3169, %v3230, 0.0
          %v3313 = vadd.f32 %v3311, %v3312
          %v3314 = vsel %vm3169, %v3231, 0.0
          %v3315 = vadd.f32 %v3313, %v3314
          %v3316 = vsel %vm3169, %v3232, 0.0
          %v3317 = vadd.f32 %v3315, %v3316
          %v3318 = vsel %vm3169, %v3233, 0.0
          %v3319 = vadd.f32 %v3317, %v3318
          %v3320 = vsel %vm3169, %v3234, 0.0
          %v3321 = vadd.f32 %v3319, %v3320
          %v3322 = vsel %vm3169, %v3235, 0.0
          %v3323 = vadd.f32 %v3321, %v3322
          %v3324 = vsel %vm3169, %v3236, 0.0
          %v3325 = vadd.f32 %v3323, %v3324
          %v3326 = vsel %vm3169, %v3237, 0.0
          %v3327 = vadd.f32 %v3325, %v3326
          %v3328 = vsel %vm3169, %v3238, 0.0
          %v3329 = vadd.f32 %v3327, %v3328
          %v3330 = vsel %vm3169, %v3239, 0.0
          %v3331 = vadd.f32 %v3329, %v3330
          %v3332 = vsel %vm3169, %v3240, 0.0
          %v3333 = vadd.f32 %v3331, %v3332
          %v3334 = vsel %vm3169, %v3241, 0.0
          %v3335 = vadd.f32 %v3333, %v3334
          %v3336 = vsel %vm3169, %v3242, 0.0
          %v3337 = vadd.f32 %v3335, %v3336
          %v3338 = vsel %vm3169, %v3243, 0.0
          %v3339 = vadd.f32 %v3337, %v3338
          %v3340 = vsel %vm3169, %v3244, 0.0
          %v3341 = vadd.f32 %v3339, %v3340
          %v3342 = vsel %vm3169, %v3245, 0.0
          %v3343 = vadd.f32 %v3341, %v3342
          %v3344 = vsel %vm3169, %v3246, 0.0
          %v3345 = vadd.f32 %v3343, %v3344
          %v3346 = vsel %vm3169, %v3247, 0.0
          %v3347 = vadd.f32 %v3345, %v3346
          %v3348 = vsel %vm3169, %v3248, 0.0
          %v3349 = vadd.f32 %v3347, %v3348
          %v3350 = vsel %vm3169, %v3249, 0.0
          %v3351 = vadd.f32 %v3349, %v3350
          %v3352 = vsel %vm3169, %v3250, 0.0
          %v3353 = vadd.f32 %v3351, %v3352
          %v3354 = vsel %vm3169, %v3251, 0.0
          %v3355 = vadd.f32 %v3353, %v3354
          %v3356 = vsel %vm3169, %v3252, 0.0
          %v3357 = vadd.f32 %v3355, %v3356
          %v3358 = vsel %vm3169, %v3253, 0.0
          %v3359 = vadd.f32 %v3357, %v3358
          %v3360 = vsel %vm3169, %v3254, 0.0
          %v3361 = vadd.f32 %v3359, %v3360
          %v3362 = vsel %vm3169, %v3255, 0.0
          %v3363 = vadd.f32 %v3361, %v3362
          %v3364 = vsel %vm3169, %v3256, 0.0
          %v3365 = vadd.f32 %v3363, %v3364
          %v3366 = vsel %vm3169, %v3257, 0.0
          %v3367 = vadd.f32 %v3365, %v3366
          %v3368 = vsel %vm3169, %v3258, 0.0
          %v3369 = vadd.f32 %v3367, %v3368
          %v3370 = vsel %vm3169, %v3259, 0.0
          %v3371 = vadd.f32 %v3369, %v3370
          %v3372 = vsel %vm3169, %v3260, 0.0
          %v3373 = vadd.f32 %v3371, %v3372
          %v3374 = vsel %vm3169, %v3261, 0.0
          %v3375 = vadd.f32 %v3373, %v3374
          %v3376 = vsel %vm3169, %v3262, 0.0
          %v3377 = vadd.f32 %v3375, %v3376
          %v3378 = vsel %vm3169, %v3263, 0.0
          %v3379 = vadd.f32 %v3377, %v3378
          %v3380 = vsel %vm3169, %v3264, 0.0
          %v3381 = vadd.f32 %v3379, %v3380
          %v3382 = vsel %vm3169, %v3265, 0.0
          %v3383 = vadd.f32 %v3381, %v3382
          %v3384 = vsel %vm3169, %v3266, 0.0
          %v3385 = vadd.f32 %v3383, %v3384
          %v3386 = vsel %vm3169, %v3267, 0.0
          %v3387 = vadd.f32 %v3385, %v3386
          %v3388 = vsel %vm3169, %v3268, 0.0
          %v3389 = vadd.f32 %v3387, %v3388
          %v3390 = vsel %vm3169, %v3269, 0.0
          %v3391 = vadd.f32 %v3389, %v3390
          %v3392 = vsel %vm3169, %v3270, 0.0
          %v3393 = vadd.f32 %v3391, %v3392
          %v3394 = vsel %vm3169, %v3271, 0.0
          %v3395 = vadd.f32 %v3393, %v3394
          %v3396 = vsel %vm3169, %v3272, 0.0
          %v3397 = vadd.f32 %v3395, %v3396
          %v3398 = vsel %vm3169, %v3273, 0.0
          %v3399 = vadd.f32 %v3397, %v3398
          %v3400 = vsel %vm3169, %v3274, 0.0
          %v3401 = vadd.f32 %v3399, %v3400
          %3402 = vadd.xlane.f32.xlu0 %v3401
          %v3403 = vpop.xlane.xlu0 %3402
          %v3404 = vrot.slane %v3403, 4
          %v3405 = vadd.f32 %v3403, %v3404
          %v3406 = vrot.slane %v3405, 2
          %v3407 = vadd.f32 %v3405, %v3406
          %v3408 = vrot.slane %v3407, 1
          %v3409 = vadd.f32 %v3407, %v3408
          %s3410 = vtos %v3409
          %v3411 = vstv %s3410
          %v3412 = vmul.f32 %v3210, 0.0052083335
          %v3413 = vmul.f32 %v3411, 0.00048828125
          %v3414 = vadd.f32 %v3412, %v3413
          %v3415 = vld [vmem:[%s4] sm:$0xff]
          %v3416 = vld [vmem:[%s4 + $0x8] sm:$0xff]
          %v3417 = vld [vmem:[%s4 + $0x10] sm:$0xff]
          %v3418 = vld [vmem:[%s3] sm:$0xff]
          %v3419 = vld [vmem:[%s3 + $0x8] sm:$0xff]
          %v3420 = vld [vmem:[%s3 + $0x10] sm:$0xff]
          %v3421 = vmul.f32 %v3415, %v3418
          %v3422 = vmul.f32 %v3416, %v3419
          %v3423 = vmul.f32 %v3417, %v3420
          %3424 = vadd.xlane.f32.xlu0 %v3421
          %v3425 = vpop.xlane.xlu0 %3424
          %3426 = vadd.xlane.f32.xlu0 %v3422
          %v3427 = vpop.xlane.xlu0 %3426
          %3428 = vadd.xlane.f32.xlu0 %v3423
          %v3429 = vpop.xlane.xlu0 %3428
          %v3430 = vmul.f32 %v3418, %v3418
          %v3431 = vmul.f32 %v3419, %v3419
          %v3432 = vmul.f32 %v3420, %v3420
          %3433 = vadd.xlane.f32.xlu0 %v3430
          %v3434 = vpop.xlane.xlu0 %3433
          %3435 = vadd.xlane.f32.xlu0 %v3431
          %v3436 = vpop.xlane.xlu0 %3435
          %3437 = vadd.xlane.f32.xlu0 %v3432
          %v3438 = vpop.xlane.xlu0 %3437
          %v3439 = vmax.f32 %v3434, 1e-30
          %v3440 = vmax.f32 %v3436, 1e-30
          %v3441 = vmax.f32 %v3438, 1e-30
          %v3442 = vmul.f32 %v3425, %v3425
          %v3443 = vmul.f32 %v3427, %v3427
          %v3444 = vmul.f32 %v3429, %v3429
          %v3445 = vrcp.pop %v3439
          %v3446 = vrcp.pop %v3440
          %v3447 = vrcp.pop %v3441
          %v3448 = vmul.f32 %v3442, %v3445
          %v3449 = vmul.f32 %v3443, %v3446
          %v3450 = vmul.f32 %v3444, %v3447
          %v3451 = vsel %vm3169, %v3448, 0.0
          %v3452 = vsel %vm3169, %v3449, 0.0
          %v3453 = vadd.f32 %v3451, %v3452
          %v3454 = vsel %vm3169, %v3450, 0.0
          %v3455 = vadd.f32 %v3453, %v3454
          %3456 = vadd.xlane.f32.xlu0 %v3455
          %v3457 = vpop.xlane.xlu0 %3456
          %v3458 = vrot.slane %v3457, 4
          %v3459 = vadd.f32 %v3457, %v3458
          %v3460 = vrot.slane %v3459, 2
          %v3461 = vadd.f32 %v3459, %v3460
          %v3462 = vrot.slane %v3461, 1
          %v3463 = vadd.f32 %v3461, %v3462
          %s3464 = vtos %v3463
          %v3465 = vstv %s3464
          %v3466 = vsub.f32 %v3465, 2e-05
          %v3467 = vmax.f32 %v3466, 0.0
          %p3468 = scmp.eq.s32.totalorder %s26, 0
          %s3469 = scalar_select %p3468, 1, 0
          %v3470 = vstv %s3469
          %vm3471 = vcmp.eq.s32.totalorder %v3470, 1
          %v3472 = vsel %vm3471, %v3467, 0.0
          %v3473 = vadd.f32 %v3414, %v3472
          %vm3474 = vcmask 0
          %3475 = vst.msk [vmem:[%s366] sm:$0x1] %vm3474, %v3473
        $region64: #{tpu_custom_call.1} parent=39 // pred_fallthru
          _
        %p3476 = scmp.lt.s32.totalorder %s26, 1
        %s3477 = scalar_select %p3476, %s26, 1
        %s3478 = scalar_lea.vmem %s5, %s3477
        // Predicated region
        $region65: #{tpu_custom_call.1} parent=39 // pred_check
          %p3479 = pneg %p192
        $region66: #{tpu_custom_call.1} parent=39 // pred_check_branch
          %3481 = sbr.rel (%p3479) target = $region68
        $region67: #{tpu_custom_call.1} parent=39 // pred_region
          _
        $region68: #{tpu_custom_call.1} parent=39 // pred_fallthru
          _
      $region40: #{tpu_custom_call.1} parent=5 // pred_fallthru
        _
      %p3482 = scmp.le.s32.totalorder 2, %s17
      // Predicated region
      $region69: #{tpu_custom_call.1} parent=5 // pred_check
        %p3483 = pneg %p3482
      $region70: #{tpu_custom_call.1} parent=5 // pred_check_branch
        %3485 = sbr.rel (%p3483) target = $region72
      $region71: #{tpu_custom_call.1} parent=5 // pred_region
        %s3486 = ssub.s32 %s17, 2
        // Predicated region
        $region73: #{tpu_custom_call.1} parent=71 // pred_check
          %p3487 = pneg %p198
        $region74: #{tpu_custom_call.1} parent=71 // pred_check_branch
          %3489 = sbr.rel (%p3487) target = $region76
        $region75: #{tpu_custom_call.1} parent=71 // pred_region
          %p3490 = scmp.lt.s32.totalorder %s28, 1
          %s3491 = scalar_select %p3490, %s28, 1
          %s3492 = scalar_lea.vmem %s5, %s3491
        $region76: #{tpu_custom_call.1} parent=71 // pred_fallthru
          _
      $region72: #{tpu_custom_call.1} parent=5 // pred_fallthru
        _
    $region6: #{tpu_custom_call.1} parent=1 // loop_footer
      %s21 = sadd.s32 1, %s17
    $region7: #{tpu_custom_call.1} parent=1 // loop_footer_branch
      %16 = sbr.rel target = $region3
    $region8: #{tpu_custom_call.1} parent=1 // loop_exit
      _
    %3493 = vsyncpa [#allocation6], 1
    %s3494 = scalar_lea.sflag [#allocation6], 1
    %3495 = vsyncpa %s3494, 1
    %3496 = vsyncpa [#allocation8], 1
    %s3497 = scalar_lea.sflag [#allocation8], 1
    %3498 = vsyncpa %s3497, 1

</llo_original>
